<compile_context>
chip_gen: v6e
topology: v6e:2x2x1
jax: 0.10.0
libtpu: 0.0.40
codegen_flags: <defaults>
</compile_context>

<pallas_src>
import functools
import math

import jax
import jax.numpy as jnp
from jax.experimental import pallas as pl
from jax.experimental.pallas import tpu as pltpu

LANE = 128
SUBLANE = 8
_EPS = 1e-5


def _round_up(x, m):
    return (x + m - 1) // m * m


# ----------------------------- Pallas kernel ----------------------------------

def _fused_conv_kernel(*refs, k, stride, hph, Ho, Wo, cr, nb, cout_p,
                       has_shortcut, has_residual, compute_dtype):
    """relu(scale*x+bias) -> kxk conv(stride) [+ fused 1x1 shortcut] [+ residual].

    Ref layout (inputs then outputs):
      x_ref     : (nb, P*Hph, Wpp, Cin_p)      stride-phase decomposed, zero padded
      mask_ref  : (P*Hph, Wpp, 1)        f32   1 inside the image, 0 on the pad ring
      scale_ref : (1, Cin_p)             f32   folded BN scale
      bias_ref  : (1, Cin_p)             f32   folded BN bias
      w_ref     : (k*k, Cin_p, Cout_p)         conv taps (compute dtype)
      [w_sc_ref]: (Cin_p, Cout_p)              1x1 shortcut weights
      [res_ref] : (nb, Ho*Wo, Cout_p)          residual to add
      o_ref     : (nb, Ho*Wo, Cout_p)
      [sc_ref]  : (nb, Ho*Wo, Cout_p)          fused shortcut output
    """
    x_ref, mask_ref, scale_ref, bias_ref, w_ref = refs[:5]
    i = 5
    w_sc_ref = refs[i] if has_shortcut else None
    i += int(has_shortcut)
    res_ref = refs[i] if has_residual else None
    i += int(has_residual)
    o_ref = refs[i]
    sc_ref = refs[i + 1] if has_shortcut else None

    # Fused pre-activation (eval-mode BN folded to scale/bias) + ReLU + pad-ring mask,
    # computed once in f32 (v5e-friendly), then ONE downcast to the MXU dtype.
    x = x_ref[...].astype(jnp.float32)                       # (nb, PR, Wpp, Cin_p)
    act = (jnp.maximum(x * scale_ref[...] + bias_ref[...], 0.0)
           * mask_ref[...]).astype(compute_dtype)
    cin_p = act.shape[-1]

    # Hoist the column (dj) shift out of the tap loop: ceil(k/stride) sublane-shifted
    # windows instead of 9 unaligned slices; per-tap slices below are row-only (free).
    ndj = (k - 1) // stride + 1
    wins = [act[:, :, dj:dj + Wo, :] for dj in range(ndj)]   # (nb, PR, Wo, Cin_p)

    centre = (k // 2) * k + (k // 2)

    # M-chunked tap reduction: each chunk's f32 accumulator (~<=128 KB) stays in vregs
    # across the 9 taps; one store per chunk instead of 9 VMEM RMW passes.
    n_chunks = (Ho + cr - 1) // cr
    for c in range(n_chunks):
        c0 = c * cr
        rows = min(cr, Ho - c0)
        m = nb * rows * Wo
        lo = c0 * Wo
        hi = lo + rows * Wo
        acc = jnp.zeros((m, cout_p), jnp.float32)
        sc_acc = None
        for t in range(k * k):                               # unrolled 9-tap reduce
            ki, kj = t // k, t % k
            p = (ki % stride) * stride + (kj % stride)       # stride phase
            di, dj = ki // stride, kj // stride              # offset inside phase
            r0 = p * hph + di + c0
            a = wins[dj][:, r0:r0 + rows, :, :].reshape(m, cin_p)
            acc = acc + jnp.dot(a, w_ref[t], preferred_element_type=jnp.float32)
            if has_shortcut and t == centre:
                # 1x1 stride-s shortcut conv == matmul on the (already resident)
                # centre-tap activation tile.
                sc_acc = jnp.dot(a, w_sc_ref[...],
                                 preferred_element_type=jnp.float32)
        if has_residual:
            acc = acc + res_ref[:, lo:hi, :].reshape(m, cout_p).astype(jnp.float32)
        o_ref[:, lo:hi, :] = acc.reshape(nb, rows * Wo, cout_p).astype(o_ref.dtype)
        if has_shortcut:
            sc_ref[:, lo:hi, :] = sc_acc.reshape(nb, rows * Wo,
                                                 cout_p).astype(sc_ref.dtype)


# ----------------------------- wrappers / glue ---------------------------------

def _phase_decompose(x, k, stride, pad):
    """Zero-pad spatially and split into stride*stride phase grids stacked along H,
    so every conv tap becomes a unit-stride static slice inside the kernel.  The
    phase width is padded to a multiple of 8 so in-kernel slices/reshapes stay
    sublane-aligned.  Total size ~1x the input (not 9x like im2col)."""
    N, H, W, C = x.shape
    xp = jnp.pad(x, ((0, 0), (pad, pad), (pad, pad), (0, 0)))
    Ho = (H + 2 * pad - k) // stride + 1
    Wo = (W + 2 * pad - k) // stride + 1
    Hph = Ho + (k - 1) // stride
    Wph = Wo + (k - 1) // stride
    Wpp = _round_up(Wph, SUBLANE)
    phases = []
    for pi in range(stride):
        for pj in range(stride):
            ph = xp[:, pi::stride, pj::stride, :][:, :Hph, :Wph, :]
            ph = jnp.pad(ph, ((0, 0), (0, Hph - ph.shape[1]),
                              (0, Wpp - ph.shape[2]), (0, 0)))
            phases.append(ph)
    return jnp.concatenate(phases, axis=1), Ho, Wo, Hph, Wpp


def _pick_batch_block(N, Ho, Wo):
    """Pack images per grid step so M = nb*Ho*Wo reaches ~256 MXU rows."""
    target = max(1, -(-256 // (Ho * Wo)))
    nb = 1
    for d in range(1, N + 1):
        if N % d == 0 and d <= target:
            nb = d
    return nb


def _pick_chunk_rows(Ho, Wo, nb, cout_p):
    """Output-row chunk so the f32 accumulator stays ~<=128 KB (register resident)."""
    rows_target = max(1, (32 * 1024) // max(cout_p, 1))      # f32 element budget
    cr = max(1, rows_target // max(nb * Wo, 1))
    step = SUBLANE // math.gcd(Wo, SUBLANE)  # keep chunk store offsets sublane-aligned
    cr = max(step, (cr // step) * step)
    return min(Ho, cr)


def fused_preact_conv(x_nhwc, w_taps, scale, bias, *, k, stride, pad,
                      w_sc=None, residual=None, out_dtype=jnp.float32,
                      compute_dtype=jnp.bfloat16):
    """One pallas_call: relu(scale*x+bias) -> kxk conv (stride, zero pad).
    Optionally emits the fused 1x1-stride shortcut output and/or adds `residual`
    (N, Ho*Wo, Cout_p).  Returns a tuple of (N, Ho*Wo, Cout_p)."""
    N, H, W, cin_p = x_nhwc.shape
    kk, cin_p2, cout_p = w_taps.shape
    assert kk == k * k and cin_p2 == cin_p

    phases, Ho, Wo, Hph, Wpp = _phase_decompose(x_nhwc, k, stride, pad)
    mask = _phase_decompose(jnp.ones((1, H, W, 1), jnp.float32), k, stride, pad)[0][0]
    ph_rows = phases.shape[1]                                 # P * Hph

    nb = _pick_batch_block(N, Ho, Wo)
    cr = _pick_chunk_rows(Ho, Wo, nb, cout_p)

    has_shortcut = w_sc is not None
    has_residual = residual is not None

    kern = functools.partial(
        _fused_conv_kernel, k=k, stride=stride, hph=Hph, Ho=Ho, Wo=Wo, cr=cr,
        nb=nb, cout_p=cout_p, has_shortcut=has_shortcut,
        has_residual=has_residual, compute_dtype=compute_dtype)

    in_specs = [
        pl.BlockSpec((nb, ph_rows, Wpp, cin_p), lambda n: (n, 0, 0, 0)),
        pl.BlockSpec((ph_rows, Wpp, 1), lambda n: (0, 0, 0)),
        pl.BlockSpec((1, cin_p), lambda n: (0, 0)),
        pl.BlockSpec((1, cin_p), lambda n: (0, 0)),
        pl.BlockSpec((k * k, cin_p, cout_p), lambda n: (0, 0, 0)),
    ]
    inputs = [phases, mask, scale, bias, w_taps]
    if has_shortcut:
        in_specs.append(pl.BlockSpec((cin_p, cout_p), lambda n: (0, 0)))
        inputs.append(w_sc)
    if has_residual:
        in_specs.append(pl.BlockSpec((nb, Ho * Wo, cout_p), lambda n: (n, 0, 0)))
        inputs.append(residual)

    n_out = 2 if has_shortcut else 1
    out_shape = tuple(jax.ShapeDtypeStruct((N, Ho * Wo, cout_p), out_dtype)
                      for _ in range(n_out))
    out_specs = tuple(pl.BlockSpec((nb, Ho * Wo, cout_p), lambda n: (n, 0, 0))
                      for _ in range(n_out))

    cdt = jnp.dtype(compute_dtype).itemsize
    odt = jnp.dtype(out_dtype).itemsize
    flops = 2 * N * Ho * Wo * cin_p * cout_p * (k * k + int(has_shortcut))
    bytes_accessed = (phases.size * phases.dtype.itemsize + mask.size * 4
                      + w_taps.size * cdt
                      + (w_sc.size * cdt if has_shortcut else 0)
                      + (residual.size * residual.dtype.itemsize if has_residual else 0)
                      + n_out * N * Ho * Wo * cout_p * odt)

    return pl.pallas_call(
        kern,
        grid=(N // nb,),
        in_specs=in_specs,
        out_specs=out_specs,
        out_shape=out_shape,
        compiler_params=pltpu.CompilerParams(dimension_semantics=("parallel",)),
        cost_estimate=pl.CostEstimate(flops=flops, transcendentals=0,
                                      bytes_accessed=bytes_accessed),
    )(*inputs)


def preact_block_forward(x_nchw, params, stride, compute_dtype=jnp.bfloat16):
    x = jnp.transpose(x_nchw, (0, 2, 3, 1)).astype(jnp.float32)   # NCHW -> NHWC
    N, H, W, cin = x.shape
    planes = params["w_conv1"].shape[0]
    cin_p = _round_up(cin, LANE)       # lane-dense contraction dim
    cpl = _round_up(planes, LANE)      # lane-dense output dim (unmasked stores)

    # Fold eval-mode BN into per-channel scale/bias; zero-pad to the padded channel
    # widths (padded channels stay exactly 0 through relu and hit zero weight rows).
    def fold_bn(gamma, beta, mean, var, cp):
        s = gamma / jnp.sqrt(var + _EPS)
        b = beta - mean * s
        c = gamma.shape[0]
        return (jnp.pad(s, (0, cp - c)).reshape(1, cp),
                jnp.pad(b, (0, cp - c)).reshape(1, cp))

    s1, b1 = fold_bn(params["bn1_gamma"], params["bn1_beta"],
                     params["bn1_mean"], params["bn1_var"], cin_p)
    s2, b2 = fold_bn(params["bn2_gamma"], params["bn2_beta"],
                     params["bn2_mean"], params["bn2_var"], cpl)

    # Weights: (O, I, kh, kw) -> (kh*kw, I_pad, O_pad), compute dtype (bf16 default).
    def prep_w(w, ci_p, co_p):
        co, ci, kh, kw = w.shape
        wm = jnp.transpose(w, (2, 3, 1, 0)).reshape(kh * kw, ci, co)
        wm = jnp.pad(wm, ((0, 0), (0, ci_p - ci), (0, co_p - co)))
        return wm.astype(compute_dtype)

    w1 = prep_w(params["w_conv1"], cin_p, cpl)
    w2 = prep_w(params["w_conv2"], cpl, cpl)

    x_p = jnp.pad(x, ((0, 0), (0, 0), (0, 0), (0, cin_p - cin)))

    # Inter-conv activations (y1 and the fused shortcut) are stored in the compute
    # dtype (bf16 fast path) to halve HBM writeback/readback between the two convs;
    # BN math and the residual add stay f32 inside the kernels.
    inter_dtype = compute_dtype

    if "w_shortcut" in params:
        w_sc = prep_w(params["w_shortcut"], cin_p, cpl)[0]         # (cin_p, cpl)
        y1, shortcut = fused_preact_conv(
            x_p, w1, s1, b1, k=3, stride=stride, pad=1, w_sc=w_sc,
            out_dtype=inter_dtype, compute_dtype=compute_dtype)
    else:
        # Identity shortcut (stride == 1 and in_planes == planes): residual is raw x.
        (y1,) = fused_preact_conv(x_p, w1, s1, b1, k=3, stride=stride, pad=1,
                                  out_dtype=inter_dtype, compute_dtype=compute_dtype)
        shortcut = x_p.reshape(N, H * W, cin_p)

    Ho = (H + 2 - 3) // stride + 1
    Wo = (W + 2 - 3) // stride + 1
    y1_img = y1.reshape(N, Ho, Wo, cpl)

    # conv2 (stride 1) with bn2+relu fused on its input and the residual add fused
    # into the same kernel's epilogue; final output accumulated/stored in f32.
    (y2,) = fused_preact_conv(y1_img, w2, s2, b2, k=3, stride=1, pad=1,
                              residual=shortcut, out_dtype=jnp.float32,
                              compute_dtype=compute_dtype)

    out = y2.reshape(N, Ho, Wo, cpl)[..., :planes]
    return jnp.transpose(out, (0, 3, 1, 2))                        # NHWC -> NCHW


# ----------------------------- reference (plain JAX) ----------------------------

def reference_forward(x_nchw, params, stride):
    eps = 1e-5

    def bn(x, g, b, m, v):
        g, b, m, v = (t[None, :, None, None] for t in (g, b, m, v))
        return (x - m) / jnp.sqrt(v + eps) * g + b

    def conv(x, w, s, p):
        return jax.lax.conv_general_dilated(
            x, w, (s, s), [(p, p), (p, p)],
            dimension_numbers=("NCHW", "OIHW", "NCHW"),
        )

    out = jax.nn.relu(bn(x_nchw, params["bn1_gamma"], params["bn1_beta"],
                         params["bn1_mean"], params["bn1_var"]))
    shortcut = conv(out, params["w_shortcut"], stride, 0) if "w_shortcut" in params else x_nchw
    out = conv(out, params["w_conv1"], stride, 1)
    out = jax.nn.relu(bn(out, params["bn2_gamma"], params["bn2_beta"],
                         params["bn2_mean"], params["bn2_var"]))
    out = conv(out, params["w_conv2"], 1, 1)
    return out + shortcut


# ----------------------------- main --------------------------------------------

if __name__ == "__main__":
    key = jax.random.PRNGKey(0)

    def make_params(in_planes, planes, with_shortcut, k):
        ks = jax.random.split(k, 11)
        p = {
            "bn1_gamma": jax.random.uniform(ks[0], (in_planes,), minval=0.5, maxval=1.5),
            "bn1_beta": jax.random.normal(ks[1], (in_planes,)) * 0.1,
            "bn1_mean": jax.random.normal(ks[2], (in_planes,)) * 0.1,
            "bn1_var": jax.random.uniform(ks[3], (in_planes,), minval=0.5, maxval=1.5),
            "bn2_gamma": jax.random.uniform(ks[4], (planes,), minval=0.5, maxval=1.5),
            "bn2_beta": jax.random.normal(ks[5], (planes,)) * 0.1,
            "bn2_mean": jax.random.normal(ks[6], (planes,)) * 0.1,
            "bn2_var": jax.random.uniform(ks[7], (planes,), minval=0.5, maxval=1.5),
            "w_conv1": jax.random.normal(ks[8], (planes, in_planes, 3, 3)) * 0.1,
            "w_conv2": jax.random.normal(ks[9], (planes, planes, 3, 3)) * 0.1,
        }
        if with_shortcut:
            p["w_shortcut"] = jax.random.normal(ks[10], (planes, in_planes, 1, 1)) * 0.1
        return {k_: v.astype(jnp.float32) for k_, v in p.items()}

    N, H, W = 2, 16, 16
    k_a, k_b, k_x1, k_x2 = jax.random.split(key, 4)

    cases = [
        # (in_planes, planes, stride, with_shortcut, x, param_key)
        (4, 8, 2, True, jax.random.normal(k_x1, (N, 4, H, W), dtype=jnp.float32), k_a),
        (8, 8, 1, False, jax.random.normal(k_x2, (N, 8, H, W), dtype=jnp.float32), k_b),
    ]

    for in_planes, planes, stride, with_sc, x, pk in cases:
        params = make_params(in_planes, planes, with_sc, pk)
        ref = reference_forward(x, params, stride)

        # Tight structural check with f32 MXU operands and f32 intermediates.
        fwd32 = jax.jit(functools.partial(preact_block_forward, stride=stride,
                                          compute_dtype=jnp.float32))
        out32 = jax.block_until_ready(fwd32(x, params))
        assert out32.shape == (N, planes, H // stride, W // stride), out32.shape
        assert jnp.allclose(out32, ref, atol=2e-4, rtol=2e-4), \
            float(jnp.max(jnp.abs(out32 - ref)))

        # bf16 MXU operands + bf16 inter-conv activations, f32 accumulation.
        fwd16 = jax.jit(functools.partial(preact_block_forward, stride=stride,
                                          compute_dtype=jnp.bfloat16))
        out16 = jax.block_until_ready(fwd16(x, params))
        assert out16.shape == (N, planes, H // stride, W // stride), out16.shape
        assert jnp.allclose(out16, ref, atol=5e-2, rtol=5e-2), \
            float(jnp.max(jnp.abs(out16 - ref)))

    print("KERNEL_OK")
</pallas_src>

<mosaic_0001>
module attributes {stable_mosaic.version = 11 : i64} {
  func.func @_fused_conv_kernel(%arg0: i32, %arg1: memref<2x36x16x128xf32, #tpu.memory_space<vmem>>, %arg2: memref<36x16x1xf32, #tpu.memory_space<vmem>>, %arg3: memref<1x128xf32, #tpu.memory_space<vmem>>, %arg4: memref<1x128xf32, #tpu.memory_space<vmem>>, %arg5: memref<9x128x128xf32, #tpu.memory_space<vmem>>, %arg6: memref<128x128xf32, #tpu.memory_space<vmem>>, %arg7: memref<2x64x128xf32, #tpu.memory_space<vmem>>, %arg8: memref<2x64x128xf32, #tpu.memory_space<vmem>>) attributes {dimension_semantics = [#tpu.dimension_semantics<parallel>], iteration_bounds = array<i64: 1>, scalar_prefetch = 0 : i64, scratch_operands = 0 : i64, tpu.core_type = #tpu.core_type<tc>, window_params = [{transform_indices = @transform_0, window_bounds = array<i64: 2, 36, 16, 128>}, {pipeline_mode = #tpu.pipeline_mode<synchronous>, transform_indices = @transform_1, window_bounds = array<i64: 36, 16, 1>}, {pipeline_mode = #tpu.pipeline_mode<synchronous>, transform_indices = @transform_2, window_bounds = array<i64: 1, 128>}, {pipeline_mode = #tpu.pipeline_mode<synchronous>, transform_indices = @transform_3, window_bounds = array<i64: 1, 128>}, {pipeline_mode = #tpu.pipeline_mode<synchronous>, transform_indices = @transform_4, window_bounds = array<i64: 9, 128, 128>}, {pipeline_mode = #tpu.pipeline_mode<synchronous>, transform_indices = @transform_5, window_bounds = array<i64: 128, 128>}, {transform_indices = @transform_6, window_bounds = array<i64: 2, 64, 128>}, {transform_indices = @transform_7, window_bounds = array<i64: 2, 64, 128>}]} {
    %c0 = arith.constant 0 : index
    %c0_0 = arith.constant 0 : index
    %c0_1 = arith.constant 0 : index
    %c0_2 = arith.constant 0 : index
    %0 = vector.load %arg1[%c0, %c0_0, %c0_1, %c0_2] : memref<2x36x16x128xf32, #tpu.memory_space<vmem>>, vector<2x36x16x128xf32>
    %c0_3 = arith.constant 0 : index
    %c0_4 = arith.constant 0 : index
    %1 = vector.load %arg3[%c0_3, %c0_4] : memref<1x128xf32, #tpu.memory_space<vmem>>, vector<1x128xf32>
    %2 = vector.shape_cast %1 : vector<1x128xf32> to vector<1x1x1x128xf32>
    %3 = vector.broadcast %2 : vector<1x1x1x128xf32> to vector<2x36x16x128xf32>
    %4 = arith.mulf %0, %3 : vector<2x36x16x128xf32>
    %c0_5 = arith.constant 0 : index
    %c0_6 = arith.constant 0 : index
    %5 = vector.load %arg4[%c0_5, %c0_6] : memref<1x128xf32, #tpu.memory_space<vmem>>, vector<1x128xf32>
    %6 = vector.shape_cast %5 : vector<1x128xf32> to vector<1x1x1x128xf32>
    %7 = vector.broadcast %6 : vector<1x1x1x128xf32> to vector<2x36x16x128xf32>
    %8 = arith.addf %4, %7 : vector<2x36x16x128xf32>
    %cst = arith.constant 0.000000e+00 : f32
    %9 = vector.broadcast %cst : f32 to vector<2x36x16x128xf32>
    %10 = arith.maximumf %8, %9 : vector<2x36x16x128xf32>
    %c0_7 = arith.constant 0 : index
    %c0_8 = arith.constant 0 : index
    %c0_9 = arith.constant 0 : index
    %11 = vector.load %arg2[%c0_7, %c0_8, %c0_9] : memref<36x16x1xf32, #tpu.memory_space<vmem>>, vector<36x16x1xf32>
    %12 = vector.shape_cast %11 : vector<36x16x1xf32> to vector<1x36x16x1xf32>
    %13 = vector.broadcast %12 : vector<1x36x16x1xf32> to vector<2x36x16x128xf32>
    %14 = arith.mulf %10, %13 : vector<2x36x16x128xf32>
    %15 = vector.extract_strided_slice %14 {offsets = [0, 0, 0, 0], sizes = [2, 36, 8, 128], strides = [1, 1, 1, 1]} : vector<2x36x16x128xf32> to vector<2x36x8x128xf32>
    %16 = vector.extract_strided_slice %14 {offsets = [0, 0, 1, 0], sizes = [2, 36, 8, 128], strides = [1, 1, 1, 1]} : vector<2x36x16x128xf32> to vector<2x36x8x128xf32>
    %cst_10 = arith.constant 0.000000e+00 : f32
    %17 = vector.broadcast %cst_10 : f32 to vector<128x128xf32>
    %18 = vector.extract_strided_slice %15 {offsets = [0, 0, 0, 0], sizes = [2, 8, 8, 128], strides = [1, 1, 1, 1]} : vector<2x36x8x128xf32> to vector<2x8x8x128xf32>
    %19 = vector.shape_cast %18 : vector<2x8x8x128xf32> to vector<128x128xf32>
    %c0_11 = arith.constant 0 : index
    %c0_12 = arith.constant 0 : index
    %c0_13 = arith.constant 0 : index
    %20 = vector.load %arg5[%c0_11, %c0_12, %c0_13] : memref<9x128x128xf32, #tpu.memory_space<vmem>>, vector<1x128x128xf32>
    %21 = vector.shape_cast %20 : vector<1x128x128xf32> to vector<128x128xf32>
    %cst_14 = arith.constant dense<0.000000e+00> : vector<128x128xf32>
    %22 = tpu.matmul %19, %21, %cst_14 {dimension_numbers = #tpu.dot_dimension_numbers<[1], [0], [0], [1], [0, 0, 1, 1], [], []>} : vector<128x128xf32>, vector<128x128xf32>, vector<128x128xf32> -> vector<128x128xf32>
    %23 = arith.addf %17, %22 : vector<128x128xf32>
    %24 = vector.extract_strided_slice %15 {offsets = [0, 9, 0, 0], sizes = [2, 8, 8, 128], strides = [1, 1, 1, 1]} : vector<2x36x8x128xf32> to vector<2x8x8x128xf32>
    %25 = vector.shape_cast %24 : vector<2x8x8x128xf32> to vector<128x128xf32>
    %c1 = arith.constant 1 : index
    %c0_15 = arith.constant 0 : index
    %c0_16 = arith.constant 0 : index
    %26 = vector.load %arg5[%c1, %c0_15, %c0_16] : memref<9x128x128xf32, #tpu.memory_space<vmem>>, vector<1x128x128xf32>
    %27 = vector.shape_cast %26 : vector<1x128x128xf32> to vector<128x128xf32>
    %cst_17 = arith.constant dense<0.000000e+00> : vector<128x128xf32>
    %28 = tpu.matmul %25, %27, %cst_17 {dimension_numbers = #tpu.dot_dimension_numbers<[1], [0], [0], [1], [0, 0, 1, 1], [], []>} : vector<128x128xf32>, vector<128x128xf32>, vector<128x128xf32> -> vector<128x128xf32>
    %29 = arith.addf %23, %28 : vector<128x128xf32>
    %30 = vector.extract_strided_slice %16 {offsets = [0, 0, 0, 0], sizes = [2, 8, 8, 128], strides = [1, 1, 1, 1]} : vector<2x36x8x128xf32> to vector<2x8x8x128xf32>
    %31 = vector.shape_cast %30 : vector<2x8x8x128xf32> to vector<128x128xf32>
    %c2 = arith.constant 2 : index
    %c0_18 = arith.constant 0 : index
    %c0_19 = arith.constant 0 : index
    %32 = vector.load %arg5[%c2, %c0_18, %c0_19] : memref<9x128x128xf32, #tpu.memory_space<vmem>>, vector<1x128x128xf32>
    %33 = vector.shape_cast %32 : vector<1x128x128xf32> to vector<128x128xf32>
    %cst_20 = arith.constant dense<0.000000e+00> : vector<128x128xf32>
    %34 = tpu.matmul %31, %33, %cst_20 {dimension_numbers = #tpu.dot_dimension_numbers<[1], [0], [0], [1], [0, 0, 1, 1], [], []>} : vector<128x128xf32>, vector<128x128xf32>, vector<128x128xf32> -> vector<128x128xf32>
    %35 = arith.addf %29, %34 : vector<128x128xf32>
    %36 = vector.extract_strided_slice %15 {offsets = [0, 18, 0, 0], sizes = [2, 8, 8, 128], strides = [1, 1, 1, 1]} : vector<2x36x8x128xf32> to vector<2x8x8x128xf32>
    %37 = vector.shape_cast %36 : vector<2x8x8x128xf32> to vector<128x128xf32>
    %c3 = arith.constant 3 : index
    %c0_21 = arith.constant 0 : index
    %c0_22 = arith.constant 0 : index
    %38 = vector.load %arg5[%c3, %c0_21, %c0_22] : memref<9x128x128xf32, #tpu.memory_space<vmem>>, vector<1x128x128xf32>
    %39 = vector.shape_cast %38 : vector<1x128x128xf32> to vector<128x128xf32>
    %cst_23 = arith.constant dense<0.000000e+00> : vector<128x128xf32>
    %40 = tpu.matmul %37, %39, %cst_23 {dimension_numbers = #tpu.dot_dimension_numbers<[1], [0], [0], [1], [0, 0, 1, 1], [], []>} : vector<128x128xf32>, vector<128x128xf32>, vector<128x128xf32> -> vector<128x128xf32>
    %41 = arith.addf %35, %40 : vector<128x128xf32>
    %42 = vector.extract_strided_slice %15 {offsets = [0, 27, 0, 0], sizes = [2, 8, 8, 128], strides = [1, 1, 1, 1]} : vector<2x36x8x128xf32> to vector<2x8x8x128xf32>
    %43 = vector.shape_cast %42 : vector<2x8x8x128xf32> to vector<128x128xf32>
    %c4 = arith.constant 4 : index
    %c0_24 = arith.constant 0 : index
    %c0_25 = arith.constant 0 : index
    %44 = vector.load %arg5[%c4, %c0_24, %c0_25] : memref<9x128x128xf32, #tpu.memory_space<vmem>>, vector<1x128x128xf32>
    %45 = vector.shape_cast %44 : vector<1x128x128xf32> to vector<128x128xf32>
    %cst_26 = arith.constant dense<0.000000e+00> : vector<128x128xf32>
    %46 = tpu.matmul %43, %45, %cst_26 {dimension_numbers = #tpu.dot_dimension_numbers<[1], [0], [0], [1], [0, 0, 1, 1], [], []>} : vector<128x128xf32>, vector<128x128xf32>, vector<128x128xf32> -> vector<128x128xf32>
    %47 = arith.addf %41, %46 : vector<128x128xf32>
    %c0_27 = arith.constant 0 : index
    %c0_28 = arith.constant 0 : index
    %48 = vector.load %arg6[%c0_27, %c0_28] : memref<128x128xf32, #tpu.memory_space<vmem>>, vector<128x128xf32>
    %cst_29 = arith.constant dense<0.000000e+00> : vector<128x128xf32>
    %49 = tpu.matmul %43, %48, %cst_29 {dimension_numbers = #tpu.dot_dimension_numbers<[1], [0], [0], [1], [0, 0, 1, 1], [], []>} : vector<128x128xf32>, vector<128x128xf32>, vector<128x128xf32> -> vector<128x128xf32>
    %50 = vector.extract_strided_slice %16 {offsets = [0, 18, 0, 0], sizes = [2, 8, 8, 128], strides = [1, 1, 1, 1]} : vector<2x36x8x128xf32> to vector<2x8x8x128xf32>
    %51 = vector.shape_cast %50 : vector<2x8x8x128xf32> to vector<128x128xf32>
    %c5 = arith.constant 5 : index
    %c0_30 = arith.constant 0 : index
    %c0_31 = arith.constant 0 : index
    %52 = vector.load %arg5[%c5, %c0_30, %c0_31] : memref<9x128x128xf32, #tpu.memory_space<vmem>>, vector<1x128x128xf32>
    %53 = vector.shape_cast %52 : vector<1x128x128xf32> to vector<128x128xf32>
    %cst_32 = arith.constant dense<0.000000e+00> : vector<128x128xf32>
    %54 = tpu.matmul %51, %53, %cst_32 {dimension_numbers = #tpu.dot_dimension_numbers<[1], [0], [0], [1], [0, 0, 1, 1], [], []>} : vector<128x128xf32>, vector<128x128xf32>, vector<128x128xf32> -> vector<128x128xf32>
    %55 = arith.addf %47, %54 : vector<128x128xf32>
    %56 = vector.extract_strided_slice %15 {offsets = [0, 1, 0, 0], sizes = [2, 8, 8, 128], strides = [1, 1, 1, 1]} : vector<2x36x8x128xf32> to vector<2x8x8x128xf32>
    %57 = vector.shape_cast %56 : vector<2x8x8x128xf32> to vector<128x128xf32>
    %c6 = arith.constant 6 : index
    %c0_33 = arith.constant 0 : index
    %c0_34 = arith.constant 0 : index
    %58 = vector.load %arg5[%c6, %c0_33, %c0_34] : memref<9x128x128xf32, #tpu.memory_space<vmem>>, vector<1x128x128xf32>
    %59 = vector.shape_cast %58 : vector<1x128x128xf32> to vector<128x128xf32>
    %cst_35 = arith.constant dense<0.000000e+00> : vector<128x128xf32>
    %60 = tpu.matmul %57, %59, %cst_35 {dimension_numbers = #tpu.dot_dimension_numbers<[1], [0], [0], [1], [0, 0, 1, 1], [], []>} : vector<128x128xf32>, vector<128x128xf32>, vector<128x128xf32> -> vector<128x128xf32>
    %61 = arith.addf %55, %60 : vector<128x128xf32>
    %62 = vector.extract_strided_slice %15 {offsets = [0, 10, 0, 0], sizes = [2, 8, 8, 128], strides = [1, 1, 1, 1]} : vector<2x36x8x128xf32> to vector<2x8x8x128xf32>
    %63 = vector.shape_cast %62 : vector<2x8x8x128xf32> to vector<128x128xf32>
    %c7 = arith.constant 7 : index
    %c0_36 = arith.constant 0 : index
    %c0_37 = arith.constant 0 : index
    %64 = vector.load %arg5[%c7, %c0_36, %c0_37] : memref<9x128x128xf32, #tpu.memory_space<vmem>>, vector<1x128x128xf32>
    %65 = vector.shape_cast %64 : vector<1x128x128xf32> to vector<128x128xf32>
    %cst_38 = arith.constant dense<0.000000e+00> : vector<128x128xf32>
    %66 = tpu.matmul %63, %65, %cst_38 {dimension_numbers = #tpu.dot_dimension_numbers<[1], [0], [0], [1], [0, 0, 1, 1], [], []>} : vector<128x128xf32>, vector<128x128xf32>, vector<128x128xf32> -> vector<128x128xf32>
    %67 = arith.addf %61, %66 : vector<128x128xf32>
    %68 = vector.extract_strided_slice %16 {offsets = [0, 1, 0, 0], sizes = [2, 8, 8, 128], strides = [1, 1, 1, 1]} : vector<2x36x8x128xf32> to vector<2x8x8x128xf32>
    %69 = vector.shape_cast %68 : vector<2x8x8x128xf32> to vector<128x128xf32>
    %c8 = arith.constant 8 : index
    %c0_39 = arith.constant 0 : index
    %c0_40 = arith.constant 0 : index
    %70 = vector.load %arg5[%c8, %c0_39, %c0_40] : memref<9x128x128xf32, #tpu.memory_space<vmem>>, vector<1x128x128xf32>
    %71 = vector.shape_cast %70 : vector<1x128x128xf32> to vector<128x128xf32>
    %cst_41 = arith.constant dense<0.000000e+00> : vector<128x128xf32>
    %72 = tpu.matmul %69, %71, %cst_41 {dimension_numbers = #tpu.dot_dimension_numbers<[1], [0], [0], [1], [0, 0, 1, 1], [], []>} : vector<128x128xf32>, vector<128x128xf32>, vector<128x128xf32> -> vector<128x128xf32>
    %73 = arith.addf %67, %72 : vector<128x128xf32>
    %74 = vector.shape_cast %73 : vector<128x128xf32> to vector<2x64x128xf32>
    %c0_42 = arith.constant 0 : index
    %c0_43 = arith.constant 0 : index
    %c0_44 = arith.constant 0 : index
    %75 = vector.load %arg7[%c0_42, %c0_43, %c0_44] : memref<2x64x128xf32, #tpu.memory_space<vmem>>, vector<2x64x128xf32>
    tpu.vector_store %arg7[%c0_42, %c0_43, %c0_44], %74 {strides = array<i32>} : memref<2x64x128xf32, #tpu.memory_space<vmem>>, vector<2x64x128xf32>,
    %76 = vector.shape_cast %49 : vector<128x128xf32> to vector<2x64x128xf32>
    %c0_45 = arith.constant 0 : index
    %c0_46 = arith.constant 0 : index
    %c0_47 = arith.constant 0 : index
    %77 = vector.load %arg8[%c0_45, %c0_46, %c0_47] : memref<2x64x128xf32, #tpu.memory_space<vmem>>, vector<2x64x128xf32>
    tpu.vector_store %arg8[%c0_45, %c0_46, %c0_47], %76 {strides = array<i32>} : memref<2x64x128xf32, #tpu.memory_space<vmem>>, vector<2x64x128xf32>,
    return
  }
  func.func @transform_0(%arg0: i32) -> (i32, i32, i32, i32) {
    %c0_i32 = arith.constant 0 : i32
    %c0_i32_0 = arith.constant 0 : i32
    %c0_i32_1 = arith.constant 0 : i32
    %c0_i32_2 = arith.constant 0 : i32
    return %arg0, %c0_i32, %c0_i32_0, %c0_i32_1 : i32, i32, i32, i32
  }
  func.func @transform_1(%arg0: i32) -> (i32, i32, i32) {
    %c0_i32 = arith.constant 0 : i32
    %c0_i32_0 = arith.constant 0 : i32
    %c0_i32_1 = arith.constant 0 : i32
    %c0_i32_2 = arith.constant 0 : i32
    return %c0_i32, %c0_i32_0, %c0_i32_1 : i32, i32, i32
  }
  func.func @transform_2(%arg0: i32) -> (i32, i32) {
    %c0_i32 = arith.constant 0 : i32
    %c0_i32_0 = arith.constant 0 : i32
    %c0_i32_1 = arith.constant 0 : i32
    return %c0_i32, %c0_i32_0 : i32, i32
  }
  func.func @transform_3(%arg0: i32) -> (i32, i32) {
    %c0_i32 = arith.constant 0 : i32
    %c0_i32_0 = arith.constant 0 : i32
    %c0_i32_1 = arith.constant 0 : i32
    return %c0_i32, %c0_i32_0 : i32, i32
  }
  func.func @transform_4(%arg0: i32) -> (i32, i32, i32) {
    %c0_i32 = arith.constant 0 : i32
    %c0_i32_0 = arith.constant 0 : i32
    %c0_i32_1 = arith.constant 0 : i32
    %c0_i32_2 = arith.constant 0 : i32
    return %c0_i32, %c0_i32_0, %c0_i32_1 : i32, i32, i32
  }
  func.func @transform_5(%arg0: i32) -> (i32, i32) {
    %c0_i32 = arith.constant 0 : i32
    %c0_i32_0 = arith.constant 0 : i32
    %c0_i32_1 = arith.constant 0 : i32
    return %c0_i32, %c0_i32_0 : i32, i32
  }
  func.func @transform_6(%arg0: i32) -> (i32, i32, i32) {
    %c0_i32 = arith.constant 0 : i32
    %c0_i32_0 = arith.constant 0 : i32
    %c0_i32_1 = arith.constant 0 : i32
    return %arg0, %c0_i32, %c0_i32_0 : i32, i32, i32
  }
  func.func @transform_7(%arg0: i32) -> (i32, i32, i32) {
    %c0_i32 = arith.constant 0 : i32
    %c0_i32_0 = arith.constant 0 : i32
    %c0_i32_1 = arith.constant 0 : i32
    return %arg0, %c0_i32, %c0_i32_0 : i32, i32, i32
  }
}

module attributes {stable_mosaic.version = 11 : i64} {
  func.func @_fused_conv_kernel(%arg0: i32, %arg1: memref<2x10x16x128xf32, #tpu.memory_space<vmem>>, %arg2: memref<10x16x1xf32, #tpu.memory_space<vmem>>, %arg3: memref<1x128xf32, #tpu.memory_space<vmem>>, %arg4: memref<1x128xf32, #tpu.memory_space<vmem>>, %arg5: memref<9x128x128xf32, #tpu.memory_space<vmem>>, %arg6: memref<2x64x128xf32, #tpu.memory_space<vmem>>, %arg7: memref<2x64x128xf32, #tpu.memory_space<vmem>>) attributes {dimension_semantics = [#tpu.dimension_semantics<parallel>], iteration_bounds = array<i64: 1>, scalar_prefetch = 0 : i64, scratch_operands = 0 : i64, tpu.core_type = #tpu.core_type<tc>, window_params = [{transform_indices = @transform_0, window_bounds = array<i64: 2, 10, 16, 128>}, {pipeline_mode = #tpu.pipeline_mode<synchronous>, transform_indices = @transform_1, window_bounds = array<i64: 10, 16, 1>}, {pipeline_mode = #tpu.pipeline_mode<synchronous>, transform_indices = @transform_2, window_bounds = array<i64: 1, 128>}, {pipeline_mode = #tpu.pipeline_mode<synchronous>, transform_indices = @transform_3, window_bounds = array<i64: 1, 128>}, {pipeline_mode = #tpu.pipeline_mode<synchronous>, transform_indices = @transform_4, window_bounds = array<i64: 9, 128, 128>}, {transform_indices = @transform_5, window_bounds = array<i64: 2, 64, 128>}, {transform_indices = @transform_6, window_bounds = array<i64: 2, 64, 128>}]} {
    %c0 = arith.constant 0 : index
    %c0_0 = arith.constant 0 : index
    %c0_1 = arith.constant 0 : index
    %c0_2 = arith.constant 0 : index
    %0 = vector.load %arg1[%c0, %c0_0, %c0_1, %c0_2] : memref<2x10x16x128xf32, #tpu.memory_space<vmem>>, vector<2x10x16x128xf32>
    %c0_3 = arith.constant 0 : index
    %c0_4 = arith.constant 0 : index
    %1 = vector.load %arg3[%c0_3, %c0_4] : memref<1x128xf32, #tpu.memory_space<vmem>>, vector<1x128xf32>
    %2 = vector.shape_cast %1 : vector<1x128xf32> to vector<1x1x1x128xf32>
    %3 = vector.broadcast %2 : vector<1x1x1x128xf32> to vector<2x10x16x128xf32>
    %4 = arith.mulf %0, %3 : vector<2x10x16x128xf32>
    %c0_5 = arith.constant 0 : index
    %c0_6 = arith.constant 0 : index
    %5 = vector.load %arg4[%c0_5, %c0_6] : memref<1x128xf32, #tpu.memory_space<vmem>>, vector<1x128xf32>
    %6 = vector.shape_cast %5 : vector<1x128xf32> to vector<1x1x1x128xf32>
    %7 = vector.broadcast %6 : vector<1x1x1x128xf32> to vector<2x10x16x128xf32>
    %8 = arith.addf %4, %7 : vector<2x10x16x128xf32>
    %cst = arith.constant 0.000000e+00 : f32
    %9 = vector.broadcast %cst : f32 to vector<2x10x16x128xf32>
    %10 = arith.maximumf %8, %9 : vector<2x10x16x128xf32>
    %c0_7 = arith.constant 0 : index
    %c0_8 = arith.constant 0 : index
    %c0_9 = arith.constant 0 : index
    %11 = vector.load %arg2[%c0_7, %c0_8, %c0_9] : memref<10x16x1xf32, #tpu.memory_space<vmem>>, vector<10x16x1xf32>
    %12 = vector.shape_cast %11 : vector<10x16x1xf32> to vector<1x10x16x1xf32>
    %13 = vector.broadcast %12 : vector<1x10x16x1xf32> to vector<2x10x16x128xf32>
    %14 = arith.mulf %10, %13 : vector<2x10x16x128xf32>
    %15 = vector.extract_strided_slice %14 {offsets = [0, 0, 0, 0], sizes = [2, 10, 8, 128], strides = [1, 1, 1, 1]} : vector<2x10x16x128xf32> to vector<2x10x8x128xf32>
    %16 = vector.extract_strided_slice %14 {offsets = [0, 0, 1, 0], sizes = [2, 10, 8, 128], strides = [1, 1, 1, 1]} : vector<2x10x16x128xf32> to vector<2x10x8x128xf32>
    %17 = vector.extract_strided_slice %14 {offsets = [0, 0, 2, 0], sizes = [2, 10, 8, 128], strides = [1, 1, 1, 1]} : vector<2x10x16x128xf32> to vector<2x10x8x128xf32>
    %cst_10 = arith.constant 0.000000e+00 : f32
    %18 = vector.broadcast %cst_10 : f32 to vector<128x128xf32>
    %19 = vector.extract_strided_slice %15 {offsets = [0, 0, 0, 0], sizes = [2, 8, 8, 128], strides = [1, 1, 1, 1]} : vector<2x10x8x128xf32> to vector<2x8x8x128xf32>
    %20 = vector.shape_cast %19 : vector<2x8x8x128xf32> to vector<128x128xf32>
    %c0_11 = arith.constant 0 : index
    %c0_12 = arith.constant 0 : index
    %c0_13 = arith.constant 0 : index
    %21 = vector.load %arg5[%c0_11, %c0_12, %c0_13] : memref<9x128x128xf32, #tpu.memory_space<vmem>>, vector<1x128x128xf32>
    %22 = vector.shape_cast %21 : vector<1x128x128xf32> to vector<128x128xf32>
    %cst_14 = arith.constant dense<0.000000e+00> : vector<128x128xf32>
    %23 = tpu.matmul %20, %22, %cst_14 {dimension_numbers = #tpu.dot_dimension_numbers<[1], [0], [0], [1], [0, 0, 1, 1], [], []>} : vector<128x128xf32>, vector<128x128xf32>, vector<128x128xf32> -> vector<128x128xf32>
    %24 = arith.addf %18, %23 : vector<128x128xf32>
    %25 = vector.extract_strided_slice %16 {offsets = [0, 0, 0, 0], sizes = [2, 8, 8, 128], strides = [1, 1, 1, 1]} : vector<2x10x8x128xf32> to vector<2x8x8x128xf32>
    %26 = vector.shape_cast %25 : vector<2x8x8x128xf32> to vector<128x128xf32>
    %c1 = arith.constant 1 : index
    %c0_15 = arith.constant 0 : index
    %c0_16 = arith.constant 0 : index
    %27 = vector.load %arg5[%c1, %c0_15, %c0_16] : memref<9x128x128xf32, #tpu.memory_space<vmem>>, vector<1x128x128xf32>
    %28 = vector.shape_cast %27 : vector<1x128x128xf32> to vector<128x128xf32>
    %cst_17 = arith.constant dense<0.000000e+00> : vector<128x128xf32>
    %29 = tpu.matmul %26, %28, %cst_17 {dimension_numbers = #tpu.dot_dimension_numbers<[1], [0], [0], [1], [0, 0, 1, 1], [], []>} : vector<128x128xf32>, vector<128x128xf32>, vector<128x128xf32> -> vector<128x128xf32>
    %30 = arith.addf %24, %29 : vector<128x128xf32>
    %31 = vector.extract_strided_slice %17 {offsets = [0, 0, 0, 0], sizes = [2, 8, 8, 128], strides = [1, 1, 1, 1]} : vector<2x10x8x128xf32> to vector<2x8x8x128xf32>
    %32 = vector.shape_cast %31 : vector<2x8x8x128xf32> to vector<128x128xf32>
    %c2 = arith.constant 2 : index
    %c0_18 = arith.constant 0 : index
    %c0_19 = arith.constant 0 : index
    %33 = vector.load %arg5[%c2, %c0_18, %c0_19] : memref<9x128x128xf32, #tpu.memory_space<vmem>>, vector<1x128x128xf32>
    %34 = vector.shape_cast %33 : vector<1x128x128xf32> to vector<128x128xf32>
    %cst_20 = arith.constant dense<0.000000e+00> : vector<128x128xf32>
    %35 = tpu.matmul %32, %34, %cst_20 {dimension_numbers = #tpu.dot_dimension_numbers<[1], [0], [0], [1], [0, 0, 1, 1], [], []>} : vector<128x128xf32>, vector<128x128xf32>, vector<128x128xf32> -> vector<128x128xf32>
    %36 = arith.addf %30, %35 : vector<128x128xf32>
    %37 = vector.extract_strided_slice %15 {offsets = [0, 1, 0, 0], sizes = [2, 8, 8, 128], strides = [1, 1, 1, 1]} : vector<2x10x8x128xf32> to vector<2x8x8x128xf32>
    %38 = vector.shape_cast %37 : vector<2x8x8x128xf32> to vector<128x128xf32>
    %c3 = arith.constant 3 : index
    %c0_21 = arith.constant 0 : index
    %c0_22 = arith.constant 0 : index
    %39 = vector.load %arg5[%c3, %c0_21, %c0_22] : memref<9x128x128xf32, #tpu.memory_space<vmem>>, vector<1x128x128xf32>
    %40 = vector.shape_cast %39 : vector<1x128x128xf32> to vector<128x128xf32>
    %cst_23 = arith.constant dense<0.000000e+00> : vector<128x128xf32>
    %41 = tpu.matmul %38, %40, %cst_23 {dimension_numbers = #tpu.dot_dimension_numbers<[1], [0], [0], [1], [0, 0, 1, 1], [], []>} : vector<128x128xf32>, vector<128x128xf32>, vector<128x128xf32> -> vector<128x128xf32>
    %42 = arith.addf %36, %41 : vector<128x128xf32>
    %43 = vector.extract_strided_slice %16 {offsets = [0, 1, 0, 0], sizes = [2, 8, 8, 128], strides = [1, 1, 1, 1]} : vector<2x10x8x128xf32> to vector<2x8x8x128xf32>
    %44 = vector.shape_cast %43 : vector<2x8x8x128xf32> to vector<128x128xf32>
    %c4 = arith.constant 4 : index
    %c0_24 = arith.constant 0 : index
    %c0_25 = arith.constant 0 : index
    %45 = vector.load %arg5[%c4, %c0_24, %c0_25] : memref<9x128x128xf32, #tpu.memory_space<vmem>>, vector<1x128x128xf32>
    %46 = vector.shape_cast %45 : vector<1x128x128xf32> to vector<128x128xf32>
    %cst_26 = arith.constant dense<0.000000e+00> : vector<128x128xf32>
    %47 = tpu.matmul %44, %46, %cst_26 {dimension_numbers = #tpu.dot_dimension_numbers<[1], [0], [0], [1], [0, 0, 1, 1], [], []>} : vector<128x128xf32>, vector<128x128xf32>, vector<128x128xf32> -> vector<128x128xf32>
    %48 = arith.addf %42, %47 : vector<128x128xf32>
    %49 = vector.extract_strided_slice %17 {offsets = [0, 1, 0, 0], sizes = [2, 8, 8, 128], strides = [1, 1, 1, 1]} : vector<2x10x8x128xf32> to vector<2x8x8x128xf32>
    %50 = vector.shape_cast %49 : vector<2x8x8x128xf32> to vector<128x128xf32>
    %c5 = arith.constant 5 : index
    %c0_27 = arith.constant 0 : index
    %c0_28 = arith.constant 0 : index
    %51 = vector.load %arg5[%c5, %c0_27, %c0_28] : memref<9x128x128xf32, #tpu.memory_space<vmem>>, vector<1x128x128xf32>
    %52 = vector.shape_cast %51 : vector<1x128x128xf32> to vector<128x128xf32>
    %cst_29 = arith.constant dense<0.000000e+00> : vector<128x128xf32>
    %53 = tpu.matmul %50, %52, %cst_29 {dimension_numbers = #tpu.dot_dimension_numbers<[1], [0], [0], [1], [0, 0, 1, 1], [], []>} : vector<128x128xf32>, vector<128x128xf32>, vector<128x128xf32> -> vector<128x128xf32>
    %54 = arith.addf %48, %53 : vector<128x128xf32>
    %55 = vector.extract_strided_slice %15 {offsets = [0, 2, 0, 0], sizes = [2, 8, 8, 128], strides = [1, 1, 1, 1]} : vector<2x10x8x128xf32> to vector<2x8x8x128xf32>
    %56 = vector.shape_cast %55 : vector<2x8x8x128xf32> to vector<128x128xf32>
    %c6 = arith.constant 6 : index
    %c0_30 = arith.constant 0 : index
    %c0_31 = arith.constant 0 : index
    %57 = vector.load %arg5[%c6, %c0_30, %c0_31] : memref<9x128x128xf32, #tpu.memory_space<vmem>>, vector<1x128x128xf32>
    %58 = vector.shape_cast %57 : vector<1x128x128xf32> to vector<128x128xf32>
    %cst_32 = arith.constant dense<0.000000e+00> : vector<128x128xf32>
    %59 = tpu.matmul %56, %58, %cst_32 {dimension_numbers = #tpu.dot_dimension_numbers<[1], [0], [0], [1], [0, 0, 1, 1], [], []>} : vector<128x128xf32>, vector<128x128xf32>, vector<128x128xf32> -> vector<128x128xf32>
    %60 = arith.addf %54, %59 : vector<128x128xf32>
    %61 = vector.extract_strided_slice %16 {offsets = [0, 2, 0, 0], sizes = [2, 8, 8, 128], strides = [1, 1, 1, 1]} : vector<2x10x8x128xf32> to vector<2x8x8x128xf32>
    %62 = vector.shape_cast %61 : vector<2x8x8x128xf32> to vector<128x128xf32>
    %c7 = arith.constant 7 : index
    %c0_33 = arith.constant 0 : index
    %c0_34 = arith.constant 0 : index
    %63 = vector.load %arg5[%c7, %c0_33, %c0_34] : memref<9x128x128xf32, #tpu.memory_space<vmem>>, vector<1x128x128xf32>
    %64 = vector.shape_cast %63 : vector<1x128x128xf32> to vector<128x128xf32>
    %cst_35 = arith.constant dense<0.000000e+00> : vector<128x128xf32>
    %65 = tpu.matmul %62, %64, %cst_35 {dimension_numbers = #tpu.dot_dimension_numbers<[1], [0], [0], [1], [0, 0, 1, 1], [], []>} : vector<128x128xf32>, vector<128x128xf32>, vector<128x128xf32> -> vector<128x128xf32>
    %66 = arith.addf %60, %65 : vector<128x128xf32>
    %67 = vector.extract_strided_slice %17 {offsets = [0, 2, 0, 0], sizes = [2, 8, 8, 128], strides = [1, 1, 1, 1]} : vector<2x10x8x128xf32> to vector<2x8x8x128xf32>
    %68 = vector.shape_cast %67 : vector<2x8x8x128xf32> to vector<128x128xf32>
    %c8 = arith.constant 8 : index
    %c0_36 = arith.constant 0 : index
    %c0_37 = arith.constant 0 : index
    %69 = vector.load %arg5[%c8, %c0_36, %c0_37] : memref<9x128x128xf32, #tpu.memory_space<vmem>>, vector<1x128x128xf32>
    %70 = vector.shape_cast %69 : vector<1x128x128xf32> to vector<128x128xf32>
    %cst_38 = arith.constant dense<0.000000e+00> : vector<128x128xf32>
    %71 = tpu.matmul %68, %70, %cst_38 {dimension_numbers = #tpu.dot_dimension_numbers<[1], [0], [0], [1], [0, 0, 1, 1], [], []>} : vector<128x128xf32>, vector<128x128xf32>, vector<128x128xf32> -> vector<128x128xf32>
    %72 = arith.addf %66, %71 : vector<128x128xf32>
    %c0_39 = arith.constant 0 : index
    %c0_40 = arith.constant 0 : index
    %c0_41 = arith.constant 0 : index
    %73 = vector.load %arg6[%c0_39, %c0_40, %c0_41] : memref<2x64x128xf32, #tpu.memory_space<vmem>>, vector<2x64x128xf32>
    %74 = vector.shape_cast %73 : vector<2x64x128xf32> to vector<128x128xf32>
    %75 = arith.addf %72, %74 : vector<128x128xf32>
    %76 = vector.shape_cast %75 : vector<128x128xf32> to vector<2x64x128xf32>
    %c0_42 = arith.constant 0 : index
    %c0_43 = arith.constant 0 : index
    %c0_44 = arith.constant 0 : index
    %77 = vector.load %arg7[%c0_42, %c0_43, %c0_44] : memref<2x64x128xf32, #tpu.memory_space<vmem>>, vector<2x64x128xf32>
    tpu.vector_store %arg7[%c0_42, %c0_43, %c0_44], %76 {strides = array<i32>} : memref<2x64x128xf32, #tpu.memory_space<vmem>>, vector<2x64x128xf32>,
    return
  }
  func.func @transform_0(%arg0: i32) -> (i32, i32, i32, i32) {
    %c0_i32 = arith.constant 0 : i32
    %c0_i32_0 = arith.constant 0 : i32
    %c0_i32_1 = arith.constant 0 : i32
    %c0_i32_2 = arith.constant 0 : i32
    return %arg0, %c0_i32, %c0_i32_0, %c0_i32_1 : i32, i32, i32, i32
  }
  func.func @transform_1(%arg0: i32) -> (i32, i32, i32) {
    %c0_i32 = arith.constant 0 : i32
    %c0_i32_0 = arith.constant 0 : i32
    %c0_i32_1 = arith.constant 0 : i32
    %c0_i32_2 = arith.constant 0 : i32
    return %c0_i32, %c0_i32_0, %c0_i32_1 : i32, i32, i32
  }
  func.func @transform_2(%arg0: i32) -> (i32, i32) {
    %c0_i32 = arith.constant 0 : i32
    %c0_i32_0 = arith.constant 0 : i32
    %c0_i32_1 = arith.constant 0 : i32
    return %c0_i32, %c0_i32_0 : i32, i32
  }
  func.func @transform_3(%arg0: i32) -> (i32, i32) {
    %c0_i32 = arith.constant 0 : i32
    %c0_i32_0 = arith.constant 0 : i32
    %c0_i32_1 = arith.constant 0 : i32
    return %c0_i32, %c0_i32_0 : i32, i32
  }
  func.func @transform_4(%arg0: i32) -> (i32, i32, i32) {
    %c0_i32 = arith.constant 0 : i32
    %c0_i32_0 = arith.constant 0 : i32
    %c0_i32_1 = arith.constant 0 : i32
    %c0_i32_2 = arith.constant 0 : i32
    return %c0_i32, %c0_i32_0, %c0_i32_1 : i32, i32, i32
  }
  func.func @transform_5(%arg0: i32) -> (i32, i32, i32) {
    %c0_i32 = arith.constant 0 : i32
    %c0_i32_0 = arith.constant 0 : i32
    %c0_i32_1 = arith.constant 0 : i32
    return %arg0, %c0_i32, %c0_i32_0 : i32, i32, i32
  }
  func.func @transform_6(%arg0: i32) -> (i32, i32, i32) {
    %c0_i32 = arith.constant 0 : i32
    %c0_i32_0 = arith.constant 0 : i32
    %c0_i32_1 = arith.constant 0 : i32
    return %arg0, %c0_i32, %c0_i32_0 : i32, i32, i32
  }
}

</mosaic_0001>

<llo_original>
// kernel: squeeze.0
$region0: #{squeeze.0}
  #allocation0 [shape = 's32[1]{0}', space=sflag, size = 0x4, scoped, tag = 'scoped memory for squeeze.0']
  %s0 = inlined_call_operand.vmem [shape: f32[1,10,16,1], index: 0, kind: input, shape index: {}]
  %s1 = inlined_call_operand.vmem [shape: f32[10,16,1], index: 1, kind: output, shape index: {}]
  // Predicated region
  $region2: #{squeeze.0} parent=0 // pred_check
    _
  $region3: #{squeeze.0} parent=0 // pred_check_branch
    %3 = sbr.rel (0) target = $region5
  $region4: #{squeeze.0} parent=0 // pred_region
    _
  $region5: #{squeeze.0} parent=0 // pred_fallthru
    _
  %v4 = vld [vmem:[%s0] ss:$0 sm:$0xff]
  %6 = vbcast.lane.b32.xlu0 %v4, 256
  %v7 = vpop.permute.xlu0 %6
  %8 = vst [vmem:[%s1] sm:$0xff] %v7
  %s9 = scalar_lea.vmem %s0, 1
  %v10 = vld [vmem:[%s9] ss:$0 sm:$0xff]
  %12 = vbcast.lane.b32.xlu0 %v10, 256
  %v13 = vpop.permute.xlu0 %12
  %s14 = scalar_lea.vmem %s1, 16
  %15 = vst [vmem:[%s14] sm:$0xff] %v13
  %s16 = scalar_lea.vmem %s0, 2
  %v17 = vld [vmem:[%s16] ss:$0 sm:$0xff]
  %19 = vbcast.lane.b32.xlu0 %v17, 256
  %v20 = vpop.permute.xlu0 %19
  %s21 = scalar_lea.vmem %s1, 32
  %22 = vst [vmem:[%s21] sm:$0xff] %v20
  %s23 = scalar_lea.vmem %s0, 3
  %v24 = vld [vmem:[%s23] ss:$0 sm:$0xff]
  %26 = vbcast.lane.b32.xlu0 %v24, 256
  %v27 = vpop.permute.xlu0 %26
  %s28 = scalar_lea.vmem %s1, 48
  %29 = vst [vmem:[%s28] sm:$0xff] %v27
  %s30 = scalar_lea.vmem %s0, 4
  %v31 = vld [vmem:[%s30] ss:$0 sm:$0xff]
  %33 = vbcast.lane.b32.xlu0 %v31, 256
  %v34 = vpop.permute.xlu0 %33
  %s35 = scalar_lea.vmem %s1, 64
  %36 = vst [vmem:[%s35] sm:$0xff] %v34
  %s37 = scalar_lea.vmem %s0, 5
  %v38 = vld [vmem:[%s37] ss:$0 sm:$0xff]
  %40 = vbcast.lane.b32.xlu0 %v38, 256
  %v41 = vpop.permute.xlu0 %40
  %s42 = scalar_lea.vmem %s1, 80
  %43 = vst [vmem:[%s42] sm:$0xff] %v41
  %s44 = scalar_lea.vmem %s0, 6
  %v45 = vld [vmem:[%s44] ss:$0 sm:$0xff]
  %47 = vbcast.lane.b32.xlu0 %v45, 256
  %v48 = vpop.permute.xlu0 %47
  %s49 = scalar_lea.vmem %s1, 96
  %50 = vst [vmem:[%s49] sm:$0xff] %v48
  %s51 = scalar_lea.vmem %s0, 7
  %v52 = vld [vmem:[%s51] ss:$0 sm:$0xff]
  %54 = vbcast.lane.b32.xlu0 %v52, 256
  %v55 = vpop.permute.xlu0 %54
  %s56 = scalar_lea.vmem %s1, 112
  %57 = vst [vmem:[%s56] sm:$0xff] %v55
  %s58 = scalar_lea.vmem %s0, 8
  %v59 = vld [vmem:[%s58] ss:$0 sm:$0xff]
  %61 = vbcast.lane.b32.xlu0 %v59, 256
  %v62 = vpop.permute.xlu0 %61
  %s63 = scalar_lea.vmem %s1, 128
  %64 = vst [vmem:[%s63] sm:$0xff] %v62
  %s65 = scalar_lea.vmem %s0, 8
  %s66 = scalar_lea.vmem %s65, 1
  %v67 = vld [vmem:[%s66] ss:$0 sm:$0xff]
  %69 = vbcast.lane.b32.xlu0 %v67, 256
  %v70 = vpop.permute.xlu0 %69
  %s71 = scalar_lea.vmem %s1, 144
  %72 = vst [vmem:[%s71] sm:$0xff] %v70
  %v73 = vld [vmem:[%s0] ss:$0 sm:$0xff]
  %s75 = sor.u32 256, 8
  %76 = vbcast.lane.b32.xlu0 %v73, %s75
  %v77 = vpop.permute.xlu0 %76
  %s78 = scalar_lea.vmem %s1, 8
  %79 = vst [vmem:[%s78] sm:$0xff] %v77
  %s80 = scalar_lea.vmem %s0, 1
  %v81 = vld [vmem:[%s80] ss:$0 sm:$0xff]
  %s83 = sor.u32 256, 8
  %84 = vbcast.lane.b32.xlu0 %v81, %s83
  %v85 = vpop.permute.xlu0 %84
  %s86 = scalar_lea.vmem %s1, 24
  %87 = vst [vmem:[%s86] sm:$0xff] %v85
  %s88 = scalar_lea.vmem %s0, 2
  %v89 = vld [vmem:[%s88] ss:$0 sm:$0xff]
  %s91 = sor.u32 256, 8
  %92 = vbcast.lane.b32.xlu0 %v89, %s91
  %v93 = vpop.permute.xlu0 %92
  %s94 = scalar_lea.vmem %s1, 40
  %95 = vst [vmem:[%s94] sm:$0xff] %v93
  %s96 = scalar_lea.vmem %s0, 3
  %v97 = vld [vmem:[%s96] ss:$0 sm:$0xff]
  %s99 = sor.u32 256, 8
  %100 = vbcast.lane.b32.xlu0 %v97, %s99
  %v101 = vpop.permute.xlu0 %100
  %s102 = scalar_lea.vmem %s1, 56
  %103 = vst [vmem:[%s102] sm:$0xff] %v101
  %s104 = scalar_lea.vmem %s0, 4
  %v105 = vld [vmem:[%s104] ss:$0 sm:$0xff]
  %s107 = sor.u32 256, 8
  %108 = vbcast.lane.b32.xlu0 %v105, %s107
  %v109 = vpop.permute.xlu0 %108
  %s110 = scalar_lea.vmem %s1, 72
  %111 = vst [vmem:[%s110] sm:$0xff] %v109
  %s112 = scalar_lea.vmem %s0, 5
  %v113 = vld [vmem:[%s112] ss:$0 sm:$0xff]
  %s115 = sor.u32 256, 8
  %116 = vbcast.lane.b32.xlu0 %v113, %s115
  %v117 = vpop.permute.xlu0 %116
  %s118 = scalar_lea.vmem %s1, 88
  %119 = vst [vmem:[%s118] sm:$0xff] %v117
  %s120 = scalar_lea.vmem %s0, 6
  %v121 = vld [vmem:[%s120] ss:$0 sm:$0xff]
  %s123 = sor.u32 256, 8
  %124 = vbcast.lane.b32.xlu0 %v121, %s123
  %v125 = vpop.permute.xlu0 %124
  %s126 = scalar_lea.vmem %s1, 104
  %127 = vst [vmem:[%s126] sm:$0xff] %v125
  %s128 = scalar_lea.vmem %s0, 7
  %v129 = vld [vmem:[%s128] ss:$0 sm:$0xff]
  %s131 = sor.u32 256, 8
  %132 = vbcast.lane.b32.xlu0 %v129, %s131
  %v133 = vpop.permute.xlu0 %132
  %s134 = scalar_lea.vmem %s1, 120
  %135 = vst [vmem:[%s134] sm:$0xff] %v133
  %s136 = scalar_lea.vmem %s0, 8
  %v137 = vld [vmem:[%s136] ss:$0 sm:$0xff]
  %s139 = sor.u32 256, 8
  %140 = vbcast.lane.b32.xlu0 %v137, %s139
  %v141 = vpop.permute.xlu0 %140
  %s142 = scalar_lea.vmem %s1, 136
  %143 = vst [vmem:[%s142] sm:$0xff] %v141
  %s144 = scalar_lea.vmem %s0, 8
  %s145 = scalar_lea.vmem %s144, 1
  %v146 = vld [vmem:[%s145] ss:$0 sm:$0xff]
  %s148 = sor.u32 256, 8
  %149 = vbcast.lane.b32.xlu0 %v146, %s148
  %v150 = vpop.permute.xlu0 %149
  %s151 = scalar_lea.vmem %s1, 152
  %152 = vst [vmem:[%s151] sm:$0xff] %v150

// kernel: preact_block_forward.3
$region0: #{preact_block_forward.3}
  #allocation0 [shape = 'u32[]', space=smem, size = 0x4, offset = 0x4, fixed_abs, tag = 'smem constant byte address 0x4 - core index']
  #allocation1 [shape = 'u32[144,128]{1,0:T(1,128)}', space=vmem, size = 0x12000, scoped, tag = 'internal scratch']
  %s0 = inlined_call_operand.vmem [shape: f32[2,10,16,128], index: 0, kind: input, shape index: {}]
  %s1 = inlined_call_operand.vmem [shape: f32[10,16,1], index: 1, kind: input, shape index: {}]
  %s2 = inlined_call_operand.vmem [shape: f32[1,128], index: 2, kind: input, shape index: {}]
  %s3 = inlined_call_operand.vmem [shape: f32[1,128], index: 3, kind: input, shape index: {}]
  %s4 = inlined_call_operand.vmem [shape: f32[9,128,128], index: 4, kind: input, shape index: {}]
  %s5 = inlined_call_operand.vmem [shape: f32[2,64,128], index: 5, kind: input, shape index: {}]
  %s6 = inlined_call_operand.vmem [shape: f32[2,64,128], index: 6, kind: output, shape index: {}]
  %s7 = sld [smem:[#allocation0]]
  $region34: #{preact_block_forward.3} parent=0
    _
  %s9 = ssub.s32 1, %s7
  %s10 = scalar_select 0, %s9, %s7
  // Predicated region
  $region2: #{preact_block_forward.3} parent=0 // pred_check
    _
  $region3: #{preact_block_forward.3} parent=0 // pred_check_branch
    %12 = sbr.rel (0) target = $region5
  $region4: #{preact_block_forward.3} parent=0 // pred_region
    _
  $region5: #{preact_block_forward.3} parent=0 // pred_fallthru
    _
  // Predicated region
  $region6: #{preact_block_forward.3} parent=0 // pred_check
    _
  $region7: #{preact_block_forward.3} parent=0 // pred_check_branch
    %14 = sbr.rel (0) target = $region9
  $region8: #{preact_block_forward.3} parent=0 // pred_region
    _
  $region9: #{preact_block_forward.3} parent=0 // pred_fallthru
    _
  // Predicated region
  $region10: #{preact_block_forward.3} parent=0 // pred_check
    _
  $region11: #{preact_block_forward.3} parent=0 // pred_check_branch
    %16 = sbr.rel (0) target = $region13
  $region12: #{preact_block_forward.3} parent=0 // pred_region
    _
  $region13: #{preact_block_forward.3} parent=0 // pred_fallthru
    _
  // Predicated region
  $region14: #{preact_block_forward.3} parent=0 // pred_check
    _
  $region15: #{preact_block_forward.3} parent=0 // pred_check_branch
    %18 = sbr.rel (0) target = $region17
  $region16: #{preact_block_forward.3} parent=0 // pred_region
    _
  $region17: #{preact_block_forward.3} parent=0 // pred_fallthru
    _
  // Predicated region
  $region18: #{preact_block_forward.3} parent=0 // pred_check
    _
  $region19: #{preact_block_forward.3} parent=0 // pred_check_branch
    %20 = sbr.rel (0) target = $region21
  $region20: #{preact_block_forward.3} parent=0 // pred_region
    _
  $region21: #{preact_block_forward.3} parent=0 // pred_fallthru
    _
  // Predicated region
  $region22: #{preact_block_forward.3} parent=0 // pred_check
    _
  $region23: #{preact_block_forward.3} parent=0 // pred_check_branch
    %22 = sbr.rel (0) target = $region25
  $region24: #{preact_block_forward.3} parent=0 // pred_region
    _
  $region25: #{preact_block_forward.3} parent=0 // pred_fallthru
    _
  %v23 = vld [vmem:[%s0] sm:$0xff]
  %v24 = vld [vmem:[%s0 + $0x8] sm:$0xff]
  %v25 = vld [vmem:[%s0 + $0x10] sm:$0xff]
  %v26 = vld [vmem:[%s0 + $0x18] sm:$0xff]
  %v27 = vld [vmem:[%s0 + $0x20] sm:$0xff]
  %v28 = vld [vmem:[%s0 + $0x28] sm:$0xff]
  %v29 = vld [vmem:[%s0 + $0x30] sm:$0xff]
  %v30 = vld [vmem:[%s0 + $0x38] sm:$0xff]
  %v31 = vld [vmem:[%s0 + $0x40] sm:$0xff]
  %v32 = vld [vmem:[%s0 + $0x48] sm:$0xff]
  %v33 = vld [vmem:[%s0 + $0x50] sm:$0xff]
  %v34 = vld [vmem:[%s0 + $0x58] sm:$0xff]
  %v35 = vld [vmem:[%s0 + $0x60] sm:$0xff]
  %v36 = vld [vmem:[%s0 + $0x68] sm:$0xff]
  %v37 = vld [vmem:[%s0 + $0x70] sm:$0xff]
  %v38 = vld [vmem:[%s0 + $0x78] sm:$0xff]
  %v39 = vld [vmem:[%s0 + $0x80] sm:$0xff]
  %v40 = vld [vmem:[%s0 + $0x88] sm:$0xff]
  %v41 = vld [vmem:[%s0 + $0x90] sm:$0xff]
  %v42 = vld [vmem:[%s0 + $0x98] sm:$0xff]
  %v43 = vld [vmem:[%s0 + $0xa0] sm:$0xff]
  %v44 = vld [vmem:[%s0 + $0xa8] sm:$0xff]
  %v45 = vld [vmem:[%s0 + $0xb0] sm:$0xff]
  %v46 = vld [vmem:[%s0 + $0xb8] sm:$0xff]
  %v47 = vld [vmem:[%s0 + $0xc0] sm:$0xff]
  %v48 = vld [vmem:[%s0 + $0xc8] sm:$0xff]
  %v49 = vld [vmem:[%s0 + $0xd0] sm:$0xff]
  %v50 = vld [vmem:[%s0 + $0xd8] sm:$0xff]
  %v51 = vld [vmem:[%s0 + $0xe0] sm:$0xff]
  %v52 = vld [vmem:[%s0 + $0xe8] sm:$0xff]
  %v53 = vld [vmem:[%s0 + $0xf0] sm:$0xff]
  %v54 = vld [vmem:[%s0 + $0xf8] sm:$0xff]
  %v55 = vld [vmem:[%s0 + $0x100] sm:$0xff]
  %v56 = vld [vmem:[%s0 + $0x108] sm:$0xff]
  %v57 = vld [vmem:[%s0 + $0x110] sm:$0xff]
  %v58 = vld [vmem:[%s0 + $0x118] sm:$0xff]
  %v59 = vld [vmem:[%s0 + $0x120] sm:$0xff]
  %v60 = vld [vmem:[%s0 + $0x128] sm:$0xff]
  %v61 = vld [vmem:[%s0 + $0x130] sm:$0xff]
  %v62 = vld [vmem:[%s0 + $0x138] sm:$0xff]
  %v63 = vld [vmem:[%s2] sm:$0x1]
  %v65 = vlaneseq
  %v66 = vshrl.u32 %v65, 7
  %v67 = vsub.s32 0, %v66
  %v68 = vrot.slane %v63, %v67
  %v70 = vmul.f32 %v23, %v68
  %v71 = vmul.f32 %v24, %v68
  %v72 = vmul.f32 %v25, %v68
  %v73 = vmul.f32 %v26, %v68
  %v74 = vmul.f32 %v27, %v68
  %v75 = vmul.f32 %v28, %v68
  %v76 = vmul.f32 %v29, %v68
  %v77 = vmul.f32 %v30, %v68
  %v78 = vmul.f32 %v31, %v68
  %v79 = vmul.f32 %v32, %v68
  %v80 = vmul.f32 %v33, %v68
  %v81 = vmul.f32 %v34, %v68
  %v82 = vmul.f32 %v35, %v68
  %v83 = vmul.f32 %v36, %v68
  %v84 = vmul.f32 %v37, %v68
  %v85 = vmul.f32 %v38, %v68
  %v86 = vmul.f32 %v39, %v68
  %v87 = vmul.f32 %v40, %v68
  %v88 = vmul.f32 %v41, %v68
  %v89 = vmul.f32 %v42, %v68
  %v90 = vmul.f32 %v43, %v68
  %v91 = vmul.f32 %v44, %v68
  %v92 = vmul.f32 %v45, %v68
  %v93 = vmul.f32 %v46, %v68
  %v94 = vmul.f32 %v47, %v68
  %v95 = vmul.f32 %v48, %v68
  %v96 = vmul.f32 %v49, %v68
  %v97 = vmul.f32 %v50, %v68
  %v98 = vmul.f32 %v51, %v68
  %v99 = vmul.f32 %v52, %v68
  %v100 = vmul.f32 %v53, %v68
  %v101 = vmul.f32 %v54, %v68
  %v102 = vmul.f32 %v55, %v68
  %v103 = vmul.f32 %v56, %v68
  %v104 = vmul.f32 %v57, %v68
  %v105 = vmul.f32 %v58, %v68
  %v106 = vmul.f32 %v59, %v68
  %v107 = vmul.f32 %v60, %v68
  %v108 = vmul.f32 %v61, %v68
  %v109 = vmul.f32 %v62, %v68
  %v110 = vld [vmem:[%s3] sm:$0x1]
  %v112 = vlaneseq
  %v113 = vshrl.u32 %v112, 7
  %v114 = vsub.s32 0, %v113
  %v115 = vrot.slane %v110, %v114
  %v117 = vadd.f32 %v70, %v115
  %v118 = vadd.f32 %v71, %v115
  %v119 = vadd.f32 %v72, %v115
  %v120 = vadd.f32 %v73, %v115
  %v121 = vadd.f32 %v74, %v115
  %v122 = vadd.f32 %v75, %v115
  %v123 = vadd.f32 %v76, %v115
  %v124 = vadd.f32 %v77, %v115
  %v125 = vadd.f32 %v78, %v115
  %v126 = vadd.f32 %v79, %v115
  %v127 = vadd.f32 %v80, %v115
  %v128 = vadd.f32 %v81, %v115
  %v129 = vadd.f32 %v82, %v115
  %v130 = vadd.f32 %v83, %v115
  %v131 = vadd.f32 %v84, %v115
  %v132 = vadd.f32 %v85, %v115
  %v133 = vadd.f32 %v86, %v115
  %v134 = vadd.f32 %v87, %v115
  %v135 = vadd.f32 %v88, %v115
  %v136 = vadd.f32 %v89, %v115
  %v137 = vadd.f32 %v90, %v115
  %v138 = vadd.f32 %v91, %v115
  %v139 = vadd.f32 %v92, %v115
  %v140 = vadd.f32 %v93, %v115
  %v141 = vadd.f32 %v94, %v115
  %v142 = vadd.f32 %v95, %v115
  %v143 = vadd.f32 %v96, %v115
  %v144 = vadd.f32 %v97, %v115
  %v145 = vadd.f32 %v98, %v115
  %v146 = vadd.f32 %v99, %v115
  %v147 = vadd.f32 %v100, %v115
  %v148 = vadd.f32 %v101, %v115
  %v149 = vadd.f32 %v102, %v115
  %v150 = vadd.f32 %v103, %v115
  %v151 = vadd.f32 %v104, %v115
  %v152 = vadd.f32 %v105, %v115
  %v153 = vadd.f32 %v106, %v115
  %v154 = vadd.f32 %v107, %v115
  %v155 = vadd.f32 %v108, %v115
  %v156 = vadd.f32 %v109, %v115
  %v157 = vmax.f32 %v117, 0.0
  %v158 = vmax.f32 %v118, 0.0
  %v159 = vmax.f32 %v119, 0.0
  %v160 = vmax.f32 %v120, 0.0
  %v161 = vmax.f32 %v121, 0.0
  %v162 = vmax.f32 %v122, 0.0
  %v163 = vmax.f32 %v123, 0.0
  %v164 = vmax.f32 %v124, 0.0
  %v165 = vmax.f32 %v125, 0.0
  %v166 = vmax.f32 %v126, 0.0
  %v167 = vmax.f32 %v127, 0.0
  %v168 = vmax.f32 %v128, 0.0
  %v169 = vmax.f32 %v129, 0.0
  %v170 = vmax.f32 %v130, 0.0
  %v171 = vmax.f32 %v131, 0.0
  %v172 = vmax.f32 %v132, 0.0
  %v173 = vmax.f32 %v133, 0.0
  %v174 = vmax.f32 %v134, 0.0
  %v175 = vmax.f32 %v135, 0.0
  %v176 = vmax.f32 %v136, 0.0
  %v177 = vmax.f32 %v137, 0.0
  %v178 = vmax.f32 %v138, 0.0
  %v179 = vmax.f32 %v139, 0.0
  %v180 = vmax.f32 %v140, 0.0
  %v181 = vmax.f32 %v141, 0.0
  %v182 = vmax.f32 %v142, 0.0
  %v183 = vmax.f32 %v143, 0.0
  %v184 = vmax.f32 %v144, 0.0
  %v185 = vmax.f32 %v145, 0.0
  %v186 = vmax.f32 %v146, 0.0
  %v187 = vmax.f32 %v147, 0.0
  %v188 = vmax.f32 %v148, 0.0
  %v189 = vmax.f32 %v149, 0.0
  %v190 = vmax.f32 %v150, 0.0
  %v191 = vmax.f32 %v151, 0.0
  %v192 = vmax.f32 %v152, 0.0
  %v193 = vmax.f32 %v153, 0.0
  %v194 = vmax.f32 %v154, 0.0
  %v195 = vmax.f32 %v155, 0.0
  %v196 = vmax.f32 %v156, 0.0
  %v197 = vld [vmem:[%s1] sm:$0xff]
  %v198 = vld [vmem:[%s1 + $0x8] sm:$0xff]
  %v199 = vld [vmem:[%s1 + $0x10] sm:$0xff]
  %v200 = vld [vmem:[%s1 + $0x18] sm:$0xff]
  %v201 = vld [vmem:[%s1 + $0x20] sm:$0xff]
  %v202 = vld [vmem:[%s1 + $0x28] sm:$0xff]
  %v203 = vld [vmem:[%s1 + $0x30] sm:$0xff]
  %v204 = vld [vmem:[%s1 + $0x38] sm:$0xff]
  %v205 = vld [vmem:[%s1 + $0x40] sm:$0xff]
  %v206 = vld [vmem:[%s1 + $0x48] sm:$0xff]
  %v207 = vld [vmem:[%s1 + $0x50] sm:$0xff]
  %v208 = vld [vmem:[%s1 + $0x58] sm:$0xff]
  %v209 = vld [vmem:[%s1 + $0x60] sm:$0xff]
  %v210 = vld [vmem:[%s1 + $0x68] sm:$0xff]
  %v211 = vld [vmem:[%s1 + $0x70] sm:$0xff]
  %v212 = vld [vmem:[%s1 + $0x78] sm:$0xff]
  %v213 = vld [vmem:[%s1 + $0x80] sm:$0xff]
  %v214 = vld [vmem:[%s1 + $0x88] sm:$0xff]
  %v215 = vld [vmem:[%s1 + $0x90] sm:$0xff]
  %v216 = vld [vmem:[%s1 + $0x98] sm:$0xff]
  %218 = vset.pattern.permute.xlu0 0
  %219 = vperm.xlu0 %218, %v197
  %v220 = vpop.permute.xlu0 %219
  %223 = vset.pattern.permute.xlu0 0
  %224 = vperm.xlu0 %223, %v198
  %v225 = vpop.permute.xlu0 %224
  %228 = vset.pattern.permute.xlu0 0
  %229 = vperm.xlu0 %228, %v199
  %v230 = vpop.permute.xlu0 %229
  %233 = vset.pattern.permute.xlu0 0
  %234 = vperm.xlu0 %233, %v200
  %v235 = vpop.permute.xlu0 %234
  %238 = vset.pattern.permute.xlu0 0
  %239 = vperm.xlu0 %238, %v201
  %v240 = vpop.permute.xlu0 %239
  %243 = vset.pattern.permute.xlu0 0
  %244 = vperm.xlu0 %243, %v202
  %v245 = vpop.permute.xlu0 %244
  %248 = vset.pattern.permute.xlu0 0
  %249 = vperm.xlu0 %248, %v203
  %v250 = vpop.permute.xlu0 %249
  %253 = vset.pattern.permute.xlu0 0
  %254 = vperm.xlu0 %253, %v204
  %v255 = vpop.permute.xlu0 %254
  %258 = vset.pattern.permute.xlu0 0
  %259 = vperm.xlu0 %258, %v205
  %v260 = vpop.permute.xlu0 %259
  %263 = vset.pattern.permute.xlu0 0
  %264 = vperm.xlu0 %263, %v206
  %v265 = vpop.permute.xlu0 %264
  %268 = vset.pattern.permute.xlu0 0
  %269 = vperm.xlu0 %268, %v207
  %v270 = vpop.permute.xlu0 %269
  %273 = vset.pattern.permute.xlu0 0
  %274 = vperm.xlu0 %273, %v208
  %v275 = vpop.permute.xlu0 %274
  %278 = vset.pattern.permute.xlu0 0
  %279 = vperm.xlu0 %278, %v209
  %v280 = vpop.permute.xlu0 %279
  %283 = vset.pattern.permute.xlu0 0
  %284 = vperm.xlu0 %283, %v210
  %v285 = vpop.permute.xlu0 %284
  %288 = vset.pattern.permute.xlu0 0
  %289 = vperm.xlu0 %288, %v211
  %v290 = vpop.permute.xlu0 %289
  %293 = vset.pattern.permute.xlu0 0
  %294 = vperm.xlu0 %293, %v212
  %v295 = vpop.permute.xlu0 %294
  %298 = vset.pattern.permute.xlu0 0
  %299 = vperm.xlu0 %298, %v213
  %v300 = vpop.permute.xlu0 %299
  %303 = vset.pattern.permute.xlu0 0
  %304 = vperm.xlu0 %303, %v214
  %v305 = vpop.permute.xlu0 %304
  %308 = vset.pattern.permute.xlu0 0
  %309 = vperm.xlu0 %308, %v215
  %v310 = vpop.permute.xlu0 %309
  %313 = vset.pattern.permute.xlu0 0
  %314 = vperm.xlu0 %313, %v216
  %v315 = vpop.permute.xlu0 %314
  %v317 = vmul.f32 %v157, %v220
  %v318 = vmul.f32 %v158, %v225
  %v319 = vmul.f32 %v159, %v230
  %v320 = vmul.f32 %v160, %v235
  %v321 = vmul.f32 %v161, %v240
  %v322 = vmul.f32 %v162, %v245
  %v323 = vmul.f32 %v163, %v250
  %v324 = vmul.f32 %v164, %v255
  %v325 = vmul.f32 %v165, %v260
  %v326 = vmul.f32 %v166, %v265
  %v327 = vmul.f32 %v167, %v270
  %v328 = vmul.f32 %v168, %v275
  %v329 = vmul.f32 %v169, %v280
  %v330 = vmul.f32 %v170, %v285
  %v331 = vmul.f32 %v171, %v290
  %v332 = vmul.f32 %v172, %v295
  %v333 = vmul.f32 %v173, %v300
  %v334 = vmul.f32 %v174, %v305
  %v335 = vmul.f32 %v175, %v310
  %v336 = vmul.f32 %v176, %v315
  %v337 = vmul.f32 %v177, %v220
  %v338 = vmul.f32 %v178, %v225
  %v339 = vmul.f32 %v179, %v230
  %v340 = vmul.f32 %v180, %v235
  %v341 = vmul.f32 %v181, %v240
  %v342 = vmul.f32 %v182, %v245
  %v343 = vmul.f32 %v183, %v250
  %v344 = vmul.f32 %v184, %v255
  %v345 = vmul.f32 %v185, %v260
  %v346 = vmul.f32 %v186, %v265
  %v347 = vmul.f32 %v187, %v270
  %v348 = vmul.f32 %v188, %v275
  %v349 = vmul.f32 %v189, %v280
  %v350 = vmul.f32 %v190, %v285
  %v351 = vmul.f32 %v191, %v290
  %v352 = vmul.f32 %v192, %v295
  %v353 = vmul.f32 %v193, %v300
  %v354 = vmul.f32 %v194, %v305
  %v355 = vmul.f32 %v195, %v310
  %v356 = vmul.f32 %v196, %v315
  %v357 = vld [vmem:[%s4] sm:$0xff]
  %v358 = vld [vmem:[%s4 + $0x8] sm:$0xff]
  %v359 = vld [vmem:[%s4 + $0x10] sm:$0xff]
  %v360 = vld [vmem:[%s4 + $0x18] sm:$0xff]
  %v361 = vld [vmem:[%s4 + $0x20] sm:$0xff]
  %v362 = vld [vmem:[%s4 + $0x28] sm:$0xff]
  %v363 = vld [vmem:[%s4 + $0x30] sm:$0xff]
  %v364 = vld [vmem:[%s4 + $0x38] sm:$0xff]
  %v365 = vld [vmem:[%s4 + $0x40] sm:$0xff]
  %v366 = vld [vmem:[%s4 + $0x48] sm:$0xff]
  %v367 = vld [vmem:[%s4 + $0x50] sm:$0xff]
  %v368 = vld [vmem:[%s4 + $0x58] sm:$0xff]
  %v369 = vld [vmem:[%s4 + $0x60] sm:$0xff]
  %v370 = vld [vmem:[%s4 + $0x68] sm:$0xff]
  %v371 = vld [vmem:[%s4 + $0x70] sm:$0xff]
  %v372 = vld [vmem:[%s4 + $0x78] sm:$0xff]
  %vm405 = vcmask 1046528
  %v406 = vrot.slane %v317, 1
  %v407 = vrot.slane %v318, 1
  %v408 = vsel %vm405, %v406, %v407
  %v409 = vrot.slane %v319, 1
  %v410 = vrot.slane %v320, 1
  %v411 = vsel %vm405, %v409, %v410
  %v412 = vrot.slane %v321, 1
  %v413 = vrot.slane %v322, 1
  %v414 = vsel %vm405, %v412, %v413
  %v415 = vrot.slane %v323, 1
  %v416 = vrot.slane %v324, 1
  %v417 = vsel %vm405, %v415, %v416
  %v418 = vrot.slane %v325, 1
  %v419 = vrot.slane %v326, 1
  %v420 = vsel %vm405, %v418, %v419
  %v421 = vrot.slane %v327, 1
  %v422 = vrot.slane %v328, 1
  %v423 = vsel %vm405, %v421, %v422
  %v424 = vrot.slane %v329, 1
  %v425 = vrot.slane %v330, 1
  %v426 = vsel %vm405, %v424, %v425
  %v427 = vrot.slane %v331, 1
  %v428 = vrot.slane %v332, 1
  %v429 = vsel %vm405, %v427, %v428
  %v430 = vrot.slane %v337, 1
  %v431 = vrot.slane %v338, 1
  %v432 = vsel %vm405, %v430, %v431
  %v433 = vrot.slane %v339, 1
  %v434 = vrot.slane %v340, 1
  %v435 = vsel %vm405, %v433, %v434
  %v436 = vrot.slane %v341, 1
  %v437 = vrot.slane %v342, 1
  %v438 = vsel %vm405, %v436, %v437
  %v439 = vrot.slane %v343, 1
  %v440 = vrot.slane %v344, 1
  %v441 = vsel %vm405, %v439, %v440
  %v442 = vrot.slane %v345, 1
  %v443 = vrot.slane %v346, 1
  %v444 = vsel %vm405, %v442, %v443
  %v445 = vrot.slane %v347, 1
  %v446 = vrot.slane %v348, 1
  %v447 = vsel %vm405, %v445, %v446
  %v448 = vrot.slane %v349, 1
  %v449 = vrot.slane %v350, 1
  %v450 = vsel %vm405, %v448, %v449
  %v451 = vrot.slane %v351, 1
  %v452 = vrot.slane %v352, 1
  %v453 = vsel %vm405, %v451, %v452
  %s470 = scalar_lea.vmem %s4, 128
  %v471 = vld [vmem:[%s470] sm:$0xff]
  %v472 = vld [vmem:[%s470 + $0x8] sm:$0xff]
  %v473 = vld [vmem:[%s470 + $0x10] sm:$0xff]
  %v474 = vld [vmem:[%s470 + $0x18] sm:$0xff]
  %v475 = vld [vmem:[%s470 + $0x20] sm:$0xff]
  %v476 = vld [vmem:[%s470 + $0x28] sm:$0xff]
  %v477 = vld [vmem:[%s470 + $0x30] sm:$0xff]
  %v478 = vld [vmem:[%s470 + $0x38] sm:$0xff]
  %v479 = vld [vmem:[%s470 + $0x40] sm:$0xff]
  %v480 = vld [vmem:[%s470 + $0x48] sm:$0xff]
  %v481 = vld [vmem:[%s470 + $0x50] sm:$0xff]
  %v482 = vld [vmem:[%s470 + $0x58] sm:$0xff]
  %v483 = vld [vmem:[%s470 + $0x60] sm:$0xff]
  %v484 = vld [vmem:[%s470 + $0x68] sm:$0xff]
  %v485 = vld [vmem:[%s470 + $0x70] sm:$0xff]
  %v486 = vld [vmem:[%s470 + $0x78] sm:$0xff]
  %487 = vmatprep.subr.mxu0 0.0
  %488 = vmatpush1.msra.mxu0 %v486
  %489 = vmatprep.subr.mxu0 0.0
  %490 = vmatpush1.msra.mxu0 %v485
  %491 = vmatprep.subr.mxu0 0.0
  %492 = vmatpush1.msra.mxu0 %v484
  %493 = vmatprep.subr.mxu0 0.0
  %494 = vmatpush1.msra.mxu0 %v483
  %495 = vmatprep.subr.mxu0 0.0
  %496 = vmatpush1.msra.mxu0 %v482
  %497 = vmatprep.subr.mxu0 0.0
  %498 = vmatpush1.msra.mxu0 %v481
  %499 = vmatprep.subr.mxu0 0.0
  %500 = vmatpush1.msra.mxu0 %v480
  %501 = vmatprep.subr.mxu0 0.0
  %502 = vmatpush1.msra.mxu0 %v479
  %503 = vmatprep.subr.mxu0 0.0
  %504 = vmatpush1.msra.mxu0 %v478
  %505 = vmatprep.subr.mxu0 0.0
  %506 = vmatpush1.msra.mxu0 %v477
  %507 = vmatprep.subr.mxu0 0.0
  %508 = vmatpush1.msra.mxu0 %v476
  %509 = vmatprep.subr.mxu0 0.0
  %510 = vmatpush1.msra.mxu0 %v475
  %511 = vmatprep.subr.mxu0 0.0
  %512 = vmatpush1.msra.mxu0 %v474
  %513 = vmatprep.subr.mxu0 0.0
  %514 = vmatpush1.msra.mxu0 %v473
  %515 = vmatprep.subr.mxu0 0.0
  %516 = vmatpush1.msra.mxu0 %v472
  %517 = vmatprep.subr.mxu0 0.0
  %518 = vmatpush1.msra.mxu0 %v471
  %519 = vmatprep.subr.mxu0 0.0
  %520 = vmatpush2.msra.mxu0 0.0
  %521 = vmatprep.subr.mxu0 0.0
  %522 = vmatpush2.msra.mxu0 0.0
  %523 = vmatprep.subr.mxu0 0.0
  %524 = vmatpush2.msra.mxu0 0.0
  %525 = vmatprep.subr.mxu0 0.0
  %526 = vmatpush2.msra.mxu0 0.0
  %527 = vmatprep.subr.mxu0 0.0
  %528 = vmatpush2.msra.mxu0 0.0
  %529 = vmatprep.subr.mxu0 0.0
  %530 = vmatpush2.msra.mxu0 0.0
  %531 = vmatprep.subr.mxu0 0.0
  %532 = vmatpush2.msra.mxu0 0.0
  %533 = vmatprep.subr.mxu0 0.0
  %534 = vmatpush2.msra.mxu0 0.0
  %535 = vmatprep.subr.mxu0 0.0
  %536 = vmatpush2.msra.mxu0 0.0
  %537 = vmatprep.subr.mxu0 0.0
  %538 = vmatpush2.msra.mxu0 0.0
  %539 = vmatprep.subr.mxu0 0.0
  %540 = vmatpush2.msra.mxu0 0.0
  %541 = vmatprep.subr.mxu0 0.0
  %542 = vmatpush2.msra.mxu0 0.0
  %543 = vmatprep.subr.mxu0 0.0
  %544 = vmatpush2.msra.mxu0 0.0
  %545 = vmatprep.subr.mxu0 0.0
  %546 = vmatpush2.msra.mxu0 0.0
  %547 = vmatprep.subr.mxu0 0.0
  %548 = vmatpush2.msra.mxu0 0.0
  %549 = vmatprep.subr.mxu0 0.0
  %550 = vmatpush2.msra.mxu0 0.0
  %551 = vmatprep.mubr.f32.mxu0 0.0
  %552 = vmatmul.mubr.f32.gmra.mxu0 %v408
  %v553 = vpop.f32.mrf.mxu0
  %v554 = vadd.f32 0.0, %v553
  %v555 = vpop.f32.mrf.mxu0
  %556 = vmatprep.mubr.f32.mxu0 0.0
  %557 = vmatmul.mubr.f32.gmra.mxu0 %v411
  %v558 = vpop.f32.mrf.mxu0
  %v559 = vadd.f32 0.0, %v558
  %v560 = vpop.f32.mrf.mxu0
  %561 = vmatprep.mubr.f32.mxu0 0.0
  %562 = vmatmul.mubr.f32.gmra.mxu0 %v414
  %v563 = vpop.f32.mrf.mxu0
  %v564 = vadd.f32 0.0, %v563
  %v565 = vpop.f32.mrf.mxu0
  %566 = vmatprep.mubr.f32.mxu0 0.0
  %567 = vmatmul.mubr.f32.gmra.mxu0 %v417
  %v568 = vpop.f32.mrf.mxu0
  %v569 = vadd.f32 0.0, %v568
  %v570 = vpop.f32.mrf.mxu0
  %571 = vmatprep.mubr.f32.mxu0 0.0
  %572 = vmatmul.mubr.f32.gmra.mxu0 %v420
  %v573 = vpop.f32.mrf.mxu0
  %v574 = vadd.f32 0.0, %v573
  %v575 = vpop.f32.mrf.mxu0
  %576 = vmatprep.mubr.f32.mxu0 0.0
  %577 = vmatmul.mubr.f32.gmra.mxu0 %v423
  %v578 = vpop.f32.mrf.mxu0
  %v579 = vadd.f32 0.0, %v578
  %v580 = vpop.f32.mrf.mxu0
  %581 = vmatprep.mubr.f32.mxu0 0.0
  %582 = vmatmul.mubr.f32.gmra.mxu0 %v426
  %v583 = vpop.f32.mrf.mxu0
  %v584 = vadd.f32 0.0, %v583
  %v585 = vpop.f32.mrf.mxu0
  %586 = vmatprep.mubr.f32.mxu0 0.0
  %587 = vmatmul.mubr.f32.gmra.mxu0 %v429
  %v588 = vpop.f32.mrf.mxu0
  %v589 = vadd.f32 0.0, %v588
  %v590 = vpop.f32.mrf.mxu0
  %591 = vmatprep.mubr.f32.mxu0 0.0
  %592 = vmatmul.mubr.f32.gmra.mxu0 %v432
  %v593 = vpop.f32.mrf.mxu0
  %v594 = vadd.f32 0.0, %v593
  %v595 = vpop.f32.mrf.mxu0
  %596 = vmatprep.mubr.f32.mxu0 0.0
  %597 = vmatmul.mubr.f32.gmra.mxu0 %v435
  %v598 = vpop.f32.mrf.mxu0
  %v599 = vadd.f32 0.0, %v598
  %v600 = vpop.f32.mrf.mxu0
  %601 = vmatprep.mubr.f32.mxu0 0.0
  %602 = vmatmul.mubr.f32.gmra.mxu0 %v438
  %v603 = vpop.f32.mrf.mxu0
  %v604 = vadd.f32 0.0, %v603
  %v605 = vpop.f32.mrf.mxu0
  %606 = vmatprep.mubr.f32.mxu0 0.0
  %607 = vmatmul.mubr.f32.gmra.mxu0 %v441
  %v608 = vpop.f32.mrf.mxu0
  %v609 = vadd.f32 0.0, %v608
  %v610 = vpop.f32.mrf.mxu0
  %611 = vmatprep.mubr.f32.mxu0 0.0
  %612 = vmatmul.mubr.f32.gmra.mxu0 %v444
  %v613 = vpop.f32.mrf.mxu0
  %v614 = vadd.f32 0.0, %v613
  %v615 = vpop.f32.mrf.mxu0
  %616 = vmatprep.mubr.f32.mxu0 0.0
  %617 = vmatmul.mubr.f32.gmra.mxu0 %v447
  %v618 = vpop.f32.mrf.mxu0
  %v619 = vadd.f32 0.0, %v618
  %v620 = vpop.f32.mrf.mxu0
  %621 = vmatprep.mubr.f32.mxu0 0.0
  %622 = vmatmul.mubr.f32.gmra.mxu0 %v450
  %v623 = vpop.f32.mrf.mxu0
  %v624 = vadd.f32 0.0, %v623
  %v625 = vpop.f32.mrf.mxu0
  %626 = vmatprep.mubr.f32.mxu0 0.0
  %627 = vmatmul.mubr.f32.gmra.mxu0 %v453
  %v628 = vpop.f32.mrf.mxu0
  %v629 = vadd.f32 0.0, %v628
  %v630 = vpop.f32.mrf.mxu0
  %631 = vdwg.mxu0
  %632 = vmatprep.subr.mxu0 0.0
  %633 = vmatpush1.msra.mxu0 %v372
  %634 = vmatprep.subr.mxu0 0.0
  %635 = vmatpush1.msra.mxu0 %v371
  %636 = vmatprep.subr.mxu0 0.0
  %637 = vmatpush1.msra.mxu0 %v370
  %638 = vmatprep.subr.mxu0 0.0
  %639 = vmatpush1.msra.mxu0 %v369
  %640 = vmatprep.subr.mxu0 0.0
  %641 = vmatpush1.msra.mxu0 %v368
  %642 = vmatprep.subr.mxu0 0.0
  %643 = vmatpush1.msra.mxu0 %v367
  %644 = vmatprep.subr.mxu0 0.0
  %645 = vmatpush1.msra.mxu0 %v366
  %646 = vmatprep.subr.mxu0 0.0
  %647 = vmatpush1.msra.mxu0 %v365
  %648 = vmatprep.subr.mxu0 0.0
  %649 = vmatpush1.msra.mxu0 %v364
  %650 = vmatprep.subr.mxu0 0.0
  %651 = vmatpush1.msra.mxu0 %v363
  %652 = vmatprep.subr.mxu0 0.0
  %653 = vmatpush1.msra.mxu0 %v362
  %654 = vmatprep.subr.mxu0 0.0
  %655 = vmatpush1.msra.mxu0 %v361
  %656 = vmatprep.subr.mxu0 0.0
  %657 = vmatpush1.msra.mxu0 %v360
  %658 = vmatprep.subr.mxu0 0.0
  %659 = vmatpush1.msra.mxu0 %v359
  %660 = vmatprep.subr.mxu0 0.0
  %661 = vmatpush1.msra.mxu0 %v358
  %662 = vmatprep.subr.mxu0 0.0
  %663 = vmatpush1.msra.mxu0 %v357
  %664 = vmatprep.subr.mxu0 0.0
  %665 = vmatpush2.msra.mxu0 0.0
  %666 = vmatprep.subr.mxu0 0.0
  %667 = vmatpush2.msra.mxu0 0.0
  %668 = vmatprep.subr.mxu0 0.0
  %669 = vmatpush2.msra.mxu0 0.0
  %670 = vmatprep.subr.mxu0 0.0
  %671 = vmatpush2.msra.mxu0 0.0
  %672 = vmatprep.subr.mxu0 0.0
  %673 = vmatpush2.msra.mxu0 0.0
  %674 = vmatprep.subr.mxu0 0.0
  %675 = vmatpush2.msra.mxu0 0.0
  %676 = vmatprep.subr.mxu0 0.0
  %677 = vmatpush2.msra.mxu0 0.0
  %678 = vmatprep.subr.mxu0 0.0
  %679 = vmatpush2.msra.mxu0 0.0
  %680 = vmatprep.subr.mxu0 0.0
  %681 = vmatpush2.msra.mxu0 0.0
  %682 = vmatprep.subr.mxu0 0.0
  %683 = vmatpush2.msra.mxu0 0.0
  %684 = vmatprep.subr.mxu0 0.0
  %685 = vmatpush2.msra.mxu0 0.0
  %686 = vmatprep.subr.mxu0 0.0
  %687 = vmatpush2.msra.mxu0 0.0
  %688 = vmatprep.subr.mxu0 0.0
  %689 = vmatpush2.msra.mxu0 0.0
  %690 = vmatprep.subr.mxu0 0.0
  %691 = vmatpush2.msra.mxu0 0.0
  %692 = vmatprep.subr.mxu0 0.0
  %693 = vmatpush2.msra.mxu0 0.0
  %694 = vmatprep.subr.mxu0 0.0
  %695 = vmatpush2.msra.mxu0 0.0
  %696 = vmatprep.mubr.f32.mxu0 0.0
  %697 = vmatmul.mubr.f32.gmra.mxu0 %v317
  %v698 = vpop.f32.mrf.mxu0
  %v699 = vadd.f32 %v554, %v698
  %v700 = vpop.f32.mrf.mxu0
  %701 = vmatprep.mubr.f32.mxu0 0.0
  %702 = vmatmul.mubr.f32.gmra.mxu0 %v319
  %v703 = vpop.f32.mrf.mxu0
  %v704 = vadd.f32 %v559, %v703
  %v705 = vpop.f32.mrf.mxu0
  %706 = vmatprep.mubr.f32.mxu0 0.0
  %707 = vmatmul.mubr.f32.gmra.mxu0 %v321
  %v708 = vpop.f32.mrf.mxu0
  %v709 = vadd.f32 %v564, %v708
  %v710 = vpop.f32.mrf.mxu0
  %711 = vmatprep.mubr.f32.mxu0 0.0
  %712 = vmatmul.mubr.f32.gmra.mxu0 %v323
  %v713 = vpop.f32.mrf.mxu0
  %v714 = vadd.f32 %v569, %v713
  %v715 = vpop.f32.mrf.mxu0
  %716 = vmatprep.mubr.f32.mxu0 0.0
  %717 = vmatmul.mubr.f32.gmra.mxu0 %v325
  %v718 = vpop.f32.mrf.mxu0
  %v719 = vadd.f32 %v574, %v718
  %v720 = vpop.f32.mrf.mxu0
  %721 = vmatprep.mubr.f32.mxu0 0.0
  %722 = vmatmul.mubr.f32.gmra.mxu0 %v327
  %v723 = vpop.f32.mrf.mxu0
  %v724 = vadd.f32 %v579, %v723
  %v725 = vpop.f32.mrf.mxu0
  %726 = vmatprep.mubr.f32.mxu0 0.0
  %727 = vmatmul.mubr.f32.gmra.mxu0 %v329
  %v728 = vpop.f32.mrf.mxu0
  %v729 = vadd.f32 %v584, %v728
  %v730 = vpop.f32.mrf.mxu0
  %731 = vmatprep.mubr.f32.mxu0 0.0
  %732 = vmatmul.mubr.f32.gmra.mxu0 %v331
  %v733 = vpop.f32.mrf.mxu0
  %v734 = vadd.f32 %v589, %v733
  %v735 = vpop.f32.mrf.mxu0
  %736 = vmatprep.mubr.f32.mxu0 0.0
  %737 = vmatmul.mubr.f32.gmra.mxu0 %v337
  %v738 = vpop.f32.mrf.mxu0
  %v739 = vadd.f32 %v594, %v738
  %v740 = vpop.f32.mrf.mxu0
  %741 = vmatprep.mubr.f32.mxu0 0.0
  %742 = vmatmul.mubr.f32.gmra.mxu0 %v339
  %v743 = vpop.f32.mrf.mxu0
  %v744 = vadd.f32 %v599, %v743
  %v745 = vpop.f32.mrf.mxu0
  %746 = vmatprep.mubr.f32.mxu0 0.0
  %747 = vmatmul.mubr.f32.gmra.mxu0 %v341
  %v748 = vpop.f32.mrf.mxu0
  %v749 = vadd.f32 %v604, %v748
  %v750 = vpop.f32.mrf.mxu0
  %751 = vmatprep.mubr.f32.mxu0 0.0
  %752 = vmatmul.mubr.f32.gmra.mxu0 %v343
  %v753 = vpop.f32.mrf.mxu0
  %v754 = vadd.f32 %v609, %v753
  %v755 = vpop.f32.mrf.mxu0
  %756 = vmatprep.mubr.f32.mxu0 0.0
  %757 = vmatmul.mubr.f32.gmra.mxu0 %v345
  %v758 = vpop.f32.mrf.mxu0
  %v759 = vadd.f32 %v614, %v758
  %v760 = vpop.f32.mrf.mxu0
  %761 = vmatprep.mubr.f32.mxu0 0.0
  %762 = vmatmul.mubr.f32.gmra.mxu0 %v347
  %v763 = vpop.f32.mrf.mxu0
  %v764 = vadd.f32 %v619, %v763
  %v765 = vpop.f32.mrf.mxu0
  %766 = vmatprep.mubr.f32.mxu0 0.0
  %767 = vmatmul.mubr.f32.gmra.mxu0 %v349
  %v768 = vpop.f32.mrf.mxu0
  %v769 = vadd.f32 %v624, %v768
  %v770 = vpop.f32.mrf.mxu0
  %771 = vmatprep.mubr.f32.mxu0 0.0
  %772 = vmatmul.mubr.f32.gmra.mxu0 %v351
  %v773 = vpop.f32.mrf.mxu0
  %v774 = vadd.f32 %v629, %v773
  %v775 = vpop.f32.mrf.mxu0
  %776 = vdwg.mxu0
  %vm777 = vcmask 1045504
  %v778 = vrot.slane %v317, 2
  %v779 = vrot.slane %v318, 2
  %v780 = vsel %vm777, %v778, %v779
  %v781 = vrot.slane %v319, 2
  %v782 = vrot.slane %v320, 2
  %v783 = vsel %vm777, %v781, %v782
  %v784 = vrot.slane %v321, 2
  %v785 = vrot.slane %v322, 2
  %v786 = vsel %vm777, %v784, %v785
  %v787 = vrot.slane %v323, 2
  %v788 = vrot.slane %v324, 2
  %v789 = vsel %vm777, %v787, %v788
  %v790 = vrot.slane %v325, 2
  %v791 = vrot.slane %v326, 2
  %v792 = vsel %vm777, %v790, %v791
  %v793 = vrot.slane %v327, 2
  %v794 = vrot.slane %v328, 2
  %v795 = vsel %vm777, %v793, %v794
  %v796 = vrot.slane %v329, 2
  %v797 = vrot.slane %v330, 2
  %v798 = vsel %vm777, %v796, %v797
  %v799 = vrot.slane %v331, 2
  %v800 = vrot.slane %v332, 2
  %v801 = vsel %vm777, %v799, %v800
  %v802 = vrot.slane %v337, 2
  %v803 = vrot.slane %v338, 2
  %v804 = vsel %vm777, %v802, %v803
  %v805 = vrot.slane %v339, 2
  %v806 = vrot.slane %v340, 2
  %v807 = vsel %vm777, %v805, %v806
  %v808 = vrot.slane %v341, 2
  %v809 = vrot.slane %v342, 2
  %v810 = vsel %vm777, %v808, %v809
  %v811 = vrot.slane %v343, 2
  %v812 = vrot.slane %v344, 2
  %v813 = vsel %vm777, %v811, %v812
  %v814 = vrot.slane %v345, 2
  %v815 = vrot.slane %v346, 2
  %v816 = vsel %vm777, %v814, %v815
  %v817 = vrot.slane %v347, 2
  %v818 = vrot.slane %v348, 2
  %v819 = vsel %vm777, %v817, %v818
  %v820 = vrot.slane %v349, 2
  %v821 = vrot.slane %v350, 2
  %v822 = vsel %vm777, %v820, %v821
  %v823 = vrot.slane %v351, 2
  %v824 = vrot.slane %v352, 2
  %v825 = vsel %vm777, %v823, %v824
  %s842 = scalar_lea.vmem %s4, 256
  %v843 = vld [vmem:[%s842] sm:$0xff]
  %v844 = vld [vmem:[%s842 + $0x8] sm:$0xff]
  %v845 = vld [vmem:[%s842 + $0x10] sm:$0xff]
  %v846 = vld [vmem:[%s842 + $0x18] sm:$0xff]
  %v847 = vld [vmem:[%s842 + $0x20] sm:$0xff]
  %v848 = vld [vmem:[%s842 + $0x28] sm:$0xff]
  %v849 = vld [vmem:[%s842 + $0x30] sm:$0xff]
  %v850 = vld [vmem:[%s842 + $0x38] sm:$0xff]
  %v851 = vld [vmem:[%s842 + $0x40] sm:$0xff]
  %v852 = vld [vmem:[%s842 + $0x48] sm:$0xff]
  %v853 = vld [vmem:[%s842 + $0x50] sm:$0xff]
  %v854 = vld [vmem:[%s842 + $0x58] sm:$0xff]
  %v855 = vld [vmem:[%s842 + $0x60] sm:$0xff]
  %v856 = vld [vmem:[%s842 + $0x68] sm:$0xff]
  %v857 = vld [vmem:[%s842 + $0x70] sm:$0xff]
  %v858 = vld [vmem:[%s842 + $0x78] sm:$0xff]
  %859 = vmatprep.subr.mxu0 0.0
  %860 = vmatpush1.msra.mxu0 %v858
  %861 = vmatprep.subr.mxu0 0.0
  %862 = vmatpush1.msra.mxu0 %v857
  %863 = vmatprep.subr.mxu0 0.0
  %864 = vmatpush1.msra.mxu0 %v856
  %865 = vmatprep.subr.mxu0 0.0
  %866 = vmatpush1.msra.mxu0 %v855
  %867 = vmatprep.subr.mxu0 0.0
  %868 = vmatpush1.msra.mxu0 %v854
  %869 = vmatprep.subr.mxu0 0.0
  %870 = vmatpush1.msra.mxu0 %v853
  %871 = vmatprep.subr.mxu0 0.0
  %872 = vmatpush1.msra.mxu0 %v852
  %873 = vmatprep.subr.mxu0 0.0
  %874 = vmatpush1.msra.mxu0 %v851
  %875 = vmatprep.subr.mxu0 0.0
  %876 = vmatpush1.msra.mxu0 %v850
  %877 = vmatprep.subr.mxu0 0.0
  %878 = vmatpush1.msra.mxu0 %v849
  %879 = vmatprep.subr.mxu0 0.0
  %880 = vmatpush1.msra.mxu0 %v848
  %881 = vmatprep.subr.mxu0 0.0
  %882 = vmatpush1.msra.mxu0 %v847
  %883 = vmatprep.subr.mxu0 0.0
  %884 = vmatpush1.msra.mxu0 %v846
  %885 = vmatprep.subr.mxu0 0.0
  %886 = vmatpush1.msra.mxu0 %v845
  %887 = vmatprep.subr.mxu0 0.0
  %888 = vmatpush1.msra.mxu0 %v844
  %889 = vmatprep.subr.mxu0 0.0
  %890 = vmatpush1.msra.mxu0 %v843
  %891 = vmatprep.subr.mxu0 0.0
  %892 = vmatpush2.msra.mxu0 0.0
  %893 = vmatprep.subr.mxu0 0.0
  %894 = vmatpush2.msra.mxu0 0.0
  %895 = vmatprep.subr.mxu0 0.0
  %896 = vmatpush2.msra.mxu0 0.0
  %897 = vmatprep.subr.mxu0 0.0
  %898 = vmatpush2.msra.mxu0 0.0
  %899 = vmatprep.subr.mxu0 0.0
  %900 = vmatpush2.msra.mxu0 0.0
  %901 = vmatprep.subr.mxu0 0.0
  %902 = vmatpush2.msra.mxu0 0.0
  %903 = vmatprep.subr.mxu0 0.0
  %904 = vmatpush2.msra.mxu0 0.0
  %905 = vmatprep.subr.mxu0 0.0
  %906 = vmatpush2.msra.mxu0 0.0
  %907 = vmatprep.subr.mxu0 0.0
  %908 = vmatpush2.msra.mxu0 0.0
  %909 = vmatprep.subr.mxu0 0.0
  %910 = vmatpush2.msra.mxu0 0.0
  %911 = vmatprep.subr.mxu0 0.0
  %912 = vmatpush2.msra.mxu0 0.0
  %913 = vmatprep.subr.mxu0 0.0
  %914 = vmatpush2.msra.mxu0 0.0
  %915 = vmatprep.subr.mxu0 0.0
  %916 = vmatpush2.msra.mxu0 0.0
  %917 = vmatprep.subr.mxu0 0.0
  %918 = vmatpush2.msra.mxu0 0.0
  %919 = vmatprep.subr.mxu0 0.0
  %920 = vmatpush2.msra.mxu0 0.0
  %921 = vmatprep.subr.mxu0 0.0
  %922 = vmatpush2.msra.mxu0 0.0
  %923 = vmatprep.mubr.f32.mxu0 0.0
  %924 = vmatmul.mubr.f32.gmra.mxu0 %v780
  %v925 = vpop.f32.mrf.mxu0
  %v926 = vadd.f32 0.0, %v925
  %v927 = vpop.f32.mrf.mxu0
  %928 = vmatprep.mubr.f32.mxu0 0.0
  %929 = vmatmul.mubr.f32.gmra.mxu0 %v783
  %v930 = vpop.f32.mrf.mxu0
  %v931 = vadd.f32 0.0, %v930
  %v932 = vpop.f32.mrf.mxu0
  %933 = vmatprep.mubr.f32.mxu0 0.0
  %934 = vmatmul.mubr.f32.gmra.mxu0 %v786
  %v935 = vpop.f32.mrf.mxu0
  %v936 = vadd.f32 0.0, %v935
  %v937 = vpop.f32.mrf.mxu0
  %938 = vmatprep.mubr.f32.mxu0 0.0
  %939 = vmatmul.mubr.f32.gmra.mxu0 %v789
  %v940 = vpop.f32.mrf.mxu0
  %v941 = vadd.f32 0.0, %v940
  %v942 = vpop.f32.mrf.mxu0
  %943 = vmatprep.mubr.f32.mxu0 0.0
  %944 = vmatmul.mubr.f32.gmra.mxu0 %v792
  %v945 = vpop.f32.mrf.mxu0
  %v946 = vadd.f32 0.0, %v945
  %v947 = vpop.f32.mrf.mxu0
  %948 = vmatprep.mubr.f32.mxu0 0.0
  %949 = vmatmul.mubr.f32.gmra.mxu0 %v795
  %v950 = vpop.f32.mrf.mxu0
  %v951 = vadd.f32 0.0, %v950
  %v952 = vpop.f32.mrf.mxu0
  %953 = vmatprep.mubr.f32.mxu0 0.0
  %954 = vmatmul.mubr.f32.gmra.mxu0 %v798
  %v955 = vpop.f32.mrf.mxu0
  %v956 = vadd.f32 0.0, %v955
  %v957 = vpop.f32.mrf.mxu0
  %958 = vmatprep.mubr.f32.mxu0 0.0
  %959 = vmatmul.mubr.f32.gmra.mxu0 %v801
  %v960 = vpop.f32.mrf.mxu0
  %v961 = vadd.f32 0.0, %v960
  %v962 = vpop.f32.mrf.mxu0
  %963 = vmatprep.mubr.f32.mxu0 0.0
  %964 = vmatmul.mubr.f32.gmra.mxu0 %v804
  %v965 = vpop.f32.mrf.mxu0
  %v966 = vadd.f32 0.0, %v965
  %v967 = vpop.f32.mrf.mxu0
  %968 = vmatprep.mubr.f32.mxu0 0.0
  %969 = vmatmul.mubr.f32.gmra.mxu0 %v807
  %v970 = vpop.f32.mrf.mxu0
  %v971 = vadd.f32 0.0, %v970
  %v972 = vpop.f32.mrf.mxu0
  %973 = vmatprep.mubr.f32.mxu0 0.0
  %974 = vmatmul.mubr.f32.gmra.mxu0 %v810
  %v975 = vpop.f32.mrf.mxu0
  %v976 = vadd.f32 0.0, %v975
  %v977 = vpop.f32.mrf.mxu0
  %978 = vmatprep.mubr.f32.mxu0 0.0
  %979 = vmatmul.mubr.f32.gmra.mxu0 %v813
  %v980 = vpop.f32.mrf.mxu0
  %v981 = vadd.f32 0.0, %v980
  %v982 = vpop.f32.mrf.mxu0
  %983 = vmatprep.mubr.f32.mxu0 0.0
  %984 = vmatmul.mubr.f32.gmra.mxu0 %v816
  %v985 = vpop.f32.mrf.mxu0
  %v986 = vadd.f32 0.0, %v985
  %v987 = vpop.f32.mrf.mxu0
  %988 = vmatprep.mubr.f32.mxu0 0.0
  %989 = vmatmul.mubr.f32.gmra.mxu0 %v819
  %v990 = vpop.f32.mrf.mxu0
  %v991 = vadd.f32 0.0, %v990
  %v992 = vpop.f32.mrf.mxu0
  %993 = vmatprep.mubr.f32.mxu0 0.0
  %994 = vmatmul.mubr.f32.gmra.mxu0 %v822
  %v995 = vpop.f32.mrf.mxu0
  %v996 = vadd.f32 0.0, %v995
  %v997 = vpop.f32.mrf.mxu0
  %998 = vmatprep.mubr.f32.mxu0 0.0
  %999 = vmatmul.mubr.f32.gmra.mxu0 %v825
  %v1000 = vpop.f32.mrf.mxu0
  %v1001 = vadd.f32 0.0, %v1000
  %v1002 = vpop.f32.mrf.mxu0
  %1003 = vdwg.mxu0
  %v1004 = vadd.f32 %v699, %v926
  %v1005 = vadd.f32 %v704, %v931
  %v1006 = vadd.f32 %v709, %v936
  %v1007 = vadd.f32 %v714, %v941
  %v1008 = vadd.f32 %v719, %v946
  %v1009 = vadd.f32 %v724, %v951
  %v1010 = vadd.f32 %v729, %v956
  %v1011 = vadd.f32 %v734, %v961
  %v1012 = vadd.f32 %v739, %v966
  %v1013 = vadd.f32 %v744, %v971
  %v1014 = vadd.f32 %v749, %v976
  %v1015 = vadd.f32 %v754, %v981
  %v1016 = vadd.f32 %v759, %v986
  %v1017 = vadd.f32 %v764, %v991
  %v1018 = vadd.f32 %v769, %v996
  %v1019 = vadd.f32 %v774, %v1001
  %s1020 = scalar_lea.vmem %s4, 384
  %v1021 = vld [vmem:[%s1020] sm:$0xff]
  %v1022 = vld [vmem:[%s1020 + $0x8] sm:$0xff]
  %v1023 = vld [vmem:[%s1020 + $0x10] sm:$0xff]
  %v1024 = vld [vmem:[%s1020 + $0x18] sm:$0xff]
  %v1025 = vld [vmem:[%s1020 + $0x20] sm:$0xff]
  %v1026 = vld [vmem:[%s1020 + $0x28] sm:$0xff]
  %v1027 = vld [vmem:[%s1020 + $0x30] sm:$0xff]
  %v1028 = vld [vmem:[%s1020 + $0x38] sm:$0xff]
  %v1029 = vld [vmem:[%s1020 + $0x40] sm:$0xff]
  %v1030 = vld [vmem:[%s1020 + $0x48] sm:$0xff]
  %v1031 = vld [vmem:[%s1020 + $0x50] sm:$0xff]
  %v1032 = vld [vmem:[%s1020 + $0x58] sm:$0xff]
  %v1033 = vld [vmem:[%s1020 + $0x60] sm:$0xff]
  %v1034 = vld [vmem:[%s1020 + $0x68] sm:$0xff]
  %v1035 = vld [vmem:[%s1020 + $0x70] sm:$0xff]
  %v1036 = vld [vmem:[%s1020 + $0x78] sm:$0xff]
  %1037 = vmatprep.subr.mxu0 0.0
  %1038 = vmatpush1.msra.mxu0 %v1036
  %1039 = vmatprep.subr.mxu0 0.0
  %1040 = vmatpush1.msra.mxu0 %v1035
  %1041 = vmatprep.subr.mxu0 0.0
  %1042 = vmatpush1.msra.mxu0 %v1034
  %1043 = vmatprep.subr.mxu0 0.0
  %1044 = vmatpush1.msra.mxu0 %v1033
  %1045 = vmatprep.subr.mxu0 0.0
  %1046 = vmatpush1.msra.mxu0 %v1032
  %1047 = vmatprep.subr.mxu0 0.0
  %1048 = vmatpush1.msra.mxu0 %v1031
  %1049 = vmatprep.subr.mxu0 0.0
  %1050 = vmatpush1.msra.mxu0 %v1030
  %1051 = vmatprep.subr.mxu0 0.0
  %1052 = vmatpush1.msra.mxu0 %v1029
  %1053 = vmatprep.subr.mxu0 0.0
  %1054 = vmatpush1.msra.mxu0 %v1028
  %1055 = vmatprep.subr.mxu0 0.0
  %1056 = vmatpush1.msra.mxu0 %v1027
  %1057 = vmatprep.subr.mxu0 0.0
  %1058 = vmatpush1.msra.mxu0 %v1026
  %1059 = vmatprep.subr.mxu0 0.0
  %1060 = vmatpush1.msra.mxu0 %v1025
  %1061 = vmatprep.subr.mxu0 0.0
  %1062 = vmatpush1.msra.mxu0 %v1024
  %1063 = vmatprep.subr.mxu0 0.0
  %1064 = vmatpush1.msra.mxu0 %v1023
  %1065 = vmatprep.subr.mxu0 0.0
  %1066 = vmatpush1.msra.mxu0 %v1022
  %1067 = vmatprep.subr.mxu0 0.0
  %1068 = vmatpush1.msra.mxu0 %v1021
  %1069 = vmatprep.subr.mxu0 0.0
  %1070 = vmatpush2.msra.mxu0 0.0
  %1071 = vmatprep.subr.mxu0 0.0
  %1072 = vmatpush2.msra.mxu0 0.0
  %1073 = vmatprep.subr.mxu0 0.0
  %1074 = vmatpush2.msra.mxu0 0.0
  %1075 = vmatprep.subr.mxu0 0.0
  %1076 = vmatpush2.msra.mxu0 0.0
  %1077 = vmatprep.subr.mxu0 0.0
  %1078 = vmatpush2.msra.mxu0 0.0
  %1079 = vmatprep.subr.mxu0 0.0
  %1080 = vmatpush2.msra.mxu0 0.0
  %1081 = vmatprep.subr.mxu0 0.0
  %1082 = vmatpush2.msra.mxu0 0.0
  %1083 = vmatprep.subr.mxu0 0.0
  %1084 = vmatpush2.msra.mxu0 0.0
  %1085 = vmatprep.subr.mxu0 0.0
  %1086 = vmatpush2.msra.mxu0 0.0
  %1087 = vmatprep.subr.mxu0 0.0
  %1088 = vmatpush2.msra.mxu0 0.0
  %1089 = vmatprep.subr.mxu0 0.0
  %1090 = vmatpush2.msra.mxu0 0.0
  %1091 = vmatprep.subr.mxu0 0.0
  %1092 = vmatpush2.msra.mxu0 0.0
  %1093 = vmatprep.subr.mxu0 0.0
  %1094 = vmatpush2.msra.mxu0 0.0
  %1095 = vmatprep.subr.mxu0 0.0
  %1096 = vmatpush2.msra.mxu0 0.0
  %1097 = vmatprep.subr.mxu0 0.0
  %1098 = vmatpush2.msra.mxu0 0.0
  %1099 = vmatprep.subr.mxu0 0.0
  %1100 = vmatpush2.msra.mxu0 0.0
  %1101 = vmatprep.mubr.f32.mxu0 0.0
  %1102 = vmatmul.mubr.f32.gmra.mxu0 %v319
  %v1103 = vpop.f32.mrf.mxu0
  %v1104 = vadd.f32 0.0, %v1103
  %v1105 = vpop.f32.mrf.mxu0
  %1106 = vmatprep.mubr.f32.mxu0 0.0
  %1107 = vmatmul.mubr.f32.gmra.mxu0 %v321
  %v1108 = vpop.f32.mrf.mxu0
  %v1109 = vadd.f32 0.0, %v1108
  %v1110 = vpop.f32.mrf.mxu0
  %1111 = vmatprep.mubr.f32.mxu0 0.0
  %1112 = vmatmul.mubr.f32.gmra.mxu0 %v323
  %v1113 = vpop.f32.mrf.mxu0
  %v1114 = vadd.f32 0.0, %v1113
  %v1115 = vpop.f32.mrf.mxu0
  %1116 = vmatprep.mubr.f32.mxu0 0.0
  %1117 = vmatmul.mubr.f32.gmra.mxu0 %v325
  %v1118 = vpop.f32.mrf.mxu0
  %v1119 = vadd.f32 0.0, %v1118
  %v1120 = vpop.f32.mrf.mxu0
  %1121 = vmatprep.mubr.f32.mxu0 0.0
  %1122 = vmatmul.mubr.f32.gmra.mxu0 %v327
  %v1123 = vpop.f32.mrf.mxu0
  %v1124 = vadd.f32 0.0, %v1123
  %v1125 = vpop.f32.mrf.mxu0
  %1126 = vmatprep.mubr.f32.mxu0 0.0
  %1127 = vmatmul.mubr.f32.gmra.mxu0 %v329
  %v1128 = vpop.f32.mrf.mxu0
  %v1129 = vadd.f32 0.0, %v1128
  %v1130 = vpop.f32.mrf.mxu0
  %1131 = vmatprep.mubr.f32.mxu0 0.0
  %1132 = vmatmul.mubr.f32.gmra.mxu0 %v331
  %v1133 = vpop.f32.mrf.mxu0
  %v1134 = vadd.f32 0.0, %v1133
  %v1135 = vpop.f32.mrf.mxu0
  %1136 = vmatprep.mubr.f32.mxu0 0.0
  %1137 = vmatmul.mubr.f32.gmra.mxu0 %v333
  %v1138 = vpop.f32.mrf.mxu0
  %v1139 = vadd.f32 0.0, %v1138
  %v1140 = vpop.f32.mrf.mxu0
  %1141 = vmatprep.mubr.f32.mxu0 0.0
  %1142 = vmatmul.mubr.f32.gmra.mxu0 %v339
  %v1143 = vpop.f32.mrf.mxu0
  %v1144 = vadd.f32 0.0, %v1143
  %v1145 = vpop.f32.mrf.mxu0
  %1146 = vmatprep.mubr.f32.mxu0 0.0
  %1147 = vmatmul.mubr.f32.gmra.mxu0 %v341
  %v1148 = vpop.f32.mrf.mxu0
  %v1149 = vadd.f32 0.0, %v1148
  %v1150 = vpop.f32.mrf.mxu0
  %1151 = vmatprep.mubr.f32.mxu0 0.0
  %1152 = vmatmul.mubr.f32.gmra.mxu0 %v343
  %v1153 = vpop.f32.mrf.mxu0
  %v1154 = vadd.f32 0.0, %v1153
  %v1155 = vpop.f32.mrf.mxu0
  %1156 = vmatprep.mubr.f32.mxu0 0.0
  %1157 = vmatmul.mubr.f32.gmra.mxu0 %v345
  %v1158 = vpop.f32.mrf.mxu0
  %v1159 = vadd.f32 0.0, %v1158
  %v1160 = vpop.f32.mrf.mxu0
  %1161 = vmatprep.mubr.f32.mxu0 0.0
  %1162 = vmatmul.mubr.f32.gmra.mxu0 %v347
  %v1163 = vpop.f32.mrf.mxu0
  %v1164 = vadd.f32 0.0, %v1163
  %v1165 = vpop.f32.mrf.mxu0
  %1166 = vmatprep.mubr.f32.mxu0 0.0
  %1167 = vmatmul.mubr.f32.gmra.mxu0 %v349
  %v1168 = vpop.f32.mrf.mxu0
  %v1169 = vadd.f32 0.0, %v1168
  %v1170 = vpop.f32.mrf.mxu0
  %1171 = vmatprep.mubr.f32.mxu0 0.0
  %1172 = vmatmul.mubr.f32.gmra.mxu0 %v351
  %v1173 = vpop.f32.mrf.mxu0
  %v1174 = vadd.f32 0.0, %v1173
  %v1175 = vpop.f32.mrf.mxu0
  %1176 = vmatprep.mubr.f32.mxu0 0.0
  %1177 = vmatmul.mubr.f32.gmra.mxu0 %v353
  %v1178 = vpop.f32.mrf.mxu0
  %v1179 = vadd.f32 0.0, %v1178
  %v1180 = vpop.f32.mrf.mxu0
  %1181 = vdwg.mxu0
  %v1182 = vadd.f32 %v1004, %v1104
  %v1183 = vadd.f32 %v1005, %v1109
  %v1184 = vadd.f32 %v1006, %v1114
  %v1185 = vadd.f32 %v1007, %v1119
  %v1186 = vadd.f32 %v1008, %v1124
  %v1187 = vadd.f32 %v1009, %v1129
  %v1188 = vadd.f32 %v1010, %v1134
  %v1189 = vadd.f32 %v1011, %v1139
  %v1190 = vadd.f32 %v1012, %v1144
  %v1191 = vadd.f32 %v1013, %v1149
  %v1192 = vadd.f32 %v1014, %v1154
  %v1193 = vadd.f32 %v1015, %v1159
  %v1194 = vadd.f32 %v1016, %v1164
  %v1195 = vadd.f32 %v1017, %v1169
  %v1196 = vadd.f32 %v1018, %v1174
  %v1197 = vadd.f32 %v1019, %v1179
  %v1202 = vrot.slane %v333, 1
  %v1203 = vrot.slane %v334, 1
  %v1204 = vsel %vm405, %v1202, %v1203
  %v1205 = vrot.slane %v353, 1
  %v1206 = vrot.slane %v354, 1
  %v1207 = vsel %vm405, %v1205, %v1206
  %s1210 = scalar_lea.vmem %s4, 512
  %v1211 = vld [vmem:[%s1210] sm:$0xff]
  %v1212 = vld [vmem:[%s1210 + $0x8] sm:$0xff]
  %v1213 = vld [vmem:[%s1210 + $0x10] sm:$0xff]
  %v1214 = vld [vmem:[%s1210 + $0x18] sm:$0xff]
  %v1215 = vld [vmem:[%s1210 + $0x20] sm:$0xff]
  %v1216 = vld [vmem:[%s1210 + $0x28] sm:$0xff]
  %v1217 = vld [vmem:[%s1210 + $0x30] sm:$0xff]
  %v1218 = vld [vmem:[%s1210 + $0x38] sm:$0xff]
  %v1219 = vld [vmem:[%s1210 + $0x40] sm:$0xff]
  %v1220 = vld [vmem:[%s1210 + $0x48] sm:$0xff]
  %v1221 = vld [vmem:[%s1210 + $0x50] sm:$0xff]
  %v1222 = vld [vmem:[%s1210 + $0x58] sm:$0xff]
  %v1223 = vld [vmem:[%s1210 + $0x60] sm:$0xff]
  %v1224 = vld [vmem:[%s1210 + $0x68] sm:$0xff]
  %v1225 = vld [vmem:[%s1210 + $0x70] sm:$0xff]
  %v1226 = vld [vmem:[%s1210 + $0x78] sm:$0xff]
  %1227 = vmatprep.subr.mxu0 0.0
  %1228 = vmatpush1.msra.mxu0 %v1226
  %1229 = vmatprep.subr.mxu0 0.0
  %1230 = vmatpush1.msra.mxu0 %v1225
  %1231 = vmatprep.subr.mxu0 0.0
  %1232 = vmatpush1.msra.mxu0 %v1224
  %1233 = vmatprep.subr.mxu0 0.0
  %1234 = vmatpush1.msra.mxu0 %v1223
  %1235 = vmatprep.subr.mxu0 0.0
  %1236 = vmatpush1.msra.mxu0 %v1222
  %1237 = vmatprep.subr.mxu0 0.0
  %1238 = vmatpush1.msra.mxu0 %v1221
  %1239 = vmatprep.subr.mxu0 0.0
  %1240 = vmatpush1.msra.mxu0 %v1220
  %1241 = vmatprep.subr.mxu0 0.0
  %1242 = vmatpush1.msra.mxu0 %v1219
  %1243 = vmatprep.subr.mxu0 0.0
  %1244 = vmatpush1.msra.mxu0 %v1218
  %1245 = vmatprep.subr.mxu0 0.0
  %1246 = vmatpush1.msra.mxu0 %v1217
  %1247 = vmatprep.subr.mxu0 0.0
  %1248 = vmatpush1.msra.mxu0 %v1216
  %1249 = vmatprep.subr.mxu0 0.0
  %1250 = vmatpush1.msra.mxu0 %v1215
  %1251 = vmatprep.subr.mxu0 0.0
  %1252 = vmatpush1.msra.mxu0 %v1214
  %1253 = vmatprep.subr.mxu0 0.0
  %1254 = vmatpush1.msra.mxu0 %v1213
  %1255 = vmatprep.subr.mxu0 0.0
  %1256 = vmatpush1.msra.mxu0 %v1212
  %1257 = vmatprep.subr.mxu0 0.0
  %1258 = vmatpush1.msra.mxu0 %v1211
  %1259 = vmatprep.subr.mxu0 0.0
  %1260 = vmatpush2.msra.mxu0 0.0
  %1261 = vmatprep.subr.mxu0 0.0
  %1262 = vmatpush2.msra.mxu0 0.0
  %1263 = vmatprep.subr.mxu0 0.0
  %1264 = vmatpush2.msra.mxu0 0.0
  %1265 = vmatprep.subr.mxu0 0.0
  %1266 = vmatpush2.msra.mxu0 0.0
  %1267 = vmatprep.subr.mxu0 0.0
  %1268 = vmatpush2.msra.mxu0 0.0
  %1269 = vmatprep.subr.mxu0 0.0
  %1270 = vmatpush2.msra.mxu0 0.0
  %1271 = vmatprep.subr.mxu0 0.0
  %1272 = vmatpush2.msra.mxu0 0.0
  %1273 = vmatprep.subr.mxu0 0.0
  %1274 = vmatpush2.msra.mxu0 0.0
  %1275 = vmatprep.subr.mxu0 0.0
  %1276 = vmatpush2.msra.mxu0 0.0
  %1277 = vmatprep.subr.mxu0 0.0
  %1278 = vmatpush2.msra.mxu0 0.0
  %1279 = vmatprep.subr.mxu0 0.0
  %1280 = vmatpush2.msra.mxu0 0.0
  %1281 = vmatprep.subr.mxu0 0.0
  %1282 = vmatpush2.msra.mxu0 0.0
  %1283 = vmatprep.subr.mxu0 0.0
  %1284 = vmatpush2.msra.mxu0 0.0
  %1285 = vmatprep.subr.mxu0 0.0
  %1286 = vmatpush2.msra.mxu0 0.0
  %1287 = vmatprep.subr.mxu0 0.0
  %1288 = vmatpush2.msra.mxu0 0.0
  %1289 = vmatprep.subr.mxu0 0.0
  %1290 = vmatpush2.msra.mxu0 0.0
  %1291 = vmatprep.mubr.f32.mxu0 0.0
  %1292 = vmatmul.mubr.f32.gmra.mxu0 %v411
  %v1293 = vpop.f32.mrf.mxu0
  %v1294 = vadd.f32 0.0, %v1293
  %v1295 = vpop.f32.mrf.mxu0
  %1296 = vmatprep.mubr.f32.mxu0 0.0
  %1297 = vmatmul.mubr.f32.gmra.mxu0 %v414
  %v1298 = vpop.f32.mrf.mxu0
  %v1299 = vadd.f32 0.0, %v1298
  %v1300 = vpop.f32.mrf.mxu0
  %1301 = vmatprep.mubr.f32.mxu0 0.0
  %1302 = vmatmul.mubr.f32.gmra.mxu0 %v417
  %v1303 = vpop.f32.mrf.mxu0
  %v1304 = vadd.f32 0.0, %v1303
  %v1305 = vpop.f32.mrf.mxu0
  %1306 = vmatprep.mubr.f32.mxu0 0.0
  %1307 = vmatmul.mubr.f32.gmra.mxu0 %v420
  %v1308 = vpop.f32.mrf.mxu0
  %v1309 = vadd.f32 0.0, %v1308
  %v1310 = vpop.f32.mrf.mxu0
  %1311 = vmatprep.mubr.f32.mxu0 0.0
  %1312 = vmatmul.mubr.f32.gmra.mxu0 %v423
  %v1313 = vpop.f32.mrf.mxu0
  %v1314 = vadd.f32 0.0, %v1313
  %v1315 = vpop.f32.mrf.mxu0
  %1316 = vmatprep.mubr.f32.mxu0 0.0
  %1317 = vmatmul.mubr.f32.gmra.mxu0 %v426
  %v1318 = vpop.f32.mrf.mxu0
  %v1319 = vadd.f32 0.0, %v1318
  %v1320 = vpop.f32.mrf.mxu0
  %1321 = vmatprep.mubr.f32.mxu0 0.0
  %1322 = vmatmul.mubr.f32.gmra.mxu0 %v429
  %v1323 = vpop.f32.mrf.mxu0
  %v1324 = vadd.f32 0.0, %v1323
  %v1325 = vpop.f32.mrf.mxu0
  %1326 = vmatprep.mubr.f32.mxu0 0.0
  %1327 = vmatmul.mubr.f32.gmra.mxu0 %v1204
  %v1328 = vpop.f32.mrf.mxu0
  %v1329 = vadd.f32 0.0, %v1328
  %v1330 = vpop.f32.mrf.mxu0
  %1331 = vmatprep.mubr.f32.mxu0 0.0
  %1332 = vmatmul.mubr.f32.gmra.mxu0 %v435
  %v1333 = vpop.f32.mrf.mxu0
  %v1334 = vadd.f32 0.0, %v1333
  %v1335 = vpop.f32.mrf.mxu0
  %1336 = vmatprep.mubr.f32.mxu0 0.0
  %1337 = vmatmul.mubr.f32.gmra.mxu0 %v438
  %v1338 = vpop.f32.mrf.mxu0
  %v1339 = vadd.f32 0.0, %v1338
  %v1340 = vpop.f32.mrf.mxu0
  %1341 = vmatprep.mubr.f32.mxu0 0.0
  %1342 = vmatmul.mubr.f32.gmra.mxu0 %v441
  %v1343 = vpop.f32.mrf.mxu0
  %v1344 = vadd.f32 0.0, %v1343
  %v1345 = vpop.f32.mrf.mxu0
  %1346 = vmatprep.mubr.f32.mxu0 0.0
  %1347 = vmatmul.mubr.f32.gmra.mxu0 %v444
  %v1348 = vpop.f32.mrf.mxu0
  %v1349 = vadd.f32 0.0, %v1348
  %v1350 = vpop.f32.mrf.mxu0
  %1351 = vmatprep.mubr.f32.mxu0 0.0
  %1352 = vmatmul.mubr.f32.gmra.mxu0 %v447
  %v1353 = vpop.f32.mrf.mxu0
  %v1354 = vadd.f32 0.0, %v1353
  %v1355 = vpop.f32.mrf.mxu0
  %1356 = vmatprep.mubr.f32.mxu0 0.0
  %1357 = vmatmul.mubr.f32.gmra.mxu0 %v450
  %v1358 = vpop.f32.mrf.mxu0
  %v1359 = vadd.f32 0.0, %v1358
  %v1360 = vpop.f32.mrf.mxu0
  %1361 = vmatprep.mubr.f32.mxu0 0.0
  %1362 = vmatmul.mubr.f32.gmra.mxu0 %v453
  %v1363 = vpop.f32.mrf.mxu0
  %v1364 = vadd.f32 0.0, %v1363
  %v1365 = vpop.f32.mrf.mxu0
  %1366 = vmatprep.mubr.f32.mxu0 0.0
  %1367 = vmatmul.mubr.f32.gmra.mxu0 %v1207
  %v1368 = vpop.f32.mrf.mxu0
  %v1369 = vadd.f32 0.0, %v1368
  %v1370 = vpop.f32.mrf.mxu0
  %1371 = vdwg.mxu0
  %v1372 = vadd.f32 %v1182, %v1294
  %v1373 = vadd.f32 %v1183, %v1299
  %v1374 = vadd.f32 %v1184, %v1304
  %v1375 = vadd.f32 %v1185, %v1309
  %v1376 = vadd.f32 %v1186, %v1314
  %v1377 = vadd.f32 %v1187, %v1319
  %v1378 = vadd.f32 %v1188, %v1324
  %v1379 = vadd.f32 %v1189, %v1329
  %v1380 = vadd.f32 %v1190, %v1334
  %v1381 = vadd.f32 %v1191, %v1339
  %v1382 = vadd.f32 %v1192, %v1344
  %v1383 = vadd.f32 %v1193, %v1349
  %v1384 = vadd.f32 %v1194, %v1354
  %v1385 = vadd.f32 %v1195, %v1359
  %v1386 = vadd.f32 %v1196, %v1364
  %v1387 = vadd.f32 %v1197, %v1369
  %v1388 = vrot.slane %v333, 2
  %v1389 = vrot.slane %v334, 2
  %v1390 = vsel %vm777, %v1388, %v1389
  %v1391 = vrot.slane %v353, 2
  %v1392 = vrot.slane %v354, 2
  %v1393 = vsel %vm777, %v1391, %v1392
  %s1396 = scalar_lea.vmem %s4, 640
  %v1397 = vld [vmem:[%s1396] sm:$0xff]
  %v1398 = vld [vmem:[%s1396 + $0x8] sm:$0xff]
  %v1399 = vld [vmem:[%s1396 + $0x10] sm:$0xff]
  %v1400 = vld [vmem:[%s1396 + $0x18] sm:$0xff]
  %v1401 = vld [vmem:[%s1396 + $0x20] sm:$0xff]
  %v1402 = vld [vmem:[%s1396 + $0x28] sm:$0xff]
  %v1403 = vld [vmem:[%s1396 + $0x30] sm:$0xff]
  %v1404 = vld [vmem:[%s1396 + $0x38] sm:$0xff]
  %v1405 = vld [vmem:[%s1396 + $0x40] sm:$0xff]
  %v1406 = vld [vmem:[%s1396 + $0x48] sm:$0xff]
  %v1407 = vld [vmem:[%s1396 + $0x50] sm:$0xff]
  %v1408 = vld [vmem:[%s1396 + $0x58] sm:$0xff]
  %v1409 = vld [vmem:[%s1396 + $0x60] sm:$0xff]
  %v1410 = vld [vmem:[%s1396 + $0x68] sm:$0xff]
  %v1411 = vld [vmem:[%s1396 + $0x70] sm:$0xff]
  %v1412 = vld [vmem:[%s1396 + $0x78] sm:$0xff]
  %1413 = vmatprep.subr.mxu0 0.0
  %1414 = vmatpush1.msra.mxu0 %v1412
  %1415 = vmatprep.subr.mxu0 0.0
  %1416 = vmatpush1.msra.mxu0 %v1411
  %1417 = vmatprep.subr.mxu0 0.0
  %1418 = vmatpush1.msra.mxu0 %v1410
  %1419 = vmatprep.subr.mxu0 0.0
  %1420 = vmatpush1.msra.mxu0 %v1409
  %1421 = vmatprep.subr.mxu0 0.0
  %1422 = vmatpush1.msra.mxu0 %v1408
  %1423 = vmatprep.subr.mxu0 0.0
  %1424 = vmatpush1.msra.mxu0 %v1407
  %1425 = vmatprep.subr.mxu0 0.0
  %1426 = vmatpush1.msra.mxu0 %v1406
  %1427 = vmatprep.subr.mxu0 0.0
  %1428 = vmatpush1.msra.mxu0 %v1405
  %1429 = vmatprep.subr.mxu0 0.0
  %1430 = vmatpush1.msra.mxu0 %v1404
  %1431 = vmatprep.subr.mxu0 0.0
  %1432 = vmatpush1.msra.mxu0 %v1403
  %1433 = vmatprep.subr.mxu0 0.0
  %1434 = vmatpush1.msra.mxu0 %v1402
  %1435 = vmatprep.subr.mxu0 0.0
  %1436 = vmatpush1.msra.mxu0 %v1401
  %1437 = vmatprep.subr.mxu0 0.0
  %1438 = vmatpush1.msra.mxu0 %v1400
  %1439 = vmatprep.subr.mxu0 0.0
  %1440 = vmatpush1.msra.mxu0 %v1399
  %1441 = vmatprep.subr.mxu0 0.0
  %1442 = vmatpush1.msra.mxu0 %v1398
  %1443 = vmatprep.subr.mxu0 0.0
  %1444 = vmatpush1.msra.mxu0 %v1397
  %1445 = vmatprep.subr.mxu0 0.0
  %1446 = vmatpush2.msra.mxu0 0.0
  %1447 = vmatprep.subr.mxu0 0.0
  %1448 = vmatpush2.msra.mxu0 0.0
  %1449 = vmatprep.subr.mxu0 0.0
  %1450 = vmatpush2.msra.mxu0 0.0
  %1451 = vmatprep.subr.mxu0 0.0
  %1452 = vmatpush2.msra.mxu0 0.0
  %1453 = vmatprep.subr.mxu0 0.0
  %1454 = vmatpush2.msra.mxu0 0.0
  %1455 = vmatprep.subr.mxu0 0.0
  %1456 = vmatpush2.msra.mxu0 0.0
  %1457 = vmatprep.subr.mxu0 0.0
  %1458 = vmatpush2.msra.mxu0 0.0
  %1459 = vmatprep.subr.mxu0 0.0
  %1460 = vmatpush2.msra.mxu0 0.0
  %1461 = vmatprep.subr.mxu0 0.0
  %1462 = vmatpush2.msra.mxu0 0.0
  %1463 = vmatprep.subr.mxu0 0.0
  %1464 = vmatpush2.msra.mxu0 0.0
  %1465 = vmatprep.subr.mxu0 0.0
  %1466 = vmatpush2.msra.mxu0 0.0
  %1467 = vmatprep.subr.mxu0 0.0
  %1468 = vmatpush2.msra.mxu0 0.0
  %1469 = vmatprep.subr.mxu0 0.0
  %1470 = vmatpush2.msra.mxu0 0.0
  %1471 = vmatprep.subr.mxu0 0.0
  %1472 = vmatpush2.msra.mxu0 0.0
  %1473 = vmatprep.subr.mxu0 0.0
  %1474 = vmatpush2.msra.mxu0 0.0
  %1475 = vmatprep.subr.mxu0 0.0
  %1476 = vmatpush2.msra.mxu0 0.0
  %1477 = vmatprep.mubr.f32.mxu0 0.0
  %1478 = vmatmul.mubr.f32.gmra.mxu0 %v783
  %v1479 = vpop.f32.mrf.mxu0
  %v1480 = vadd.f32 0.0, %v1479
  %v1481 = vpop.f32.mrf.mxu0
  %1482 = vmatprep.mubr.f32.mxu0 0.0
  %1483 = vmatmul.mubr.f32.gmra.mxu0 %v786
  %v1484 = vpop.f32.mrf.mxu0
  %v1485 = vadd.f32 0.0, %v1484
  %v1486 = vpop.f32.mrf.mxu0
  %1487 = vmatprep.mubr.f32.mxu0 0.0
  %1488 = vmatmul.mubr.f32.gmra.mxu0 %v789
  %v1489 = vpop.f32.mrf.mxu0
  %v1490 = vadd.f32 0.0, %v1489
  %v1491 = vpop.f32.mrf.mxu0
  %1492 = vmatprep.mubr.f32.mxu0 0.0
  %1493 = vmatmul.mubr.f32.gmra.mxu0 %v792
  %v1494 = vpop.f32.mrf.mxu0
  %v1495 = vadd.f32 0.0, %v1494
  %v1496 = vpop.f32.mrf.mxu0
  %1497 = vmatprep.mubr.f32.mxu0 0.0
  %1498 = vmatmul.mubr.f32.gmra.mxu0 %v795
  %v1499 = vpop.f32.mrf.mxu0
  %v1500 = vadd.f32 0.0, %v1499
  %v1501 = vpop.f32.mrf.mxu0
  %1502 = vmatprep.mubr.f32.mxu0 0.0
  %1503 = vmatmul.mubr.f32.gmra.mxu0 %v798
  %v1504 = vpop.f32.mrf.mxu0
  %v1505 = vadd.f32 0.0, %v1504
  %v1506 = vpop.f32.mrf.mxu0
  %1507 = vmatprep.mubr.f32.mxu0 0.0
  %1508 = vmatmul.mubr.f32.gmra.mxu0 %v801
  %v1509 = vpop.f32.mrf.mxu0
  %v1510 = vadd.f32 0.0, %v1509
  %v1511 = vpop.f32.mrf.mxu0
  %1512 = vmatprep.mubr.f32.mxu0 0.0
  %1513 = vmatmul.mubr.f32.gmra.mxu0 %v1390
  %v1514 = vpop.f32.mrf.mxu0
  %v1515 = vadd.f32 0.0, %v1514
  %v1516 = vpop.f32.mrf.mxu0
  %1517 = vmatprep.mubr.f32.mxu0 0.0
  %1518 = vmatmul.mubr.f32.gmra.mxu0 %v807
  %v1519 = vpop.f32.mrf.mxu0
  %v1520 = vadd.f32 0.0, %v1519
  %v1521 = vpop.f32.mrf.mxu0
  %1522 = vmatprep.mubr.f32.mxu0 0.0
  %1523 = vmatmul.mubr.f32.gmra.mxu0 %v810
  %v1524 = vpop.f32.mrf.mxu0
  %v1525 = vadd.f32 0.0, %v1524
  %v1526 = vpop.f32.mrf.mxu0
  %1527 = vmatprep.mubr.f32.mxu0 0.0
  %1528 = vmatmul.mubr.f32.gmra.mxu0 %v813
  %v1529 = vpop.f32.mrf.mxu0
  %v1530 = vadd.f32 0.0, %v1529
  %v1531 = vpop.f32.mrf.mxu0
  %1532 = vmatprep.mubr.f32.mxu0 0.0
  %1533 = vmatmul.mubr.f32.gmra.mxu0 %v816
  %v1534 = vpop.f32.mrf.mxu0
  %v1535 = vadd.f32 0.0, %v1534
  %v1536 = vpop.f32.mrf.mxu0
  %1537 = vmatprep.mubr.f32.mxu0 0.0
  %1538 = vmatmul.mubr.f32.gmra.mxu0 %v819
  %v1539 = vpop.f32.mrf.mxu0
  %v1540 = vadd.f32 0.0, %v1539
  %v1541 = vpop.f32.mrf.mxu0
  %1542 = vmatprep.mubr.f32.mxu0 0.0
  %1543 = vmatmul.mubr.f32.gmra.mxu0 %v822
  %v1544 = vpop.f32.mrf.mxu0
  %v1545 = vadd.f32 0.0, %v1544
  %v1546 = vpop.f32.mrf.mxu0
  %1547 = vmatprep.mubr.f32.mxu0 0.0
  %1548 = vmatmul.mubr.f32.gmra.mxu0 %v825
  %v1549 = vpop.f32.mrf.mxu0
  %v1550 = vadd.f32 0.0, %v1549
  %v1551 = vpop.f32.mrf.mxu0
  %1552 = vmatprep.mubr.f32.mxu0 0.0
  %1553 = vmatmul.mubr.f32.gmra.mxu0 %v1393
  %v1554 = vpop.f32.mrf.mxu0
  %v1555 = vadd.f32 0.0, %v1554
  %v1556 = vpop.f32.mrf.mxu0
  %1557 = vdwg.mxu0
  %v1558 = vadd.f32 %v1372, %v1480
  %v1559 = vadd.f32 %v1373, %v1485
  %v1560 = vadd.f32 %v1374, %v1490
  %v1561 = vadd.f32 %v1375, %v1495
  %v1562 = vadd.f32 %v1376, %v1500
  %v1563 = vadd.f32 %v1377, %v1505
  %v1564 = vadd.f32 %v1378, %v1510
  %v1565 = vadd.f32 %v1379, %v1515
  %v1566 = vadd.f32 %v1380, %v1520
  %v1567 = vadd.f32 %v1381, %v1525
  %v1568 = vadd.f32 %v1382, %v1530
  %v1569 = vadd.f32 %v1383, %v1535
  %v1570 = vadd.f32 %v1384, %v1540
  %v1571 = vadd.f32 %v1385, %v1545
  %v1572 = vadd.f32 %v1386, %v1550
  %v1573 = vadd.f32 %v1387, %v1555
  %s1574 = scalar_lea.vmem %s4, 768
  %v1575 = vld [vmem:[%s1574] sm:$0xff]
  %v1576 = vld [vmem:[%s1574 + $0x8] sm:$0xff]
  %v1577 = vld [vmem:[%s1574 + $0x10] sm:$0xff]
  %v1578 = vld [vmem:[%s1574 + $0x18] sm:$0xff]
  %v1579 = vld [vmem:[%s1574 + $0x20] sm:$0xff]
  %v1580 = vld [vmem:[%s1574 + $0x28] sm:$0xff]
  %v1581 = vld [vmem:[%s1574 + $0x30] sm:$0xff]
  %v1582 = vld [vmem:[%s1574 + $0x38] sm:$0xff]
  %v1583 = vld [vmem:[%s1574 + $0x40] sm:$0xff]
  %v1584 = vld [vmem:[%s1574 + $0x48] sm:$0xff]
  %v1585 = vld [vmem:[%s1574 + $0x50] sm:$0xff]
  %v1586 = vld [vmem:[%s1574 + $0x58] sm:$0xff]
  %v1587 = vld [vmem:[%s1574 + $0x60] sm:$0xff]
  %v1588 = vld [vmem:[%s1574 + $0x68] sm:$0xff]
  %v1589 = vld [vmem:[%s1574 + $0x70] sm:$0xff]
  %v1590 = vld [vmem:[%s1574 + $0x78] sm:$0xff]
  %1591 = vmatprep.subr.mxu0 0.0
  %1592 = vmatpush1.msra.mxu0 %v1590
  %1593 = vmatprep.subr.mxu0 0.0
  %1594 = vmatpush1.msra.mxu0 %v1589
  %1595 = vmatprep.subr.mxu0 0.0
  %1596 = vmatpush1.msra.mxu0 %v1588
  %1597 = vmatprep.subr.mxu0 0.0
  %1598 = vmatpush1.msra.mxu0 %v1587
  %1599 = vmatprep.subr.mxu0 0.0
  %1600 = vmatpush1.msra.mxu0 %v1586
  %1601 = vmatprep.subr.mxu0 0.0
  %1602 = vmatpush1.msra.mxu0 %v1585
  %1603 = vmatprep.subr.mxu0 0.0
  %1604 = vmatpush1.msra.mxu0 %v1584
  %1605 = vmatprep.subr.mxu0 0.0
  %1606 = vmatpush1.msra.mxu0 %v1583
  %1607 = vmatprep.subr.mxu0 0.0
  %1608 = vmatpush1.msra.mxu0 %v1582
  %1609 = vmatprep.subr.mxu0 0.0
  %1610 = vmatpush1.msra.mxu0 %v1581
  %1611 = vmatprep.subr.mxu0 0.0
  %1612 = vmatpush1.msra.mxu0 %v1580
  %1613 = vmatprep.subr.mxu0 0.0
  %1614 = vmatpush1.msra.mxu0 %v1579
  %1615 = vmatprep.subr.mxu0 0.0
  %1616 = vmatpush1.msra.mxu0 %v1578
  %1617 = vmatprep.subr.mxu0 0.0
  %1618 = vmatpush1.msra.mxu0 %v1577
  %1619 = vmatprep.subr.mxu0 0.0
  %1620 = vmatpush1.msra.mxu0 %v1576
  %1621 = vmatprep.subr.mxu0 0.0
  %1622 = vmatpush1.msra.mxu0 %v1575
  %1623 = vmatprep.subr.mxu0 0.0
  %1624 = vmatpush2.msra.mxu0 0.0
  %1625 = vmatprep.subr.mxu0 0.0
  %1626 = vmatpush2.msra.mxu0 0.0
  %1627 = vmatprep.subr.mxu0 0.0
  %1628 = vmatpush2.msra.mxu0 0.0
  %1629 = vmatprep.subr.mxu0 0.0
  %1630 = vmatpush2.msra.mxu0 0.0
  %1631 = vmatprep.subr.mxu0 0.0
  %1632 = vmatpush2.msra.mxu0 0.0
  %1633 = vmatprep.subr.mxu0 0.0
  %1634 = vmatpush2.msra.mxu0 0.0
  %1635 = vmatprep.subr.mxu0 0.0
  %1636 = vmatpush2.msra.mxu0 0.0
  %1637 = vmatprep.subr.mxu0 0.0
  %1638 = vmatpush2.msra.mxu0 0.0
  %1639 = vmatprep.subr.mxu0 0.0
  %1640 = vmatpush2.msra.mxu0 0.0
  %1641 = vmatprep.subr.mxu0 0.0
  %1642 = vmatpush2.msra.mxu0 0.0
  %1643 = vmatprep.subr.mxu0 0.0
  %1644 = vmatpush2.msra.mxu0 0.0
  %1645 = vmatprep.subr.mxu0 0.0
  %1646 = vmatpush2.msra.mxu0 0.0
  %1647 = vmatprep.subr.mxu0 0.0
  %1648 = vmatpush2.msra.mxu0 0.0
  %1649 = vmatprep.subr.mxu0 0.0
  %1650 = vmatpush2.msra.mxu0 0.0
  %1651 = vmatprep.subr.mxu0 0.0
  %1652 = vmatpush2.msra.mxu0 0.0
  %1653 = vmatprep.subr.mxu0 0.0
  %1654 = vmatpush2.msra.mxu0 0.0
  %1655 = vmatprep.mubr.f32.mxu0 0.0
  %1656 = vmatmul.mubr.f32.gmra.mxu0 %v321
  %v1657 = vpop.f32.mrf.mxu0
  %v1658 = vadd.f32 0.0, %v1657
  %v1659 = vpop.f32.mrf.mxu0
  %1660 = vmatprep.mubr.f32.mxu0 0.0
  %1661 = vmatmul.mubr.f32.gmra.mxu0 %v323
  %v1662 = vpop.f32.mrf.mxu0
  %v1663 = vadd.f32 0.0, %v1662
  %v1664 = vpop.f32.mrf.mxu0
  %1665 = vmatprep.mubr.f32.mxu0 0.0
  %1666 = vmatmul.mubr.f32.gmra.mxu0 %v325
  %v1667 = vpop.f32.mrf.mxu0
  %v1668 = vadd.f32 0.0, %v1667
  %v1669 = vpop.f32.mrf.mxu0
  %1670 = vmatprep.mubr.f32.mxu0 0.0
  %1671 = vmatmul.mubr.f32.gmra.mxu0 %v327
  %v1672 = vpop.f32.mrf.mxu0
  %v1673 = vadd.f32 0.0, %v1672
  %v1674 = vpop.f32.mrf.mxu0
  %1675 = vmatprep.mubr.f32.mxu0 0.0
  %1676 = vmatmul.mubr.f32.gmra.mxu0 %v329
  %v1677 = vpop.f32.mrf.mxu0
  %v1678 = vadd.f32 0.0, %v1677
  %v1679 = vpop.f32.mrf.mxu0
  %1680 = vmatprep.mubr.f32.mxu0 0.0
  %1681 = vmatmul.mubr.f32.gmra.mxu0 %v331
  %v1682 = vpop.f32.mrf.mxu0
  %v1683 = vadd.f32 0.0, %v1682
  %v1684 = vpop.f32.mrf.mxu0
  %1685 = vmatprep.mubr.f32.mxu0 0.0
  %1686 = vmatmul.mubr.f32.gmra.mxu0 %v333
  %v1687 = vpop.f32.mrf.mxu0
  %v1688 = vadd.f32 0.0, %v1687
  %v1689 = vpop.f32.mrf.mxu0
  %1690 = vmatprep.mubr.f32.mxu0 0.0
  %1691 = vmatmul.mubr.f32.gmra.mxu0 %v335
  %v1692 = vpop.f32.mrf.mxu0
  %v1693 = vadd.f32 0.0, %v1692
  %v1694 = vpop.f32.mrf.mxu0
  %1695 = vmatprep.mubr.f32.mxu0 0.0
  %1696 = vmatmul.mubr.f32.gmra.mxu0 %v341
  %v1697 = vpop.f32.mrf.mxu0
  %v1698 = vadd.f32 0.0, %v1697
  %v1699 = vpop.f32.mrf.mxu0
  %1700 = vmatprep.mubr.f32.mxu0 0.0
  %1701 = vmatmul.mubr.f32.gmra.mxu0 %v343
  %v1702 = vpop.f32.mrf.mxu0
  %v1703 = vadd.f32 0.0, %v1702
  %v1704 = vpop.f32.mrf.mxu0
  %1705 = vmatprep.mubr.f32.mxu0 0.0
  %1706 = vmatmul.mubr.f32.gmra.mxu0 %v345
  %v1707 = vpop.f32.mrf.mxu0
  %v1708 = vadd.f32 0.0, %v1707
  %v1709 = vpop.f32.mrf.mxu0
  %1710 = vmatprep.mubr.f32.mxu0 0.0
  %1711 = vmatmul.mubr.f32.gmra.mxu0 %v347
  %v1712 = vpop.f32.mrf.mxu0
  %v1713 = vadd.f32 0.0, %v1712
  %v1714 = vpop.f32.mrf.mxu0
  %1715 = vmatprep.mubr.f32.mxu0 0.0
  %1716 = vmatmul.mubr.f32.gmra.mxu0 %v349
  %v1717 = vpop.f32.mrf.mxu0
  %v1718 = vadd.f32 0.0, %v1717
  %v1719 = vpop.f32.mrf.mxu0
  %1720 = vmatprep.mubr.f32.mxu0 0.0
  %1721 = vmatmul.mubr.f32.gmra.mxu0 %v351
  %v1722 = vpop.f32.mrf.mxu0
  %v1723 = vadd.f32 0.0, %v1722
  %v1724 = vpop.f32.mrf.mxu0
  %1725 = vmatprep.mubr.f32.mxu0 0.0
  %1726 = vmatmul.mubr.f32.gmra.mxu0 %v353
  %v1727 = vpop.f32.mrf.mxu0
  %v1728 = vadd.f32 0.0, %v1727
  %v1729 = vpop.f32.mrf.mxu0
  %1730 = vmatprep.mubr.f32.mxu0 0.0
  %1731 = vmatmul.mubr.f32.gmra.mxu0 %v355
  %v1732 = vpop.f32.mrf.mxu0
  %v1733 = vadd.f32 0.0, %v1732
  %v1734 = vpop.f32.mrf.mxu0
  %1735 = vdwg.mxu0
  %v1736 = vadd.f32 %v1558, %v1658
  %v1737 = vadd.f32 %v1559, %v1663
  %v1738 = vadd.f32 %v1560, %v1668
  %v1739 = vadd.f32 %v1561, %v1673
  %v1740 = vadd.f32 %v1562, %v1678
  %v1741 = vadd.f32 %v1563, %v1683
  %v1742 = vadd.f32 %v1564, %v1688
  %v1743 = vadd.f32 %v1565, %v1693
  %v1744 = vadd.f32 %v1566, %v1698
  %v1745 = vadd.f32 %v1567, %v1703
  %v1746 = vadd.f32 %v1568, %v1708
  %v1747 = vadd.f32 %v1569, %v1713
  %v1748 = vadd.f32 %v1570, %v1718
  %v1749 = vadd.f32 %v1571, %v1723
  %v1750 = vadd.f32 %v1572, %v1728
  %v1751 = vadd.f32 %v1573, %v1733
  %v1756 = vrot.slane %v335, 1
  %v1757 = vrot.slane %v336, 1
  %v1758 = vsel %vm405, %v1756, %v1757
  %v1759 = vrot.slane %v355, 1
  %v1760 = vrot.slane %v356, 1
  %v1761 = vsel %vm405, %v1759, %v1760
  %s1764 = scalar_lea.vmem %s4, 896
  %v1765 = vld [vmem:[%s1764] sm:$0xff]
  %v1766 = vld [vmem:[%s1764 + $0x8] sm:$0xff]
  %v1767 = vld [vmem:[%s1764 + $0x10] sm:$0xff]
  %v1768 = vld [vmem:[%s1764 + $0x18] sm:$0xff]
  %v1769 = vld [vmem:[%s1764 + $0x20] sm:$0xff]
  %v1770 = vld [vmem:[%s1764 + $0x28] sm:$0xff]
  %v1771 = vld [vmem:[%s1764 + $0x30] sm:$0xff]
  %v1772 = vld [vmem:[%s1764 + $0x38] sm:$0xff]
  %v1773 = vld [vmem:[%s1764 + $0x40] sm:$0xff]
  %v1774 = vld [vmem:[%s1764 + $0x48] sm:$0xff]
  %v1775 = vld [vmem:[%s1764 + $0x50] sm:$0xff]
  %v1776 = vld [vmem:[%s1764 + $0x58] sm:$0xff]
  %v1777 = vld [vmem:[%s1764 + $0x60] sm:$0xff]
  %v1778 = vld [vmem:[%s1764 + $0x68] sm:$0xff]
  %v1779 = vld [vmem:[%s1764 + $0x70] sm:$0xff]
  %v1780 = vld [vmem:[%s1764 + $0x78] sm:$0xff]
  %1781 = vmatprep.subr.mxu0 0.0
  %1782 = vmatpush1.msra.mxu0 %v1780
  %1783 = vmatprep.subr.mxu0 0.0
  %1784 = vmatpush1.msra.mxu0 %v1779
  %1785 = vmatprep.subr.mxu0 0.0
  %1786 = vmatpush1.msra.mxu0 %v1778
  %1787 = vmatprep.subr.mxu0 0.0
  %1788 = vmatpush1.msra.mxu0 %v1777
  %1789 = vmatprep.subr.mxu0 0.0
  %1790 = vmatpush1.msra.mxu0 %v1776
  %1791 = vmatprep.subr.mxu0 0.0
  %1792 = vmatpush1.msra.mxu0 %v1775
  %1793 = vmatprep.subr.mxu0 0.0
  %1794 = vmatpush1.msra.mxu0 %v1774
  %1795 = vmatprep.subr.mxu0 0.0
  %1796 = vmatpush1.msra.mxu0 %v1773
  %1797 = vmatprep.subr.mxu0 0.0
  %1798 = vmatpush1.msra.mxu0 %v1772
  %1799 = vmatprep.subr.mxu0 0.0
  %1800 = vmatpush1.msra.mxu0 %v1771
  %1801 = vmatprep.subr.mxu0 0.0
  %1802 = vmatpush1.msra.mxu0 %v1770
  %1803 = vmatprep.subr.mxu0 0.0
  %1804 = vmatpush1.msra.mxu0 %v1769
  %1805 = vmatprep.subr.mxu0 0.0
  %1806 = vmatpush1.msra.mxu0 %v1768
  %1807 = vmatprep.subr.mxu0 0.0
  %1808 = vmatpush1.msra.mxu0 %v1767
  %1809 = vmatprep.subr.mxu0 0.0
  %1810 = vmatpush1.msra.mxu0 %v1766
  %1811 = vmatprep.subr.mxu0 0.0
  %1812 = vmatpush1.msra.mxu0 %v1765
  %1813 = vmatprep.subr.mxu0 0.0
  %1814 = vmatpush2.msra.mxu0 0.0
  %1815 = vmatprep.subr.mxu0 0.0
  %1816 = vmatpush2.msra.mxu0 0.0
  %1817 = vmatprep.subr.mxu0 0.0
  %1818 = vmatpush2.msra.mxu0 0.0
  %1819 = vmatprep.subr.mxu0 0.0
  %1820 = vmatpush2.msra.mxu0 0.0
  %1821 = vmatprep.subr.mxu0 0.0
  %1822 = vmatpush2.msra.mxu0 0.0
  %1823 = vmatprep.subr.mxu0 0.0
  %1824 = vmatpush2.msra.mxu0 0.0
  %1825 = vmatprep.subr.mxu0 0.0
  %1826 = vmatpush2.msra.mxu0 0.0
  %1827 = vmatprep.subr.mxu0 0.0
  %1828 = vmatpush2.msra.mxu0 0.0
  %1829 = vmatprep.subr.mxu0 0.0
  %1830 = vmatpush2.msra.mxu0 0.0
  %1831 = vmatprep.subr.mxu0 0.0
  %1832 = vmatpush2.msra.mxu0 0.0
  %1833 = vmatprep.subr.mxu0 0.0
  %1834 = vmatpush2.msra.mxu0 0.0
  %1835 = vmatprep.subr.mxu0 0.0
  %1836 = vmatpush2.msra.mxu0 0.0
  %1837 = vmatprep.subr.mxu0 0.0
  %1838 = vmatpush2.msra.mxu0 0.0
  %1839 = vmatprep.subr.mxu0 0.0
  %1840 = vmatpush2.msra.mxu0 0.0
  %1841 = vmatprep.subr.mxu0 0.0
  %1842 = vmatpush2.msra.mxu0 0.0
  %1843 = vmatprep.subr.mxu0 0.0
  %1844 = vmatpush2.msra.mxu0 0.0
  %1845 = vmatprep.mubr.f32.mxu0 0.0
  %1846 = vmatmul.mubr.f32.gmra.mxu0 %v414
  %v1847 = vpop.f32.mrf.mxu0
  %v1848 = vadd.f32 0.0, %v1847
  %v1849 = vpop.f32.mrf.mxu0
  %1850 = vmatprep.mubr.f32.mxu0 0.0
  %1851 = vmatmul.mubr.f32.gmra.mxu0 %v417
  %v1852 = vpop.f32.mrf.mxu0
  %v1853 = vadd.f32 0.0, %v1852
  %v1854 = vpop.f32.mrf.mxu0
  %1855 = vmatprep.mubr.f32.mxu0 0.0
  %1856 = vmatmul.mubr.f32.gmra.mxu0 %v420
  %v1857 = vpop.f32.mrf.mxu0
  %v1858 = vadd.f32 0.0, %v1857
  %v1859 = vpop.f32.mrf.mxu0
  %1860 = vmatprep.mubr.f32.mxu0 0.0
  %1861 = vmatmul.mubr.f32.gmra.mxu0 %v423
  %v1862 = vpop.f32.mrf.mxu0
  %v1863 = vadd.f32 0.0, %v1862
  %v1864 = vpop.f32.mrf.mxu0
  %1865 = vmatprep.mubr.f32.mxu0 0.0
  %1866 = vmatmul.mubr.f32.gmra.mxu0 %v426
  %v1867 = vpop.f32.mrf.mxu0
  %v1868 = vadd.f32 0.0, %v1867
  %v1869 = vpop.f32.mrf.mxu0
  %1870 = vmatprep.mubr.f32.mxu0 0.0
  %1871 = vmatmul.mubr.f32.gmra.mxu0 %v429
  %v1872 = vpop.f32.mrf.mxu0
  %v1873 = vadd.f32 0.0, %v1872
  %v1874 = vpop.f32.mrf.mxu0
  %1875 = vmatprep.mubr.f32.mxu0 0.0
  %1876 = vmatmul.mubr.f32.gmra.mxu0 %v1204
  %v1877 = vpop.f32.mrf.mxu0
  %v1878 = vadd.f32 0.0, %v1877
  %v1879 = vpop.f32.mrf.mxu0
  %1880 = vmatprep.mubr.f32.mxu0 0.0
  %1881 = vmatmul.mubr.f32.gmra.mxu0 %v1758
  %v1882 = vpop.f32.mrf.mxu0
  %v1883 = vadd.f32 0.0, %v1882
  %v1884 = vpop.f32.mrf.mxu0
  %1885 = vmatprep.mubr.f32.mxu0 0.0
  %1886 = vmatmul.mubr.f32.gmra.mxu0 %v438
  %v1887 = vpop.f32.mrf.mxu0
  %v1888 = vadd.f32 0.0, %v1887
  %v1889 = vpop.f32.mrf.mxu0
  %1890 = vmatprep.mubr.f32.mxu0 0.0
  %1891 = vmatmul.mubr.f32.gmra.mxu0 %v441
  %v1892 = vpop.f32.mrf.mxu0
  %v1893 = vadd.f32 0.0, %v1892
  %v1894 = vpop.f32.mrf.mxu0
  %1895 = vmatprep.mubr.f32.mxu0 0.0
  %1896 = vmatmul.mubr.f32.gmra.mxu0 %v444
  %v1897 = vpop.f32.mrf.mxu0
  %v1898 = vadd.f32 0.0, %v1897
  %v1899 = vpop.f32.mrf.mxu0
  %1900 = vmatprep.mubr.f32.mxu0 0.0
  %1901 = vmatmul.mubr.f32.gmra.mxu0 %v447
  %v1902 = vpop.f32.mrf.mxu0
  %v1903 = vadd.f32 0.0, %v1902
  %v1904 = vpop.f32.mrf.mxu0
  %1905 = vmatprep.mubr.f32.mxu0 0.0
  %1906 = vmatmul.mubr.f32.gmra.mxu0 %v450
  %v1907 = vpop.f32.mrf.mxu0
  %v1908 = vadd.f32 0.0, %v1907
  %v1909 = vpop.f32.mrf.mxu0
  %1910 = vmatprep.mubr.f32.mxu0 0.0
  %1911 = vmatmul.mubr.f32.gmra.mxu0 %v453
  %v1912 = vpop.f32.mrf.mxu0
  %v1913 = vadd.f32 0.0, %v1912
  %v1914 = vpop.f32.mrf.mxu0
  %1915 = vmatprep.mubr.f32.mxu0 0.0
  %1916 = vmatmul.mubr.f32.gmra.mxu0 %v1207
  %v1917 = vpop.f32.mrf.mxu0
  %v1918 = vadd.f32 0.0, %v1917
  %v1919 = vpop.f32.mrf.mxu0
  %1920 = vmatprep.mubr.f32.mxu0 0.0
  %1921 = vmatmul.mubr.f32.gmra.mxu0 %v1761
  %v1922 = vpop.f32.mrf.mxu0
  %v1923 = vadd.f32 0.0, %v1922
  %v1924 = vpop.f32.mrf.mxu0
  %1925 = vdwg.mxu0
  %v1926 = vadd.f32 %v1736, %v1848
  %v1927 = vadd.f32 %v1737, %v1853
  %v1928 = vadd.f32 %v1738, %v1858
  %v1929 = vadd.f32 %v1739, %v1863
  %v1930 = vadd.f32 %v1740, %v1868
  %v1931 = vadd.f32 %v1741, %v1873
  %v1932 = vadd.f32 %v1742, %v1878
  %v1933 = vadd.f32 %v1743, %v1883
  %v1934 = vadd.f32 %v1744, %v1888
  %v1935 = vadd.f32 %v1745, %v1893
  %v1936 = vadd.f32 %v1746, %v1898
  %v1937 = vadd.f32 %v1747, %v1903
  %v1938 = vadd.f32 %v1748, %v1908
  %v1939 = vadd.f32 %v1749, %v1913
  %v1940 = vadd.f32 %v1750, %v1918
  %v1941 = vadd.f32 %v1751, %v1923
  %v1942 = vrot.slane %v335, 2
  %v1943 = vrot.slane %v336, 2
  %v1944 = vsel %vm777, %v1942, %v1943
  %v1945 = vrot.slane %v355, 2
  %v1946 = vrot.slane %v356, 2
  %v1947 = vsel %vm777, %v1945, %v1946
  %s1950 = scalar_lea.vmem %s4, 1024
  %v1951 = vld [vmem:[%s1950] sm:$0xff]
  %v1952 = vld [vmem:[%s1950 + $0x8] sm:$0xff]
  %v1953 = vld [vmem:[%s1950 + $0x10] sm:$0xff]
  %v1954 = vld [vmem:[%s1950 + $0x18] sm:$0xff]
  %v1955 = vld [vmem:[%s1950 + $0x20] sm:$0xff]
  %v1956 = vld [vmem:[%s1950 + $0x28] sm:$0xff]
  %v1957 = vld [vmem:[%s1950 + $0x30] sm:$0xff]
  %v1958 = vld [vmem:[%s1950 + $0x38] sm:$0xff]
  %v1959 = vld [vmem:[%s1950 + $0x40] sm:$0xff]
  %v1960 = vld [vmem:[%s1950 + $0x48] sm:$0xff]
  %v1961 = vld [vmem:[%s1950 + $0x50] sm:$0xff]
  %v1962 = vld [vmem:[%s1950 + $0x58] sm:$0xff]
  %v1963 = vld [vmem:[%s1950 + $0x60] sm:$0xff]
  %v1964 = vld [vmem:[%s1950 + $0x68] sm:$0xff]
  %v1965 = vld [vmem:[%s1950 + $0x70] sm:$0xff]
  %v1966 = vld [vmem:[%s1950 + $0x78] sm:$0xff]
  %1967 = vmatprep.subr.mxu0 0.0
  %1968 = vmatpush1.msra.mxu0 %v1966
  %1969 = vmatprep.subr.mxu0 0.0
  %1970 = vmatpush1.msra.mxu0 %v1965
  %1971 = vmatprep.subr.mxu0 0.0
  %1972 = vmatpush1.msra.mxu0 %v1964
  %1973 = vmatprep.subr.mxu0 0.0
  %1974 = vmatpush1.msra.mxu0 %v1963
  %1975 = vmatprep.subr.mxu0 0.0
  %1976 = vmatpush1.msra.mxu0 %v1962
  %1977 = vmatprep.subr.mxu0 0.0
  %1978 = vmatpush1.msra.mxu0 %v1961
  %1979 = vmatprep.subr.mxu0 0.0
  %1980 = vmatpush1.msra.mxu0 %v1960
  %1981 = vmatprep.subr.mxu0 0.0
  %1982 = vmatpush1.msra.mxu0 %v1959
  %1983 = vmatprep.subr.mxu0 0.0
  %1984 = vmatpush1.msra.mxu0 %v1958
  %1985 = vmatprep.subr.mxu0 0.0
  %1986 = vmatpush1.msra.mxu0 %v1957
  %1987 = vmatprep.subr.mxu0 0.0
  %1988 = vmatpush1.msra.mxu0 %v1956
  %1989 = vmatprep.subr.mxu0 0.0
  %1990 = vmatpush1.msra.mxu0 %v1955
  %1991 = vmatprep.subr.mxu0 0.0
  %1992 = vmatpush1.msra.mxu0 %v1954
  %1993 = vmatprep.subr.mxu0 0.0
  %1994 = vmatpush1.msra.mxu0 %v1953
  %1995 = vmatprep.subr.mxu0 0.0
  %1996 = vmatpush1.msra.mxu0 %v1952
  %1997 = vmatprep.subr.mxu0 0.0
  %1998 = vmatpush1.msra.mxu0 %v1951
  %1999 = vmatprep.subr.mxu0 0.0
  %2000 = vmatpush2.msra.mxu0 0.0
  %2001 = vmatprep.subr.mxu0 0.0
  %2002 = vmatpush2.msra.mxu0 0.0
  %2003 = vmatprep.subr.mxu0 0.0
  %2004 = vmatpush2.msra.mxu0 0.0
  %2005 = vmatprep.subr.mxu0 0.0
  %2006 = vmatpush2.msra.mxu0 0.0
  %2007 = vmatprep.subr.mxu0 0.0
  %2008 = vmatpush2.msra.mxu0 0.0
  %2009 = vmatprep.subr.mxu0 0.0
  %2010 = vmatpush2.msra.mxu0 0.0
  %2011 = vmatprep.subr.mxu0 0.0
  %2012 = vmatpush2.msra.mxu0 0.0
  %2013 = vmatprep.subr.mxu0 0.0
  %2014 = vmatpush2.msra.mxu0 0.0
  %2015 = vmatprep.subr.mxu0 0.0
  %2016 = vmatpush2.msra.mxu0 0.0
  %2017 = vmatprep.subr.mxu0 0.0
  %2018 = vmatpush2.msra.mxu0 0.0
  %2019 = vmatprep.subr.mxu0 0.0
  %2020 = vmatpush2.msra.mxu0 0.0
  %2021 = vmatprep.subr.mxu0 0.0
  %2022 = vmatpush2.msra.mxu0 0.0
  %2023 = vmatprep.subr.mxu0 0.0
  %2024 = vmatpush2.msra.mxu0 0.0
  %2025 = vmatprep.subr.mxu0 0.0
  %2026 = vmatpush2.msra.mxu0 0.0
  %2027 = vmatprep.subr.mxu0 0.0
  %2028 = vmatpush2.msra.mxu0 0.0
  %2029 = vmatprep.subr.mxu0 0.0
  %2030 = vmatpush2.msra.mxu0 0.0
  %2031 = vmatprep.mubr.f32.mxu0 0.0
  %2032 = vmatmul.mubr.f32.gmra.mxu0 %v786
  %v2033 = vpop.f32.mrf.mxu0
  %v2034 = vadd.f32 0.0, %v2033
  %v2035 = vpop.f32.mrf.mxu0
  %2036 = vmatprep.mubr.f32.mxu0 0.0
  %2037 = vmatmul.mubr.f32.gmra.mxu0 %v789
  %v2038 = vpop.f32.mrf.mxu0
  %v2039 = vadd.f32 0.0, %v2038
  %v2040 = vpop.f32.mrf.mxu0
  %2041 = vmatprep.mubr.f32.mxu0 0.0
  %2042 = vmatmul.mubr.f32.gmra.mxu0 %v792
  %v2043 = vpop.f32.mrf.mxu0
  %v2044 = vadd.f32 0.0, %v2043
  %v2045 = vpop.f32.mrf.mxu0
  %2046 = vmatprep.mubr.f32.mxu0 0.0
  %2047 = vmatmul.mubr.f32.gmra.mxu0 %v795
  %v2048 = vpop.f32.mrf.mxu0
  %v2049 = vadd.f32 0.0, %v2048
  %v2050 = vpop.f32.mrf.mxu0
  %2051 = vmatprep.mubr.f32.mxu0 0.0
  %2052 = vmatmul.mubr.f32.gmra.mxu0 %v798
  %v2053 = vpop.f32.mrf.mxu0
  %v2054 = vadd.f32 0.0, %v2053
  %v2055 = vpop.f32.mrf.mxu0
  %2056 = vmatprep.mubr.f32.mxu0 0.0
  %2057 = vmatmul.mubr.f32.gmra.mxu0 %v801
  %v2058 = vpop.f32.mrf.mxu0
  %v2059 = vadd.f32 0.0, %v2058
  %v2060 = vpop.f32.mrf.mxu0
  %2061 = vmatprep.mubr.f32.mxu0 0.0
  %2062 = vmatmul.mubr.f32.gmra.mxu0 %v1390
  %v2063 = vpop.f32.mrf.mxu0
  %v2064 = vadd.f32 0.0, %v2063
  %v2065 = vpop.f32.mrf.mxu0
  %2066 = vmatprep.mubr.f32.mxu0 0.0
  %2067 = vmatmul.mubr.f32.gmra.mxu0 %v1944
  %v2068 = vpop.f32.mrf.mxu0
  %v2069 = vadd.f32 0.0, %v2068
  %v2070 = vpop.f32.mrf.mxu0
  %2071 = vmatprep.mubr.f32.mxu0 0.0
  %2072 = vmatmul.mubr.f32.gmra.mxu0 %v810
  %v2073 = vpop.f32.mrf.mxu0
  %v2074 = vadd.f32 0.0, %v2073
  %v2075 = vpop.f32.mrf.mxu0
  %2076 = vmatprep.mubr.f32.mxu0 0.0
  %2077 = vmatmul.mubr.f32.gmra.mxu0 %v813
  %v2078 = vpop.f32.mrf.mxu0
  %v2079 = vadd.f32 0.0, %v2078
  %v2080 = vpop.f32.mrf.mxu0
  %2081 = vmatprep.mubr.f32.mxu0 0.0
  %2082 = vmatmul.mubr.f32.gmra.mxu0 %v816
  %v2083 = vpop.f32.mrf.mxu0
  %v2084 = vadd.f32 0.0, %v2083
  %v2085 = vpop.f32.mrf.mxu0
  %2086 = vmatprep.mubr.f32.mxu0 0.0
  %2087 = vmatmul.mubr.f32.gmra.mxu0 %v819
  %v2088 = vpop.f32.mrf.mxu0
  %v2089 = vadd.f32 0.0, %v2088
  %v2090 = vpop.f32.mrf.mxu0
  %2091 = vmatprep.mubr.f32.mxu0 0.0
  %2092 = vmatmul.mubr.f32.gmra.mxu0 %v822
  %v2093 = vpop.f32.mrf.mxu0
  %v2094 = vadd.f32 0.0, %v2093
  %v2095 = vpop.f32.mrf.mxu0
  %2096 = vmatprep.mubr.f32.mxu0 0.0
  %2097 = vmatmul.mubr.f32.gmra.mxu0 %v825
  %v2098 = vpop.f32.mrf.mxu0
  %v2099 = vadd.f32 0.0, %v2098
  %v2100 = vpop.f32.mrf.mxu0
  %2101 = vmatprep.mubr.f32.mxu0 0.0
  %2102 = vmatmul.mubr.f32.gmra.mxu0 %v1393
  %v2103 = vpop.f32.mrf.mxu0
  %v2104 = vadd.f32 0.0, %v2103
  %v2105 = vpop.f32.mrf.mxu0
  %2106 = vmatprep.mubr.f32.mxu0 0.0
  %2107 = vmatmul.mubr.f32.gmra.mxu0 %v1947
  %v2108 = vpop.f32.mrf.mxu0
  %v2109 = vadd.f32 0.0, %v2108
  %v2110 = vpop.f32.mrf.mxu0
  %2111 = vdwg.mxu0
  %v2112 = vadd.f32 %v1926, %v2034
  %v2113 = vadd.f32 %v1927, %v2039
  %v2114 = vadd.f32 %v1928, %v2044
  %v2115 = vadd.f32 %v1929, %v2049
  %v2116 = vadd.f32 %v1930, %v2054
  %v2117 = vadd.f32 %v1931, %v2059
  %v2118 = vadd.f32 %v1932, %v2064
  %v2119 = vadd.f32 %v1933, %v2069
  %v2120 = vadd.f32 %v1934, %v2074
  %v2121 = vadd.f32 %v1935, %v2079
  %v2122 = vadd.f32 %v1936, %v2084
  %v2123 = vadd.f32 %v1937, %v2089
  %v2124 = vadd.f32 %v1938, %v2094
  %v2125 = vadd.f32 %v1939, %v2099
  %v2126 = vadd.f32 %v1940, %v2104
  %v2127 = vadd.f32 %v1941, %v2109
  %v2128 = vld [vmem:[%s5] sm:$0xff]
  %v2129 = vld [vmem:[%s5 + $0x8] sm:$0xff]
  %v2130 = vld [vmem:[%s5 + $0x10] sm:$0xff]
  %v2131 = vld [vmem:[%s5 + $0x18] sm:$0xff]
  %v2132 = vld [vmem:[%s5 + $0x20] sm:$0xff]
  %v2133 = vld [vmem:[%s5 + $0x28] sm:$0xff]
  %v2134 = vld [vmem:[%s5 + $0x30] sm:$0xff]
  %v2135 = vld [vmem:[%s5 + $0x38] sm:$0xff]
  %v2136 = vld [vmem:[%s5 + $0x40] sm:$0xff]
  %v2137 = vld [vmem:[%s5 + $0x48] sm:$0xff]
  %v2138 = vld [vmem:[%s5 + $0x50] sm:$0xff]
  %v2139 = vld [vmem:[%s5 + $0x58] sm:$0xff]
  %v2140 = vld [vmem:[%s5 + $0x60] sm:$0xff]
  %v2141 = vld [vmem:[%s5 + $0x68] sm:$0xff]
  %v2142 = vld [vmem:[%s5 + $0x70] sm:$0xff]
  %v2143 = vld [vmem:[%s5 + $0x78] sm:$0xff]
  %v2144 = vadd.f32 %v2112, %v2128
  %v2145 = vadd.f32 %v2113, %v2129
  %v2146 = vadd.f32 %v2114, %v2130
  %v2147 = vadd.f32 %v2115, %v2131
  %v2148 = vadd.f32 %v2116, %v2132
  %v2149 = vadd.f32 %v2117, %v2133
  %v2150 = vadd.f32 %v2118, %v2134
  %v2151 = vadd.f32 %v2119, %v2135
  %v2152 = vadd.f32 %v2120, %v2136
  %v2153 = vadd.f32 %v2121, %v2137
  %v2154 = vadd.f32 %v2122, %v2138
  %v2155 = vadd.f32 %v2123, %v2139
  %v2156 = vadd.f32 %v2124, %v2140
  %v2157 = vadd.f32 %v2125, %v2141
  %v2158 = vadd.f32 %v2126, %v2142
  %v2159 = vadd.f32 %v2127, %v2143
  %2160 = vst [vmem:[%s6] sm:$0xff] %v2144
  %2161 = vst [vmem:[%s6 + $0x8] sm:$0xff] %v2145
  %2162 = vst [vmem:[%s6 + $0x10] sm:$0xff] %v2146
  %2163 = vst [vmem:[%s6 + $0x18] sm:$0xff] %v2147
  %2164 = vst [vmem:[%s6 + $0x20] sm:$0xff] %v2148
  %2165 = vst [vmem:[%s6 + $0x28] sm:$0xff] %v2149
  %2166 = vst [vmem:[%s6 + $0x30] sm:$0xff] %v2150
  %2167 = vst [vmem:[%s6 + $0x38] sm:$0xff] %v2151
  %2168 = vst [vmem:[%s6 + $0x40] sm:$0xff] %v2152
  %2169 = vst [vmem:[%s6 + $0x48] sm:$0xff] %v2153
  %2170 = vst [vmem:[%s6 + $0x50] sm:$0xff] %v2154
  %2171 = vst [vmem:[%s6 + $0x58] sm:$0xff] %v2155
  %2172 = vst [vmem:[%s6 + $0x60] sm:$0xff] %v2156
  %2173 = vst [vmem:[%s6 + $0x68] sm:$0xff] %v2157
  %2174 = vst [vmem:[%s6 + $0x70] sm:$0xff] %v2158
  %2175 = vst [vmem:[%s6 + $0x78] sm:$0xff] %v2159
  // Predicated region
  $region26: #{preact_block_forward.3} parent=0 // pred_check
    _
  $region27: #{preact_block_forward.3} parent=0 // pred_check_branch
    %2177 = sbr.rel (0) target = $region29
  $region28: #{preact_block_forward.3} parent=0 // pred_region
    _
  $region29: #{preact_block_forward.3} parent=0 // pred_fallthru
    _
  // Predicated region
  $region30: #{preact_block_forward.3} parent=0 // pred_check
    _
  $region31: #{preact_block_forward.3} parent=0 // pred_check_branch
    %2179 = sbr.rel (0) target = $region33
  $region32: #{preact_block_forward.3} parent=0 // pred_region
    _
  $region33: #{preact_block_forward.3} parent=0 // pred_fallthru
    _

// kernel: preact_block_forward.2
$region0: #{preact_block_forward.2}
  #allocation0 [shape = 'u32[]', space=smem, size = 0x4, offset = 0x4, fixed_abs, tag = 'smem constant byte address 0x4 - core index']
  #allocation1 [shape = 'u32[144,128]{1,0:T(1,128)}', space=vmem, size = 0x12000, scoped, tag = 'internal scratch']
  %s0 = inlined_call_operand.vmem [shape: f32[2,36,16,128], index: 0, kind: input, shape index: {}]
  %s1 = inlined_call_operand.vmem [shape: f32[36,16,1], index: 1, kind: input, shape index: {}]
  %s2 = inlined_call_operand.vmem [shape: f32[1,128], index: 2, kind: input, shape index: {}]
  %s3 = inlined_call_operand.vmem [shape: f32[1,128], index: 3, kind: input, shape index: {}]
  %s4 = inlined_call_operand.vmem [shape: f32[9,128,128], index: 4, kind: input, shape index: {}]
  %s5 = inlined_call_operand.vmem [shape: f32[128,128], index: 5, kind: input, shape index: {}]
  %s6 = inlined_call_operand.vmem [shape: f32[2,64,128], index: 6, kind: output, shape index: {0}]
  %s7 = inlined_call_operand.vmem [shape: f32[2,64,128], index: 7, kind: output, shape index: {1}]
  %8 = xla_tuple %s6, %s7
  %s9 = sld [smem:[#allocation0]]
  $region42: #{preact_block_forward.2} parent=0
    _
  %s11 = ssub.s32 1, %s9
  %s12 = scalar_select 0, %s11, %s9
  // Predicated region
  $region2: #{preact_block_forward.2} parent=0 // pred_check
    _
  $region3: #{preact_block_forward.2} parent=0 // pred_check_branch
    %14 = sbr.rel (0) target = $region5
  $region4: #{preact_block_forward.2} parent=0 // pred_region
    _
  $region5: #{preact_block_forward.2} parent=0 // pred_fallthru
    _
  // Predicated region
  $region6: #{preact_block_forward.2} parent=0 // pred_check
    _
  $region7: #{preact_block_forward.2} parent=0 // pred_check_branch
    %16 = sbr.rel (0) target = $region9
  $region8: #{preact_block_forward.2} parent=0 // pred_region
    _
  $region9: #{preact_block_forward.2} parent=0 // pred_fallthru
    _
  // Predicated region
  $region10: #{preact_block_forward.2} parent=0 // pred_check
    _
  $region11: #{preact_block_forward.2} parent=0 // pred_check_branch
    %18 = sbr.rel (0) target = $region13
  $region12: #{preact_block_forward.2} parent=0 // pred_region
    _
  $region13: #{preact_block_forward.2} parent=0 // pred_fallthru
    _
  // Predicated region
  $region14: #{preact_block_forward.2} parent=0 // pred_check
    _
  $region15: #{preact_block_forward.2} parent=0 // pred_check_branch
    %20 = sbr.rel (0) target = $region17
  $region16: #{preact_block_forward.2} parent=0 // pred_region
    _
  $region17: #{preact_block_forward.2} parent=0 // pred_fallthru
    _
  // Predicated region
  $region18: #{preact_block_forward.2} parent=0 // pred_check
    _
  $region19: #{preact_block_forward.2} parent=0 // pred_check_branch
    %22 = sbr.rel (0) target = $region21
  $region20: #{preact_block_forward.2} parent=0 // pred_region
    _
  $region21: #{preact_block_forward.2} parent=0 // pred_fallthru
    _
  // Predicated region
  $region22: #{preact_block_forward.2} parent=0 // pred_check
    _
  $region23: #{preact_block_forward.2} parent=0 // pred_check_branch
    %24 = sbr.rel (0) target = $region25
  $region24: #{preact_block_forward.2} parent=0 // pred_region
    _
  $region25: #{preact_block_forward.2} parent=0 // pred_fallthru
    _
  %v25 = vld [vmem:[%s0] sm:$0xff]
  %v26 = vld [vmem:[%s0 + $0x8] sm:$0xff]
  %v27 = vld [vmem:[%s0 + $0x10] sm:$0xff]
  %v28 = vld [vmem:[%s0 + $0x18] sm:$0xff]
  %v29 = vld [vmem:[%s0 + $0x20] sm:$0xff]
  %v30 = vld [vmem:[%s0 + $0x28] sm:$0xff]
  %v31 = vld [vmem:[%s0 + $0x30] sm:$0xff]
  %v32 = vld [vmem:[%s0 + $0x38] sm:$0xff]
  %v33 = vld [vmem:[%s0 + $0x40] sm:$0xff]
  %v34 = vld [vmem:[%s0 + $0x48] sm:$0xff]
  %v35 = vld [vmem:[%s0 + $0x50] sm:$0xff]
  %v36 = vld [vmem:[%s0 + $0x58] sm:$0xff]
  %v37 = vld [vmem:[%s0 + $0x60] sm:$0xff]
  %v38 = vld [vmem:[%s0 + $0x68] sm:$0xff]
  %v39 = vld [vmem:[%s0 + $0x70] sm:$0xff]
  %v40 = vld [vmem:[%s0 + $0x78] sm:$0xff]
  %v41 = vld [vmem:[%s0 + $0x80] sm:$0xff]
  %v42 = vld [vmem:[%s0 + $0x88] sm:$0xff]
  %v43 = vld [vmem:[%s0 + $0x90] sm:$0xff]
  %v44 = vld [vmem:[%s0 + $0xa0] sm:$0xff]
  %v45 = vld [vmem:[%s0 + $0xb0] sm:$0xff]
  %v46 = vld [vmem:[%s0 + $0xc0] sm:$0xff]
  %v47 = vld [vmem:[%s0 + $0xd0] sm:$0xff]
  %v48 = vld [vmem:[%s0 + $0xe0] sm:$0xff]
  %v49 = vld [vmem:[%s0 + $0xf0] sm:$0xff]
  %v50 = vld [vmem:[%s0 + $0x100] sm:$0xff]
  %v51 = vld [vmem:[%s0 + $0x110] sm:$0xff]
  %v52 = vld [vmem:[%s0 + $0x120] sm:$0xff]
  %v53 = vld [vmem:[%s0 + $0x128] sm:$0xff]
  %v54 = vld [vmem:[%s0 + $0x130] sm:$0xff]
  %v55 = vld [vmem:[%s0 + $0x138] sm:$0xff]
  %v56 = vld [vmem:[%s0 + $0x140] sm:$0xff]
  %v57 = vld [vmem:[%s0 + $0x148] sm:$0xff]
  %v58 = vld [vmem:[%s0 + $0x150] sm:$0xff]
  %v59 = vld [vmem:[%s0 + $0x158] sm:$0xff]
  %v60 = vld [vmem:[%s0 + $0x160] sm:$0xff]
  %v61 = vld [vmem:[%s0 + $0x168] sm:$0xff]
  %v62 = vld [vmem:[%s0 + $0x170] sm:$0xff]
  %v63 = vld [vmem:[%s0 + $0x178] sm:$0xff]
  %v64 = vld [vmem:[%s0 + $0x180] sm:$0xff]
  %v65 = vld [vmem:[%s0 + $0x188] sm:$0xff]
  %v66 = vld [vmem:[%s0 + $0x190] sm:$0xff]
  %v67 = vld [vmem:[%s0 + $0x198] sm:$0xff]
  %v68 = vld [vmem:[%s0 + $0x1b0] sm:$0xff]
  %v69 = vld [vmem:[%s0 + $0x1c0] sm:$0xff]
  %v70 = vld [vmem:[%s0 + $0x1d0] sm:$0xff]
  %v71 = vld [vmem:[%s0 + $0x1e0] sm:$0xff]
  %v72 = vld [vmem:[%s0 + $0x1f0] sm:$0xff]
  %v73 = vld [vmem:[%s0 + $0x200] sm:$0xff]
  %v74 = vld [vmem:[%s0 + $0x210] sm:$0xff]
  %v75 = vld [vmem:[%s0 + $0x220] sm:$0xff]
  %v76 = vld [vmem:[%s0 + $0x240] sm:$0xff]
  %v77 = vld [vmem:[%s0 + $0x248] sm:$0xff]
  %v78 = vld [vmem:[%s0 + $0x250] sm:$0xff]
  %v79 = vld [vmem:[%s0 + $0x258] sm:$0xff]
  %v80 = vld [vmem:[%s0 + $0x260] sm:$0xff]
  %v81 = vld [vmem:[%s0 + $0x268] sm:$0xff]
  %v82 = vld [vmem:[%s0 + $0x270] sm:$0xff]
  %v83 = vld [vmem:[%s0 + $0x278] sm:$0xff]
  %v84 = vld [vmem:[%s0 + $0x280] sm:$0xff]
  %v85 = vld [vmem:[%s0 + $0x288] sm:$0xff]
  %v86 = vld [vmem:[%s0 + $0x290] sm:$0xff]
  %v87 = vld [vmem:[%s0 + $0x298] sm:$0xff]
  %v88 = vld [vmem:[%s0 + $0x2a0] sm:$0xff]
  %v89 = vld [vmem:[%s0 + $0x2a8] sm:$0xff]
  %v90 = vld [vmem:[%s0 + $0x2b0] sm:$0xff]
  %v91 = vld [vmem:[%s0 + $0x2b8] sm:$0xff]
  %v92 = vld [vmem:[%s0 + $0x2c0] sm:$0xff]
  %v93 = vld [vmem:[%s0 + $0x2c8] sm:$0xff]
  %v94 = vld [vmem:[%s0 + $0x2d0] sm:$0xff]
  %v95 = vld [vmem:[%s0 + $0x2e0] sm:$0xff]
  %v96 = vld [vmem:[%s0 + $0x2f0] sm:$0xff]
  %v97 = vld [vmem:[%s0 + $0x300] sm:$0xff]
  %v98 = vld [vmem:[%s0 + $0x310] sm:$0xff]
  %v99 = vld [vmem:[%s0 + $0x320] sm:$0xff]
  %v100 = vld [vmem:[%s0 + $0x330] sm:$0xff]
  %v101 = vld [vmem:[%s0 + $0x340] sm:$0xff]
  %v102 = vld [vmem:[%s0 + $0x350] sm:$0xff]
  %v103 = vld [vmem:[%s0 + $0x360] sm:$0xff]
  %v104 = vld [vmem:[%s0 + $0x368] sm:$0xff]
  %v105 = vld [vmem:[%s0 + $0x370] sm:$0xff]
  %v106 = vld [vmem:[%s0 + $0x378] sm:$0xff]
  %v107 = vld [vmem:[%s0 + $0x380] sm:$0xff]
  %v108 = vld [vmem:[%s0 + $0x388] sm:$0xff]
  %v109 = vld [vmem:[%s0 + $0x390] sm:$0xff]
  %v110 = vld [vmem:[%s0 + $0x398] sm:$0xff]
  %v111 = vld [vmem:[%s0 + $0x3a0] sm:$0xff]
  %v112 = vld [vmem:[%s0 + $0x3a8] sm:$0xff]
  %v113 = vld [vmem:[%s0 + $0x3b0] sm:$0xff]
  %v114 = vld [vmem:[%s0 + $0x3b8] sm:$0xff]
  %v115 = vld [vmem:[%s0 + $0x3c0] sm:$0xff]
  %v116 = vld [vmem:[%s0 + $0x3c8] sm:$0xff]
  %v117 = vld [vmem:[%s0 + $0x3d0] sm:$0xff]
  %v118 = vld [vmem:[%s0 + $0x3d8] sm:$0xff]
  %v119 = vld [vmem:[%s0 + $0x3f0] sm:$0xff]
  %v120 = vld [vmem:[%s0 + $0x400] sm:$0xff]
  %v121 = vld [vmem:[%s0 + $0x410] sm:$0xff]
  %v122 = vld [vmem:[%s0 + $0x420] sm:$0xff]
  %v123 = vld [vmem:[%s0 + $0x430] sm:$0xff]
  %v124 = vld [vmem:[%s0 + $0x440] sm:$0xff]
  %v125 = vld [vmem:[%s0 + $0x450] sm:$0xff]
  %v126 = vld [vmem:[%s0 + $0x460] sm:$0xff]
  %v127 = vld [vmem:[%s2] sm:$0x1]
  %v129 = vlaneseq
  %v130 = vshrl.u32 %v129, 7
  %v131 = vsub.s32 0, %v130
  %v132 = vrot.slane %v127, %v131
  %v134 = vmul.f32 %v25, %v132
  %v135 = vmul.f32 %v26, %v132
  %v136 = vmul.f32 %v27, %v132
  %v137 = vmul.f32 %v28, %v132
  %v138 = vmul.f32 %v29, %v132
  %v139 = vmul.f32 %v30, %v132
  %v140 = vmul.f32 %v31, %v132
  %v141 = vmul.f32 %v32, %v132
  %v142 = vmul.f32 %v33, %v132
  %v143 = vmul.f32 %v34, %v132
  %v144 = vmul.f32 %v35, %v132
  %v145 = vmul.f32 %v36, %v132
  %v146 = vmul.f32 %v37, %v132
  %v147 = vmul.f32 %v38, %v132
  %v148 = vmul.f32 %v39, %v132
  %v149 = vmul.f32 %v40, %v132
  %v150 = vmul.f32 %v41, %v132
  %v151 = vmul.f32 %v42, %v132
  %v152 = vmul.f32 %v43, %v132
  %v153 = vmul.f32 %v44, %v132
  %v154 = vmul.f32 %v45, %v132
  %v155 = vmul.f32 %v46, %v132
  %v156 = vmul.f32 %v47, %v132
  %v157 = vmul.f32 %v48, %v132
  %v158 = vmul.f32 %v49, %v132
  %v159 = vmul.f32 %v50, %v132
  %v160 = vmul.f32 %v51, %v132
  %v161 = vmul.f32 %v52, %v132
  %v162 = vmul.f32 %v53, %v132
  %v163 = vmul.f32 %v54, %v132
  %v164 = vmul.f32 %v55, %v132
  %v165 = vmul.f32 %v56, %v132
  %v166 = vmul.f32 %v57, %v132
  %v167 = vmul.f32 %v58, %v132
  %v168 = vmul.f32 %v59, %v132
  %v169 = vmul.f32 %v60, %v132
  %v170 = vmul.f32 %v61, %v132
  %v171 = vmul.f32 %v62, %v132
  %v172 = vmul.f32 %v63, %v132
  %v173 = vmul.f32 %v64, %v132
  %v174 = vmul.f32 %v65, %v132
  %v175 = vmul.f32 %v66, %v132
  %v176 = vmul.f32 %v67, %v132
  %v177 = vmul.f32 %v68, %v132
  %v178 = vmul.f32 %v69, %v132
  %v179 = vmul.f32 %v70, %v132
  %v180 = vmul.f32 %v71, %v132
  %v181 = vmul.f32 %v72, %v132
  %v182 = vmul.f32 %v73, %v132
  %v183 = vmul.f32 %v74, %v132
  %v184 = vmul.f32 %v75, %v132
  %v185 = vmul.f32 %v76, %v132
  %v186 = vmul.f32 %v77, %v132
  %v187 = vmul.f32 %v78, %v132
  %v188 = vmul.f32 %v79, %v132
  %v189 = vmul.f32 %v80, %v132
  %v190 = vmul.f32 %v81, %v132
  %v191 = vmul.f32 %v82, %v132
  %v192 = vmul.f32 %v83, %v132
  %v193 = vmul.f32 %v84, %v132
  %v194 = vmul.f32 %v85, %v132
  %v195 = vmul.f32 %v86, %v132
  %v196 = vmul.f32 %v87, %v132
  %v197 = vmul.f32 %v88, %v132
  %v198 = vmul.f32 %v89, %v132
  %v199 = vmul.f32 %v90, %v132
  %v200 = vmul.f32 %v91, %v132
  %v201 = vmul.f32 %v92, %v132
  %v202 = vmul.f32 %v93, %v132
  %v203 = vmul.f32 %v94, %v132
  %v204 = vmul.f32 %v95, %v132
  %v205 = vmul.f32 %v96, %v132
  %v206 = vmul.f32 %v97, %v132
  %v207 = vmul.f32 %v98, %v132
  %v208 = vmul.f32 %v99, %v132
  %v209 = vmul.f32 %v100, %v132
  %v210 = vmul.f32 %v101, %v132
  %v211 = vmul.f32 %v102, %v132
  %v212 = vmul.f32 %v103, %v132
  %v213 = vmul.f32 %v104, %v132
  %v214 = vmul.f32 %v105, %v132
  %v215 = vmul.f32 %v106, %v132
  %v216 = vmul.f32 %v107, %v132
  %v217 = vmul.f32 %v108, %v132
  %v218 = vmul.f32 %v109, %v132
  %v219 = vmul.f32 %v110, %v132
  %v220 = vmul.f32 %v111, %v132
  %v221 = vmul.f32 %v112, %v132
  %v222 = vmul.f32 %v113, %v132
  %v223 = vmul.f32 %v114, %v132
  %v224 = vmul.f32 %v115, %v132
  %v225 = vmul.f32 %v116, %v132
  %v226 = vmul.f32 %v117, %v132
  %v227 = vmul.f32 %v118, %v132
  %v228 = vmul.f32 %v119, %v132
  %v229 = vmul.f32 %v120, %v132
  %v230 = vmul.f32 %v121, %v132
  %v231 = vmul.f32 %v122, %v132
  %v232 = vmul.f32 %v123, %v132
  %v233 = vmul.f32 %v124, %v132
  %v234 = vmul.f32 %v125, %v132
  %v235 = vmul.f32 %v126, %v132
  %v236 = vld [vmem:[%s3] sm:$0x1]
  %v238 = vlaneseq
  %v239 = vshrl.u32 %v238, 7
  %v240 = vsub.s32 0, %v239
  %v241 = vrot.slane %v236, %v240
  %v243 = vadd.f32 %v134, %v241
  %v244 = vadd.f32 %v135, %v241
  %v245 = vadd.f32 %v136, %v241
  %v246 = vadd.f32 %v137, %v241
  %v247 = vadd.f32 %v138, %v241
  %v248 = vadd.f32 %v139, %v241
  %v249 = vadd.f32 %v140, %v241
  %v250 = vadd.f32 %v141, %v241
  %v251 = vadd.f32 %v142, %v241
  %v252 = vadd.f32 %v143, %v241
  %v253 = vadd.f32 %v144, %v241
  %v254 = vadd.f32 %v145, %v241
  %v255 = vadd.f32 %v146, %v241
  %v256 = vadd.f32 %v147, %v241
  %v257 = vadd.f32 %v148, %v241
  %v258 = vadd.f32 %v149, %v241
  %v259 = vadd.f32 %v150, %v241
  %v260 = vadd.f32 %v151, %v241
  %v261 = vadd.f32 %v152, %v241
  %v262 = vadd.f32 %v153, %v241
  %v263 = vadd.f32 %v154, %v241
  %v264 = vadd.f32 %v155, %v241
  %v265 = vadd.f32 %v156, %v241
  %v266 = vadd.f32 %v157, %v241
  %v267 = vadd.f32 %v158, %v241
  %v268 = vadd.f32 %v159, %v241
  %v269 = vadd.f32 %v160, %v241
  %v270 = vadd.f32 %v161, %v241
  %v271 = vadd.f32 %v162, %v241
  %v272 = vadd.f32 %v163, %v241
  %v273 = vadd.f32 %v164, %v241
  %v274 = vadd.f32 %v165, %v241
  %v275 = vadd.f32 %v166, %v241
  %v276 = vadd.f32 %v167, %v241
  %v277 = vadd.f32 %v168, %v241
  %v278 = vadd.f32 %v169, %v241
  %v279 = vadd.f32 %v170, %v241
  %v280 = vadd.f32 %v171, %v241
  %v281 = vadd.f32 %v172, %v241
  %v282 = vadd.f32 %v173, %v241
  %v283 = vadd.f32 %v174, %v241
  %v284 = vadd.f32 %v175, %v241
  %v285 = vadd.f32 %v176, %v241
  %v286 = vadd.f32 %v177, %v241
  %v287 = vadd.f32 %v178, %v241
  %v288 = vadd.f32 %v179, %v241
  %v289 = vadd.f32 %v180, %v241
  %v290 = vadd.f32 %v181, %v241
  %v291 = vadd.f32 %v182, %v241
  %v292 = vadd.f32 %v183, %v241
  %v293 = vadd.f32 %v184, %v241
  %v294 = vadd.f32 %v185, %v241
  %v295 = vadd.f32 %v186, %v241
  %v296 = vadd.f32 %v187, %v241
  %v297 = vadd.f32 %v188, %v241
  %v298 = vadd.f32 %v189, %v241
  %v299 = vadd.f32 %v190, %v241
  %v300 = vadd.f32 %v191, %v241
  %v301 = vadd.f32 %v192, %v241
  %v302 = vadd.f32 %v193, %v241
  %v303 = vadd.f32 %v194, %v241
  %v304 = vadd.f32 %v195, %v241
  %v305 = vadd.f32 %v196, %v241
  %v306 = vadd.f32 %v197, %v241
  %v307 = vadd.f32 %v198, %v241
  %v308 = vadd.f32 %v199, %v241
  %v309 = vadd.f32 %v200, %v241
  %v310 = vadd.f32 %v201, %v241
  %v311 = vadd.f32 %v202, %v241
  %v312 = vadd.f32 %v203, %v241
  %v313 = vadd.f32 %v204, %v241
  %v314 = vadd.f32 %v205, %v241
  %v315 = vadd.f32 %v206, %v241
  %v316 = vadd.f32 %v207, %v241
  %v317 = vadd.f32 %v208, %v241
  %v318 = vadd.f32 %v209, %v241
  %v319 = vadd.f32 %v210, %v241
  %v320 = vadd.f32 %v211, %v241
  %v321 = vadd.f32 %v212, %v241
  %v322 = vadd.f32 %v213, %v241
  %v323 = vadd.f32 %v214, %v241
  %v324 = vadd.f32 %v215, %v241
  %v325 = vadd.f32 %v216, %v241
  %v326 = vadd.f32 %v217, %v241
  %v327 = vadd.f32 %v218, %v241
  %v328 = vadd.f32 %v219, %v241
  %v329 = vadd.f32 %v220, %v241
  %v330 = vadd.f32 %v221, %v241
  %v331 = vadd.f32 %v222, %v241
  %v332 = vadd.f32 %v223, %v241
  %v333 = vadd.f32 %v224, %v241
  %v334 = vadd.f32 %v225, %v241
  %v335 = vadd.f32 %v226, %v241
  %v336 = vadd.f32 %v227, %v241
  %v337 = vadd.f32 %v228, %v241
  %v338 = vadd.f32 %v229, %v241
  %v339 = vadd.f32 %v230, %v241
  %v340 = vadd.f32 %v231, %v241
  %v341 = vadd.f32 %v232, %v241
  %v342 = vadd.f32 %v233, %v241
  %v343 = vadd.f32 %v234, %v241
  %v344 = vadd.f32 %v235, %v241
  %v345 = vmax.f32 %v243, 0.0
  %v346 = vmax.f32 %v244, 0.0
  %v347 = vmax.f32 %v245, 0.0
  %v348 = vmax.f32 %v246, 0.0
  %v349 = vmax.f32 %v247, 0.0
  %v350 = vmax.f32 %v248, 0.0
  %v351 = vmax.f32 %v249, 0.0
  %v352 = vmax.f32 %v250, 0.0
  %v353 = vmax.f32 %v251, 0.0
  %v354 = vmax.f32 %v252, 0.0
  %v355 = vmax.f32 %v253, 0.0
  %v356 = vmax.f32 %v254, 0.0
  %v357 = vmax.f32 %v255, 0.0
  %v358 = vmax.f32 %v256, 0.0
  %v359 = vmax.f32 %v257, 0.0
  %v360 = vmax.f32 %v258, 0.0
  %v361 = vmax.f32 %v259, 0.0
  %v362 = vmax.f32 %v260, 0.0
  %v363 = vmax.f32 %v261, 0.0
  %v364 = vmax.f32 %v262, 0.0
  %v365 = vmax.f32 %v263, 0.0
  %v366 = vmax.f32 %v264, 0.0
  %v367 = vmax.f32 %v265, 0.0
  %v368 = vmax.f32 %v266, 0.0
  %v369 = vmax.f32 %v267, 0.0
  %v370 = vmax.f32 %v268, 0.0
  %v371 = vmax.f32 %v269, 0.0
  %v372 = vmax.f32 %v270, 0.0
  %v373 = vmax.f32 %v271, 0.0
  %v374 = vmax.f32 %v272, 0.0
  %v375 = vmax.f32 %v273, 0.0
  %v376 = vmax.f32 %v274, 0.0
  %v377 = vmax.f32 %v275, 0.0
  %v378 = vmax.f32 %v276, 0.0
  %v379 = vmax.f32 %v277, 0.0
  %v380 = vmax.f32 %v278, 0.0
  %v381 = vmax.f32 %v279, 0.0
  %v382 = vmax.f32 %v280, 0.0
  %v383 = vmax.f32 %v281, 0.0
  %v384 = vmax.f32 %v282, 0.0
  %v385 = vmax.f32 %v283, 0.0
  %v386 = vmax.f32 %v284, 0.0
  %v387 = vmax.f32 %v285, 0.0
  %v388 = vmax.f32 %v286, 0.0
  %v389 = vmax.f32 %v287, 0.0
  %v390 = vmax.f32 %v288, 0.0
  %v391 = vmax.f32 %v289, 0.0
  %v392 = vmax.f32 %v290, 0.0
  %v393 = vmax.f32 %v291, 0.0
  %v394 = vmax.f32 %v292, 0.0
  %v395 = vmax.f32 %v293, 0.0
  %v396 = vmax.f32 %v294, 0.0
  %v397 = vmax.f32 %v295, 0.0
  %v398 = vmax.f32 %v296, 0.0
  %v399 = vmax.f32 %v297, 0.0
  %v400 = vmax.f32 %v298, 0.0
  %v401 = vmax.f32 %v299, 0.0
  %v402 = vmax.f32 %v300, 0.0
  %v403 = vmax.f32 %v301, 0.0
  %v404 = vmax.f32 %v302, 0.0
  %v405 = vmax.f32 %v303, 0.0
  %v406 = vmax.f32 %v304, 0.0
  %v407 = vmax.f32 %v305, 0.0
  %v408 = vmax.f32 %v306, 0.0
  %v409 = vmax.f32 %v307, 0.0
  %v410 = vmax.f32 %v308, 0.0
  %v411 = vmax.f32 %v309, 0.0
  %v412 = vmax.f32 %v310, 0.0
  %v413 = vmax.f32 %v311, 0.0
  %v414 = vmax.f32 %v312, 0.0
  %v415 = vmax.f32 %v313, 0.0
  %v416 = vmax.f32 %v314, 0.0
  %v417 = vmax.f32 %v315, 0.0
  %v418 = vmax.f32 %v316, 0.0
  %v419 = vmax.f32 %v317, 0.0
  %v420 = vmax.f32 %v318, 0.0
  %v421 = vmax.f32 %v319, 0.0
  %v422 = vmax.f32 %v320, 0.0
  %v423 = vmax.f32 %v321, 0.0
  %v424 = vmax.f32 %v322, 0.0
  %v425 = vmax.f32 %v323, 0.0
  %v426 = vmax.f32 %v324, 0.0
  %v427 = vmax.f32 %v325, 0.0
  %v428 = vmax.f32 %v326, 0.0
  %v429 = vmax.f32 %v327, 0.0
  %v430 = vmax.f32 %v328, 0.0
  %v431 = vmax.f32 %v329, 0.0
  %v432 = vmax.f32 %v330, 0.0
  %v433 = vmax.f32 %v331, 0.0
  %v434 = vmax.f32 %v332, 0.0
  %v435 = vmax.f32 %v333, 0.0
  %v436 = vmax.f32 %v334, 0.0
  %v437 = vmax.f32 %v335, 0.0
  %v438 = vmax.f32 %v336, 0.0
  %v439 = vmax.f32 %v337, 0.0
  %v440 = vmax.f32 %v338, 0.0
  %v441 = vmax.f32 %v339, 0.0
  %v442 = vmax.f32 %v340, 0.0
  %v443 = vmax.f32 %v341, 0.0
  %v444 = vmax.f32 %v342, 0.0
  %v445 = vmax.f32 %v343, 0.0
  %v446 = vmax.f32 %v344, 0.0
  %v447 = vld [vmem:[%s1] sm:$0xff]
  %v448 = vld [vmem:[%s1 + $0x8] sm:$0xff]
  %v449 = vld [vmem:[%s1 + $0x10] sm:$0xff]
  %v450 = vld [vmem:[%s1 + $0x18] sm:$0xff]
  %v451 = vld [vmem:[%s1 + $0x20] sm:$0xff]
  %v452 = vld [vmem:[%s1 + $0x28] sm:$0xff]
  %v453 = vld [vmem:[%s1 + $0x30] sm:$0xff]
  %v454 = vld [vmem:[%s1 + $0x38] sm:$0xff]
  %v455 = vld [vmem:[%s1 + $0x40] sm:$0xff]
  %v456 = vld [vmem:[%s1 + $0x48] sm:$0xff]
  %v457 = vld [vmem:[%s1 + $0x50] sm:$0xff]
  %v458 = vld [vmem:[%s1 + $0x58] sm:$0xff]
  %v459 = vld [vmem:[%s1 + $0x60] sm:$0xff]
  %v460 = vld [vmem:[%s1 + $0x68] sm:$0xff]
  %v461 = vld [vmem:[%s1 + $0x70] sm:$0xff]
  %v462 = vld [vmem:[%s1 + $0x78] sm:$0xff]
  %v463 = vld [vmem:[%s1 + $0x80] sm:$0xff]
  %v464 = vld [vmem:[%s1 + $0x88] sm:$0xff]
  %v465 = vld [vmem:[%s1 + $0x90] sm:$0xff]
  %v466 = vld [vmem:[%s1 + $0xa0] sm:$0xff]
  %v467 = vld [vmem:[%s1 + $0xb0] sm:$0xff]
  %v468 = vld [vmem:[%s1 + $0xc0] sm:$0xff]
  %v469 = vld [vmem:[%s1 + $0xd0] sm:$0xff]
  %v470 = vld [vmem:[%s1 + $0xe0] sm:$0xff]
  %v471 = vld [vmem:[%s1 + $0xf0] sm:$0xff]
  %v472 = vld [vmem:[%s1 + $0x100] sm:$0xff]
  %v473 = vld [vmem:[%s1 + $0x110] sm:$0xff]
  %v474 = vld [vmem:[%s1 + $0x120] sm:$0xff]
  %v475 = vld [vmem:[%s1 + $0x128] sm:$0xff]
  %v476 = vld [vmem:[%s1 + $0x130] sm:$0xff]
  %v477 = vld [vmem:[%s1 + $0x138] sm:$0xff]
  %v478 = vld [vmem:[%s1 + $0x140] sm:$0xff]
  %v479 = vld [vmem:[%s1 + $0x148] sm:$0xff]
  %v480 = vld [vmem:[%s1 + $0x150] sm:$0xff]
  %v481 = vld [vmem:[%s1 + $0x158] sm:$0xff]
  %v482 = vld [vmem:[%s1 + $0x160] sm:$0xff]
  %v483 = vld [vmem:[%s1 + $0x168] sm:$0xff]
  %v484 = vld [vmem:[%s1 + $0x170] sm:$0xff]
  %v485 = vld [vmem:[%s1 + $0x178] sm:$0xff]
  %v486 = vld [vmem:[%s1 + $0x180] sm:$0xff]
  %v487 = vld [vmem:[%s1 + $0x188] sm:$0xff]
  %v488 = vld [vmem:[%s1 + $0x190] sm:$0xff]
  %v489 = vld [vmem:[%s1 + $0x198] sm:$0xff]
  %v490 = vld [vmem:[%s1 + $0x1b0] sm:$0xff]
  %v491 = vld [vmem:[%s1 + $0x1c0] sm:$0xff]
  %v492 = vld [vmem:[%s1 + $0x1d0] sm:$0xff]
  %v493 = vld [vmem:[%s1 + $0x1e0] sm:$0xff]
  %v494 = vld [vmem:[%s1 + $0x1f0] sm:$0xff]
  %v495 = vld [vmem:[%s1 + $0x200] sm:$0xff]
  %v496 = vld [vmem:[%s1 + $0x210] sm:$0xff]
  %v497 = vld [vmem:[%s1 + $0x220] sm:$0xff]
  %499 = vset.pattern.permute.xlu0 0
  %500 = vperm.xlu0 %499, %v447
  %v501 = vpop.permute.xlu0 %500
  %504 = vset.pattern.permute.xlu0 0
  %505 = vperm.xlu0 %504, %v448
  %v506 = vpop.permute.xlu0 %505
  %509 = vset.pattern.permute.xlu0 0
  %510 = vperm.xlu0 %509, %v449
  %v511 = vpop.permute.xlu0 %510
  %514 = vset.pattern.permute.xlu0 0
  %515 = vperm.xlu0 %514, %v450
  %v516 = vpop.permute.xlu0 %515
  %519 = vset.pattern.permute.xlu0 0
  %520 = vperm.xlu0 %519, %v451
  %v521 = vpop.permute.xlu0 %520
  %524 = vset.pattern.permute.xlu0 0
  %525 = vperm.xlu0 %524, %v452
  %v526 = vpop.permute.xlu0 %525
  %529 = vset.pattern.permute.xlu0 0
  %530 = vperm.xlu0 %529, %v453
  %v531 = vpop.permute.xlu0 %530
  %534 = vset.pattern.permute.xlu0 0
  %535 = vperm.xlu0 %534, %v454
  %v536 = vpop.permute.xlu0 %535
  %539 = vset.pattern.permute.xlu0 0
  %540 = vperm.xlu0 %539, %v455
  %v541 = vpop.permute.xlu0 %540
  %544 = vset.pattern.permute.xlu0 0
  %545 = vperm.xlu0 %544, %v456
  %v546 = vpop.permute.xlu0 %545
  %549 = vset.pattern.permute.xlu0 0
  %550 = vperm.xlu0 %549, %v457
  %v551 = vpop.permute.xlu0 %550
  %554 = vset.pattern.permute.xlu0 0
  %555 = vperm.xlu0 %554, %v458
  %v556 = vpop.permute.xlu0 %555
  %559 = vset.pattern.permute.xlu0 0
  %560 = vperm.xlu0 %559, %v459
  %v561 = vpop.permute.xlu0 %560
  %564 = vset.pattern.permute.xlu0 0
  %565 = vperm.xlu0 %564, %v460
  %v566 = vpop.permute.xlu0 %565
  %569 = vset.pattern.permute.xlu0 0
  %570 = vperm.xlu0 %569, %v461
  %v571 = vpop.permute.xlu0 %570
  %574 = vset.pattern.permute.xlu0 0
  %575 = vperm.xlu0 %574, %v462
  %v576 = vpop.permute.xlu0 %575
  %579 = vset.pattern.permute.xlu0 0
  %580 = vperm.xlu0 %579, %v463
  %v581 = vpop.permute.xlu0 %580
  %584 = vset.pattern.permute.xlu0 0
  %585 = vperm.xlu0 %584, %v464
  %v586 = vpop.permute.xlu0 %585
  %589 = vset.pattern.permute.xlu0 0
  %590 = vperm.xlu0 %589, %v465
  %v591 = vpop.permute.xlu0 %590
  %594 = vset.pattern.permute.xlu0 0
  %595 = vperm.xlu0 %594, %v466
  %v596 = vpop.permute.xlu0 %595
  %599 = vset.pattern.permute.xlu0 0
  %600 = vperm.xlu0 %599, %v467
  %v601 = vpop.permute.xlu0 %600
  %604 = vset.pattern.permute.xlu0 0
  %605 = vperm.xlu0 %604, %v468
  %v606 = vpop.permute.xlu0 %605
  %609 = vset.pattern.permute.xlu0 0
  %610 = vperm.xlu0 %609, %v469
  %v611 = vpop.permute.xlu0 %610
  %614 = vset.pattern.permute.xlu0 0
  %615 = vperm.xlu0 %614, %v470
  %v616 = vpop.permute.xlu0 %615
  %619 = vset.pattern.permute.xlu0 0
  %620 = vperm.xlu0 %619, %v471
  %v621 = vpop.permute.xlu0 %620
  %624 = vset.pattern.permute.xlu0 0
  %625 = vperm.xlu0 %624, %v472
  %v626 = vpop.permute.xlu0 %625
  %629 = vset.pattern.permute.xlu0 0
  %630 = vperm.xlu0 %629, %v473
  %v631 = vpop.permute.xlu0 %630
  %634 = vset.pattern.permute.xlu0 0
  %635 = vperm.xlu0 %634, %v474
  %v636 = vpop.permute.xlu0 %635
  %639 = vset.pattern.permute.xlu0 0
  %640 = vperm.xlu0 %639, %v475
  %v641 = vpop.permute.xlu0 %640
  %644 = vset.pattern.permute.xlu0 0
  %645 = vperm.xlu0 %644, %v476
  %v646 = vpop.permute.xlu0 %645
  %649 = vset.pattern.permute.xlu0 0
  %650 = vperm.xlu0 %649, %v477
  %v651 = vpop.permute.xlu0 %650
  %654 = vset.pattern.permute.xlu0 0
  %655 = vperm.xlu0 %654, %v478
  %v656 = vpop.permute.xlu0 %655
  %659 = vset.pattern.permute.xlu0 0
  %660 = vperm.xlu0 %659, %v479
  %v661 = vpop.permute.xlu0 %660
  %664 = vset.pattern.permute.xlu0 0
  %665 = vperm.xlu0 %664, %v480
  %v666 = vpop.permute.xlu0 %665
  %669 = vset.pattern.permute.xlu0 0
  %670 = vperm.xlu0 %669, %v481
  %v671 = vpop.permute.xlu0 %670
  %674 = vset.pattern.permute.xlu0 0
  %675 = vperm.xlu0 %674, %v482
  %v676 = vpop.permute.xlu0 %675
  %679 = vset.pattern.permute.xlu0 0
  %680 = vperm.xlu0 %679, %v483
  %v681 = vpop.permute.xlu0 %680
  %684 = vset.pattern.permute.xlu0 0
  %685 = vperm.xlu0 %684, %v484
  %v686 = vpop.permute.xlu0 %685
  %689 = vset.pattern.permute.xlu0 0
  %690 = vperm.xlu0 %689, %v485
  %v691 = vpop.permute.xlu0 %690
  %694 = vset.pattern.permute.xlu0 0
  %695 = vperm.xlu0 %694, %v486
  %v696 = vpop.permute.xlu0 %695
  %699 = vset.pattern.permute.xlu0 0
  %700 = vperm.xlu0 %699, %v487
  %v701 = vpop.permute.xlu0 %700
  %704 = vset.pattern.permute.xlu0 0
  %705 = vperm.xlu0 %704, %v488
  %v706 = vpop.permute.xlu0 %705
  %709 = vset.pattern.permute.xlu0 0
  %710 = vperm.xlu0 %709, %v489
  %v711 = vpop.permute.xlu0 %710
  %714 = vset.pattern.permute.xlu0 0
  %715 = vperm.xlu0 %714, %v490
  %v716 = vpop.permute.xlu0 %715
  %719 = vset.pattern.permute.xlu0 0
  %720 = vperm.xlu0 %719, %v491
  %v721 = vpop.permute.xlu0 %720
  %724 = vset.pattern.permute.xlu0 0
  %725 = vperm.xlu0 %724, %v492
  %v726 = vpop.permute.xlu0 %725
  %729 = vset.pattern.permute.xlu0 0
  %730 = vperm.xlu0 %729, %v493
  %v731 = vpop.permute.xlu0 %730
  %734 = vset.pattern.permute.xlu0 0
  %735 = vperm.xlu0 %734, %v494
  %v736 = vpop.permute.xlu0 %735
  %739 = vset.pattern.permute.xlu0 0
  %740 = vperm.xlu0 %739, %v495
  %v741 = vpop.permute.xlu0 %740
  %744 = vset.pattern.permute.xlu0 0
  %745 = vperm.xlu0 %744, %v496
  %v746 = vpop.permute.xlu0 %745
  %749 = vset.pattern.permute.xlu0 0
  %750 = vperm.xlu0 %749, %v497
  %v751 = vpop.permute.xlu0 %750
  %v753 = vmul.f32 %v345, %v501
  %v754 = vmul.f32 %v346, %v506
  %v755 = vmul.f32 %v347, %v511
  %v756 = vmul.f32 %v348, %v516
  %v757 = vmul.f32 %v349, %v521
  %v758 = vmul.f32 %v350, %v526
  %v759 = vmul.f32 %v351, %v531
  %v760 = vmul.f32 %v352, %v536
  %v761 = vmul.f32 %v353, %v541
  %v762 = vmul.f32 %v354, %v546
  %v763 = vmul.f32 %v355, %v551
  %v764 = vmul.f32 %v356, %v556
  %v765 = vmul.f32 %v357, %v561
  %v766 = vmul.f32 %v358, %v566
  %v767 = vmul.f32 %v359, %v571
  %v768 = vmul.f32 %v360, %v576
  %v769 = vmul.f32 %v361, %v581
  %v770 = vmul.f32 %v362, %v586
  %v771 = vmul.f32 %v363, %v591
  %v772 = vmul.f32 %v364, %v596
  %v773 = vmul.f32 %v365, %v601
  %v774 = vmul.f32 %v366, %v606
  %v775 = vmul.f32 %v367, %v611
  %v776 = vmul.f32 %v368, %v616
  %v777 = vmul.f32 %v369, %v621
  %v778 = vmul.f32 %v370, %v626
  %v779 = vmul.f32 %v371, %v631
  %v780 = vmul.f32 %v372, %v636
  %v781 = vmul.f32 %v373, %v641
  %v782 = vmul.f32 %v374, %v646
  %v783 = vmul.f32 %v375, %v651
  %v784 = vmul.f32 %v376, %v656
  %v785 = vmul.f32 %v377, %v661
  %v786 = vmul.f32 %v378, %v666
  %v787 = vmul.f32 %v379, %v671
  %v788 = vmul.f32 %v380, %v676
  %v789 = vmul.f32 %v381, %v681
  %v790 = vmul.f32 %v382, %v686
  %v791 = vmul.f32 %v383, %v691
  %v792 = vmul.f32 %v384, %v696
  %v793 = vmul.f32 %v385, %v701
  %v794 = vmul.f32 %v386, %v706
  %v795 = vmul.f32 %v387, %v711
  %v796 = vmul.f32 %v388, %v716
  %v797 = vmul.f32 %v389, %v721
  %v798 = vmul.f32 %v390, %v726
  %v799 = vmul.f32 %v391, %v731
  %v800 = vmul.f32 %v392, %v736
  %v801 = vmul.f32 %v393, %v741
  %v802 = vmul.f32 %v394, %v746
  %v803 = vmul.f32 %v395, %v751
  %v804 = vmul.f32 %v396, %v501
  %v805 = vmul.f32 %v397, %v506
  %v806 = vmul.f32 %v398, %v511
  %v807 = vmul.f32 %v399, %v516
  %v808 = vmul.f32 %v400, %v521
  %v809 = vmul.f32 %v401, %v526
  %v810 = vmul.f32 %v402, %v531
  %v811 = vmul.f32 %v403, %v536
  %v812 = vmul.f32 %v404, %v541
  %v813 = vmul.f32 %v405, %v546
  %v814 = vmul.f32 %v406, %v551
  %v815 = vmul.f32 %v407, %v556
  %v816 = vmul.f32 %v408, %v561
  %v817 = vmul.f32 %v409, %v566
  %v818 = vmul.f32 %v410, %v571
  %v819 = vmul.f32 %v411, %v576
  %v820 = vmul.f32 %v412, %v581
  %v821 = vmul.f32 %v413, %v586
  %v822 = vmul.f32 %v414, %v591
  %v823 = vmul.f32 %v415, %v596
  %v824 = vmul.f32 %v416, %v601
  %v825 = vmul.f32 %v417, %v606
  %v826 = vmul.f32 %v418, %v611
  %v827 = vmul.f32 %v419, %v616
  %v828 = vmul.f32 %v420, %v621
  %v829 = vmul.f32 %v421, %v626
  %v830 = vmul.f32 %v422, %v631
  %v831 = vmul.f32 %v423, %v636
  %v832 = vmul.f32 %v424, %v641
  %v833 = vmul.f32 %v425, %v646
  %v834 = vmul.f32 %v426, %v651
  %v835 = vmul.f32 %v427, %v656
  %v836 = vmul.f32 %v428, %v661
  %v837 = vmul.f32 %v429, %v666
  %v838 = vmul.f32 %v430, %v671
  %v839 = vmul.f32 %v431, %v676
  %v840 = vmul.f32 %v432, %v681
  %v841 = vmul.f32 %v433, %v686
  %v842 = vmul.f32 %v434, %v691
  %v843 = vmul.f32 %v435, %v696
  %v844 = vmul.f32 %v436, %v701
  %v845 = vmul.f32 %v437, %v706
  %v846 = vmul.f32 %v438, %v711
  %v847 = vmul.f32 %v439, %v716
  %v848 = vmul.f32 %v440, %v721
  %v849 = vmul.f32 %v441, %v726
  %v850 = vmul.f32 %v442, %v731
  %v851 = vmul.f32 %v443, %v736
  %v852 = vmul.f32 %v444, %v741
  %v853 = vmul.f32 %v445, %v746
  %v854 = vmul.f32 %v446, %v751
  %v855 = vld [vmem:[%s4] sm:$0xff]
  %v856 = vld [vmem:[%s4 + $0x8] sm:$0xff]
  %v857 = vld [vmem:[%s4 + $0x10] sm:$0xff]
  %v858 = vld [vmem:[%s4 + $0x18] sm:$0xff]
  %v859 = vld [vmem:[%s4 + $0x20] sm:$0xff]
  %v860 = vld [vmem:[%s4 + $0x28] sm:$0xff]
  %v861 = vld [vmem:[%s4 + $0x30] sm:$0xff]
  %v862 = vld [vmem:[%s4 + $0x38] sm:$0xff]
  %v863 = vld [vmem:[%s4 + $0x40] sm:$0xff]
  %v864 = vld [vmem:[%s4 + $0x48] sm:$0xff]
  %v865 = vld [vmem:[%s4 + $0x50] sm:$0xff]
  %v866 = vld [vmem:[%s4 + $0x58] sm:$0xff]
  %v867 = vld [vmem:[%s4 + $0x60] sm:$0xff]
  %v868 = vld [vmem:[%s4 + $0x68] sm:$0xff]
  %v869 = vld [vmem:[%s4 + $0x70] sm:$0xff]
  %v870 = vld [vmem:[%s4 + $0x78] sm:$0xff]
  %s871 = scalar_lea.vmem %s4, 128
  %v872 = vld [vmem:[%s871] sm:$0xff]
  %v873 = vld [vmem:[%s871 + $0x8] sm:$0xff]
  %v874 = vld [vmem:[%s871 + $0x10] sm:$0xff]
  %v875 = vld [vmem:[%s871 + $0x18] sm:$0xff]
  %v876 = vld [vmem:[%s871 + $0x20] sm:$0xff]
  %v877 = vld [vmem:[%s871 + $0x28] sm:$0xff]
  %v878 = vld [vmem:[%s871 + $0x30] sm:$0xff]
  %v879 = vld [vmem:[%s871 + $0x38] sm:$0xff]
  %v880 = vld [vmem:[%s871 + $0x40] sm:$0xff]
  %v881 = vld [vmem:[%s871 + $0x48] sm:$0xff]
  %v882 = vld [vmem:[%s871 + $0x50] sm:$0xff]
  %v883 = vld [vmem:[%s871 + $0x58] sm:$0xff]
  %v884 = vld [vmem:[%s871 + $0x60] sm:$0xff]
  %v885 = vld [vmem:[%s871 + $0x68] sm:$0xff]
  %v886 = vld [vmem:[%s871 + $0x70] sm:$0xff]
  %v887 = vld [vmem:[%s871 + $0x78] sm:$0xff]
  %888 = vmatprep.subr.mxu0 0.0
  %889 = vmatpush1.msra.mxu0 %v887
  %890 = vmatprep.subr.mxu0 0.0
  %891 = vmatpush1.msra.mxu0 %v886
  %892 = vmatprep.subr.mxu0 0.0
  %893 = vmatpush1.msra.mxu0 %v885
  %894 = vmatprep.subr.mxu0 0.0
  %895 = vmatpush1.msra.mxu0 %v884
  %896 = vmatprep.subr.mxu0 0.0
  %897 = vmatpush1.msra.mxu0 %v883
  %898 = vmatprep.subr.mxu0 0.0
  %899 = vmatpush1.msra.mxu0 %v882
  %900 = vmatprep.subr.mxu0 0.0
  %901 = vmatpush1.msra.mxu0 %v881
  %902 = vmatprep.subr.mxu0 0.0
  %903 = vmatpush1.msra.mxu0 %v880
  %904 = vmatprep.subr.mxu0 0.0
  %905 = vmatpush1.msra.mxu0 %v879
  %906 = vmatprep.subr.mxu0 0.0
  %907 = vmatpush1.msra.mxu0 %v878
  %908 = vmatprep.subr.mxu0 0.0
  %909 = vmatpush1.msra.mxu0 %v877
  %910 = vmatprep.subr.mxu0 0.0
  %911 = vmatpush1.msra.mxu0 %v876
  %912 = vmatprep.subr.mxu0 0.0
  %913 = vmatpush1.msra.mxu0 %v875
  %914 = vmatprep.subr.mxu0 0.0
  %915 = vmatpush1.msra.mxu0 %v874
  %916 = vmatprep.subr.mxu0 0.0
  %917 = vmatpush1.msra.mxu0 %v873
  %918 = vmatprep.subr.mxu0 0.0
  %919 = vmatpush1.msra.mxu0 %v872
  %920 = vmatprep.subr.mxu0 0.0
  %921 = vmatpush2.msra.mxu0 0.0
  %922 = vmatprep.subr.mxu0 0.0
  %923 = vmatpush2.msra.mxu0 0.0
  %924 = vmatprep.subr.mxu0 0.0
  %925 = vmatpush2.msra.mxu0 0.0
  %926 = vmatprep.subr.mxu0 0.0
  %927 = vmatpush2.msra.mxu0 0.0
  %928 = vmatprep.subr.mxu0 0.0
  %929 = vmatpush2.msra.mxu0 0.0
  %930 = vmatprep.subr.mxu0 0.0
  %931 = vmatpush2.msra.mxu0 0.0
  %932 = vmatprep.subr.mxu0 0.0
  %933 = vmatpush2.msra.mxu0 0.0
  %934 = vmatprep.subr.mxu0 0.0
  %935 = vmatpush2.msra.mxu0 0.0
  %936 = vmatprep.subr.mxu0 0.0
  %937 = vmatpush2.msra.mxu0 0.0
  %938 = vmatprep.subr.mxu0 0.0
  %939 = vmatpush2.msra.mxu0 0.0
  %940 = vmatprep.subr.mxu0 0.0
  %941 = vmatpush2.msra.mxu0 0.0
  %942 = vmatprep.subr.mxu0 0.0
  %943 = vmatpush2.msra.mxu0 0.0
  %944 = vmatprep.subr.mxu0 0.0
  %945 = vmatpush2.msra.mxu0 0.0
  %946 = vmatprep.subr.mxu0 0.0
  %947 = vmatpush2.msra.mxu0 0.0
  %948 = vmatprep.subr.mxu0 0.0
  %949 = vmatpush2.msra.mxu0 0.0
  %950 = vmatprep.subr.mxu0 0.0
  %951 = vmatpush2.msra.mxu0 0.0
  %952 = vmatprep.mubr.f32.mxu0 0.0
  %953 = vmatmul.mubr.f32.gmra.mxu0 %v771
  %v954 = vpop.f32.mrf.mxu0
  %v955 = vadd.f32 0.0, %v954
  %v956 = vpop.f32.mrf.mxu0
  %957 = vmatprep.mubr.f32.mxu0 0.0
  %958 = vmatmul.mubr.f32.gmra.mxu0 %v772
  %v959 = vpop.f32.mrf.mxu0
  %v960 = vadd.f32 0.0, %v959
  %v961 = vpop.f32.mrf.mxu0
  %962 = vmatprep.mubr.f32.mxu0 0.0
  %963 = vmatmul.mubr.f32.gmra.mxu0 %v773
  %v964 = vpop.f32.mrf.mxu0
  %v965 = vadd.f32 0.0, %v964
  %v966 = vpop.f32.mrf.mxu0
  %967 = vmatprep.mubr.f32.mxu0 0.0
  %968 = vmatmul.mubr.f32.gmra.mxu0 %v774
  %v969 = vpop.f32.mrf.mxu0
  %v970 = vadd.f32 0.0, %v969
  %v971 = vpop.f32.mrf.mxu0
  %972 = vmatprep.mubr.f32.mxu0 0.0
  %973 = vmatmul.mubr.f32.gmra.mxu0 %v775
  %v974 = vpop.f32.mrf.mxu0
  %v975 = vadd.f32 0.0, %v974
  %v976 = vpop.f32.mrf.mxu0
  %977 = vmatprep.mubr.f32.mxu0 0.0
  %978 = vmatmul.mubr.f32.gmra.mxu0 %v776
  %v979 = vpop.f32.mrf.mxu0
  %v980 = vadd.f32 0.0, %v979
  %v981 = vpop.f32.mrf.mxu0
  %982 = vmatprep.mubr.f32.mxu0 0.0
  %983 = vmatmul.mubr.f32.gmra.mxu0 %v777
  %v984 = vpop.f32.mrf.mxu0
  %v985 = vadd.f32 0.0, %v984
  %v986 = vpop.f32.mrf.mxu0
  %987 = vmatprep.mubr.f32.mxu0 0.0
  %988 = vmatmul.mubr.f32.gmra.mxu0 %v778
  %v989 = vpop.f32.mrf.mxu0
  %v990 = vadd.f32 0.0, %v989
  %v991 = vpop.f32.mrf.mxu0
  %992 = vmatprep.mubr.f32.mxu0 0.0
  %993 = vmatmul.mubr.f32.gmra.mxu0 %v822
  %v994 = vpop.f32.mrf.mxu0
  %v995 = vadd.f32 0.0, %v994
  %v996 = vpop.f32.mrf.mxu0
  %997 = vmatprep.mubr.f32.mxu0 0.0
  %998 = vmatmul.mubr.f32.gmra.mxu0 %v823
  %v999 = vpop.f32.mrf.mxu0
  %v1000 = vadd.f32 0.0, %v999
  %v1001 = vpop.f32.mrf.mxu0
  %1002 = vmatprep.mubr.f32.mxu0 0.0
  %1003 = vmatmul.mubr.f32.gmra.mxu0 %v824
  %v1004 = vpop.f32.mrf.mxu0
  %v1005 = vadd.f32 0.0, %v1004
  %v1006 = vpop.f32.mrf.mxu0
  %1007 = vmatprep.mubr.f32.mxu0 0.0
  %1008 = vmatmul.mubr.f32.gmra.mxu0 %v825
  %v1009 = vpop.f32.mrf.mxu0
  %v1010 = vadd.f32 0.0, %v1009
  %v1011 = vpop.f32.mrf.mxu0
  %1012 = vmatprep.mubr.f32.mxu0 0.0
  %1013 = vmatmul.mubr.f32.gmra.mxu0 %v826
  %v1014 = vpop.f32.mrf.mxu0
  %v1015 = vadd.f32 0.0, %v1014
  %v1016 = vpop.f32.mrf.mxu0
  %1017 = vmatprep.mubr.f32.mxu0 0.0
  %1018 = vmatmul.mubr.f32.gmra.mxu0 %v827
  %v1019 = vpop.f32.mrf.mxu0
  %v1020 = vadd.f32 0.0, %v1019
  %v1021 = vpop.f32.mrf.mxu0
  %1022 = vmatprep.mubr.f32.mxu0 0.0
  %1023 = vmatmul.mubr.f32.gmra.mxu0 %v828
  %v1024 = vpop.f32.mrf.mxu0
  %v1025 = vadd.f32 0.0, %v1024
  %v1026 = vpop.f32.mrf.mxu0
  %1027 = vmatprep.mubr.f32.mxu0 0.0
  %1028 = vmatmul.mubr.f32.gmra.mxu0 %v829
  %v1029 = vpop.f32.mrf.mxu0
  %v1030 = vadd.f32 0.0, %v1029
  %v1031 = vpop.f32.mrf.mxu0
  %1032 = vdwg.mxu0
  %1033 = vmatprep.subr.mxu0 0.0
  %1034 = vmatpush1.msra.mxu0 %v870
  %1035 = vmatprep.subr.mxu0 0.0
  %1036 = vmatpush1.msra.mxu0 %v869
  %1037 = vmatprep.subr.mxu0 0.0
  %1038 = vmatpush1.msra.mxu0 %v868
  %1039 = vmatprep.subr.mxu0 0.0
  %1040 = vmatpush1.msra.mxu0 %v867
  %1041 = vmatprep.subr.mxu0 0.0
  %1042 = vmatpush1.msra.mxu0 %v866
  %1043 = vmatprep.subr.mxu0 0.0
  %1044 = vmatpush1.msra.mxu0 %v865
  %1045 = vmatprep.subr.mxu0 0.0
  %1046 = vmatpush1.msra.mxu0 %v864
  %1047 = vmatprep.subr.mxu0 0.0
  %1048 = vmatpush1.msra.mxu0 %v863
  %1049 = vmatprep.subr.mxu0 0.0
  %1050 = vmatpush1.msra.mxu0 %v862
  %1051 = vmatprep.subr.mxu0 0.0
  %1052 = vmatpush1.msra.mxu0 %v861
  %1053 = vmatprep.subr.mxu0 0.0
  %1054 = vmatpush1.msra.mxu0 %v860
  %1055 = vmatprep.subr.mxu0 0.0
  %1056 = vmatpush1.msra.mxu0 %v859
  %1057 = vmatprep.subr.mxu0 0.0
  %1058 = vmatpush1.msra.mxu0 %v858
  %1059 = vmatprep.subr.mxu0 0.0
  %1060 = vmatpush1.msra.mxu0 %v857
  %1061 = vmatprep.subr.mxu0 0.0
  %1062 = vmatpush1.msra.mxu0 %v856
  %1063 = vmatprep.subr.mxu0 0.0
  %1064 = vmatpush1.msra.mxu0 %v855
  %1065 = vmatprep.subr.mxu0 0.0
  %1066 = vmatpush2.msra.mxu0 0.0
  %1067 = vmatprep.subr.mxu0 0.0
  %1068 = vmatpush2.msra.mxu0 0.0
  %1069 = vmatprep.subr.mxu0 0.0
  %1070 = vmatpush2.msra.mxu0 0.0
  %1071 = vmatprep.subr.mxu0 0.0
  %1072 = vmatpush2.msra.mxu0 0.0
  %1073 = vmatprep.subr.mxu0 0.0
  %1074 = vmatpush2.msra.mxu0 0.0
  %1075 = vmatprep.subr.mxu0 0.0
  %1076 = vmatpush2.msra.mxu0 0.0
  %1077 = vmatprep.subr.mxu0 0.0
  %1078 = vmatpush2.msra.mxu0 0.0
  %1079 = vmatprep.subr.mxu0 0.0
  %1080 = vmatpush2.msra.mxu0 0.0
  %1081 = vmatprep.subr.mxu0 0.0
  %1082 = vmatpush2.msra.mxu0 0.0
  %1083 = vmatprep.subr.mxu0 0.0
  %1084 = vmatpush2.msra.mxu0 0.0
  %1085 = vmatprep.subr.mxu0 0.0
  %1086 = vmatpush2.msra.mxu0 0.0
  %1087 = vmatprep.subr.mxu0 0.0
  %1088 = vmatpush2.msra.mxu0 0.0
  %1089 = vmatprep.subr.mxu0 0.0
  %1090 = vmatpush2.msra.mxu0 0.0
  %1091 = vmatprep.subr.mxu0 0.0
  %1092 = vmatpush2.msra.mxu0 0.0
  %1093 = vmatprep.subr.mxu0 0.0
  %1094 = vmatpush2.msra.mxu0 0.0
  %1095 = vmatprep.subr.mxu0 0.0
  %1096 = vmatpush2.msra.mxu0 0.0
  %1097 = vmatprep.mubr.f32.mxu0 0.0
  %1098 = vmatmul.mubr.f32.gmra.mxu0 %v753
  %v1099 = vpop.f32.mrf.mxu0
  %v1100 = vadd.f32 %v955, %v1099
  %v1101 = vpop.f32.mrf.mxu0
  %1102 = vmatprep.mubr.f32.mxu0 0.0
  %1103 = vmatmul.mubr.f32.gmra.mxu0 %v755
  %v1104 = vpop.f32.mrf.mxu0
  %v1105 = vadd.f32 %v960, %v1104
  %v1106 = vpop.f32.mrf.mxu0
  %1107 = vmatprep.mubr.f32.mxu0 0.0
  %1108 = vmatmul.mubr.f32.gmra.mxu0 %v757
  %v1109 = vpop.f32.mrf.mxu0
  %v1110 = vadd.f32 %v965, %v1109
  %v1111 = vpop.f32.mrf.mxu0
  %1112 = vmatprep.mubr.f32.mxu0 0.0
  %1113 = vmatmul.mubr.f32.gmra.mxu0 %v759
  %v1114 = vpop.f32.mrf.mxu0
  %v1115 = vadd.f32 %v970, %v1114
  %v1116 = vpop.f32.mrf.mxu0
  %1117 = vmatprep.mubr.f32.mxu0 0.0
  %1118 = vmatmul.mubr.f32.gmra.mxu0 %v761
  %v1119 = vpop.f32.mrf.mxu0
  %v1120 = vadd.f32 %v975, %v1119
  %v1121 = vpop.f32.mrf.mxu0
  %1122 = vmatprep.mubr.f32.mxu0 0.0
  %1123 = vmatmul.mubr.f32.gmra.mxu0 %v763
  %v1124 = vpop.f32.mrf.mxu0
  %v1125 = vadd.f32 %v980, %v1124
  %v1126 = vpop.f32.mrf.mxu0
  %1127 = vmatprep.mubr.f32.mxu0 0.0
  %1128 = vmatmul.mubr.f32.gmra.mxu0 %v765
  %v1129 = vpop.f32.mrf.mxu0
  %v1130 = vadd.f32 %v985, %v1129
  %v1131 = vpop.f32.mrf.mxu0
  %1132 = vmatprep.mubr.f32.mxu0 0.0
  %1133 = vmatmul.mubr.f32.gmra.mxu0 %v767
  %v1134 = vpop.f32.mrf.mxu0
  %v1135 = vadd.f32 %v990, %v1134
  %v1136 = vpop.f32.mrf.mxu0
  %1137 = vmatprep.mubr.f32.mxu0 0.0
  %1138 = vmatmul.mubr.f32.gmra.mxu0 %v804
  %v1139 = vpop.f32.mrf.mxu0
  %v1140 = vadd.f32 %v995, %v1139
  %v1141 = vpop.f32.mrf.mxu0
  %1142 = vmatprep.mubr.f32.mxu0 0.0
  %1143 = vmatmul.mubr.f32.gmra.mxu0 %v806
  %v1144 = vpop.f32.mrf.mxu0
  %v1145 = vadd.f32 %v1000, %v1144
  %v1146 = vpop.f32.mrf.mxu0
  %1147 = vmatprep.mubr.f32.mxu0 0.0
  %1148 = vmatmul.mubr.f32.gmra.mxu0 %v808
  %v1149 = vpop.f32.mrf.mxu0
  %v1150 = vadd.f32 %v1005, %v1149
  %v1151 = vpop.f32.mrf.mxu0
  %1152 = vmatprep.mubr.f32.mxu0 0.0
  %1153 = vmatmul.mubr.f32.gmra.mxu0 %v810
  %v1154 = vpop.f32.mrf.mxu0
  %v1155 = vadd.f32 %v1010, %v1154
  %v1156 = vpop.f32.mrf.mxu0
  %1157 = vmatprep.mubr.f32.mxu0 0.0
  %1158 = vmatmul.mubr.f32.gmra.mxu0 %v812
  %v1159 = vpop.f32.mrf.mxu0
  %v1160 = vadd.f32 %v1015, %v1159
  %v1161 = vpop.f32.mrf.mxu0
  %1162 = vmatprep.mubr.f32.mxu0 0.0
  %1163 = vmatmul.mubr.f32.gmra.mxu0 %v814
  %v1164 = vpop.f32.mrf.mxu0
  %v1165 = vadd.f32 %v1020, %v1164
  %v1166 = vpop.f32.mrf.mxu0
  %1167 = vmatprep.mubr.f32.mxu0 0.0
  %1168 = vmatmul.mubr.f32.gmra.mxu0 %v816
  %v1169 = vpop.f32.mrf.mxu0
  %v1170 = vadd.f32 %v1025, %v1169
  %v1171 = vpop.f32.mrf.mxu0
  %1172 = vmatprep.mubr.f32.mxu0 0.0
  %1173 = vmatmul.mubr.f32.gmra.mxu0 %v818
  %v1174 = vpop.f32.mrf.mxu0
  %v1175 = vadd.f32 %v1030, %v1174
  %v1176 = vpop.f32.mrf.mxu0
  %1177 = vdwg.mxu0
  %vm1210 = vcmask 1046528
  %v1211 = vrot.slane %v753, 1
  %v1212 = vrot.slane %v754, 1
  %v1213 = vsel %vm1210, %v1211, %v1212
  %v1214 = vrot.slane %v755, 1
  %v1215 = vrot.slane %v756, 1
  %v1216 = vsel %vm1210, %v1214, %v1215
  %v1217 = vrot.slane %v757, 1
  %v1218 = vrot.slane %v758, 1
  %v1219 = vsel %vm1210, %v1217, %v1218
  %v1220 = vrot.slane %v759, 1
  %v1221 = vrot.slane %v760, 1
  %v1222 = vsel %vm1210, %v1220, %v1221
  %v1223 = vrot.slane %v761, 1
  %v1224 = vrot.slane %v762, 1
  %v1225 = vsel %vm1210, %v1223, %v1224
  %v1226 = vrot.slane %v763, 1
  %v1227 = vrot.slane %v764, 1
  %v1228 = vsel %vm1210, %v1226, %v1227
  %v1229 = vrot.slane %v765, 1
  %v1230 = vrot.slane %v766, 1
  %v1231 = vsel %vm1210, %v1229, %v1230
  %v1232 = vrot.slane %v767, 1
  %v1233 = vrot.slane %v768, 1
  %v1234 = vsel %vm1210, %v1232, %v1233
  %v1235 = vrot.slane %v804, 1
  %v1236 = vrot.slane %v805, 1
  %v1237 = vsel %vm1210, %v1235, %v1236
  %v1238 = vrot.slane %v806, 1
  %v1239 = vrot.slane %v807, 1
  %v1240 = vsel %vm1210, %v1238, %v1239
  %v1241 = vrot.slane %v808, 1
  %v1242 = vrot.slane %v809, 1
  %v1243 = vsel %vm1210, %v1241, %v1242
  %v1244 = vrot.slane %v810, 1
  %v1245 = vrot.slane %v811, 1
  %v1246 = vsel %vm1210, %v1244, %v1245
  %v1247 = vrot.slane %v812, 1
  %v1248 = vrot.slane %v813, 1
  %v1249 = vsel %vm1210, %v1247, %v1248
  %v1250 = vrot.slane %v814, 1
  %v1251 = vrot.slane %v815, 1
  %v1252 = vsel %vm1210, %v1250, %v1251
  %v1253 = vrot.slane %v816, 1
  %v1254 = vrot.slane %v817, 1
  %v1255 = vsel %vm1210, %v1253, %v1254
  %v1256 = vrot.slane %v818, 1
  %v1257 = vrot.slane %v819, 1
  %v1258 = vsel %vm1210, %v1256, %v1257
  %s1275 = scalar_lea.vmem %s4, 256
  %v1276 = vld [vmem:[%s1275] sm:$0xff]
  %v1277 = vld [vmem:[%s1275 + $0x8] sm:$0xff]
  %v1278 = vld [vmem:[%s1275 + $0x10] sm:$0xff]
  %v1279 = vld [vmem:[%s1275 + $0x18] sm:$0xff]
  %v1280 = vld [vmem:[%s1275 + $0x20] sm:$0xff]
  %v1281 = vld [vmem:[%s1275 + $0x28] sm:$0xff]
  %v1282 = vld [vmem:[%s1275 + $0x30] sm:$0xff]
  %v1283 = vld [vmem:[%s1275 + $0x38] sm:$0xff]
  %v1284 = vld [vmem:[%s1275 + $0x40] sm:$0xff]
  %v1285 = vld [vmem:[%s1275 + $0x48] sm:$0xff]
  %v1286 = vld [vmem:[%s1275 + $0x50] sm:$0xff]
  %v1287 = vld [vmem:[%s1275 + $0x58] sm:$0xff]
  %v1288 = vld [vmem:[%s1275 + $0x60] sm:$0xff]
  %v1289 = vld [vmem:[%s1275 + $0x68] sm:$0xff]
  %v1290 = vld [vmem:[%s1275 + $0x70] sm:$0xff]
  %v1291 = vld [vmem:[%s1275 + $0x78] sm:$0xff]
  %1292 = vmatprep.subr.mxu0 0.0
  %1293 = vmatpush1.msra.mxu0 %v1291
  %1294 = vmatprep.subr.mxu0 0.0
  %1295 = vmatpush1.msra.mxu0 %v1290
  %1296 = vmatprep.subr.mxu0 0.0
  %1297 = vmatpush1.msra.mxu0 %v1289
  %1298 = vmatprep.subr.mxu0 0.0
  %1299 = vmatpush1.msra.mxu0 %v1288
  %1300 = vmatprep.subr.mxu0 0.0
  %1301 = vmatpush1.msra.mxu0 %v1287
  %1302 = vmatprep.subr.mxu0 0.0
  %1303 = vmatpush1.msra.mxu0 %v1286
  %1304 = vmatprep.subr.mxu0 0.0
  %1305 = vmatpush1.msra.mxu0 %v1285
  %1306 = vmatprep.subr.mxu0 0.0
  %1307 = vmatpush1.msra.mxu0 %v1284
  %1308 = vmatprep.subr.mxu0 0.0
  %1309 = vmatpush1.msra.mxu0 %v1283
  %1310 = vmatprep.subr.mxu0 0.0
  %1311 = vmatpush1.msra.mxu0 %v1282
  %1312 = vmatprep.subr.mxu0 0.0
  %1313 = vmatpush1.msra.mxu0 %v1281
  %1314 = vmatprep.subr.mxu0 0.0
  %1315 = vmatpush1.msra.mxu0 %v1280
  %1316 = vmatprep.subr.mxu0 0.0
  %1317 = vmatpush1.msra.mxu0 %v1279
  %1318 = vmatprep.subr.mxu0 0.0
  %1319 = vmatpush1.msra.mxu0 %v1278
  %1320 = vmatprep.subr.mxu0 0.0
  %1321 = vmatpush1.msra.mxu0 %v1277
  %1322 = vmatprep.subr.mxu0 0.0
  %1323 = vmatpush1.msra.mxu0 %v1276
  %1324 = vmatprep.subr.mxu0 0.0
  %1325 = vmatpush2.msra.mxu0 0.0
  %1326 = vmatprep.subr.mxu0 0.0
  %1327 = vmatpush2.msra.mxu0 0.0
  %1328 = vmatprep.subr.mxu0 0.0
  %1329 = vmatpush2.msra.mxu0 0.0
  %1330 = vmatprep.subr.mxu0 0.0
  %1331 = vmatpush2.msra.mxu0 0.0
  %1332 = vmatprep.subr.mxu0 0.0
  %1333 = vmatpush2.msra.mxu0 0.0
  %1334 = vmatprep.subr.mxu0 0.0
  %1335 = vmatpush2.msra.mxu0 0.0
  %1336 = vmatprep.subr.mxu0 0.0
  %1337 = vmatpush2.msra.mxu0 0.0
  %1338 = vmatprep.subr.mxu0 0.0
  %1339 = vmatpush2.msra.mxu0 0.0
  %1340 = vmatprep.subr.mxu0 0.0
  %1341 = vmatpush2.msra.mxu0 0.0
  %1342 = vmatprep.subr.mxu0 0.0
  %1343 = vmatpush2.msra.mxu0 0.0
  %1344 = vmatprep.subr.mxu0 0.0
  %1345 = vmatpush2.msra.mxu0 0.0
  %1346 = vmatprep.subr.mxu0 0.0
  %1347 = vmatpush2.msra.mxu0 0.0
  %1348 = vmatprep.subr.mxu0 0.0
  %1349 = vmatpush2.msra.mxu0 0.0
  %1350 = vmatprep.subr.mxu0 0.0
  %1351 = vmatpush2.msra.mxu0 0.0
  %1352 = vmatprep.subr.mxu0 0.0
  %1353 = vmatpush2.msra.mxu0 0.0
  %1354 = vmatprep.subr.mxu0 0.0
  %1355 = vmatpush2.msra.mxu0 0.0
  %1356 = vmatprep.mubr.f32.mxu0 0.0
  %1357 = vmatmul.mubr.f32.gmra.mxu0 %v1213
  %v1358 = vpop.f32.mrf.mxu0
  %v1359 = vadd.f32 0.0, %v1358
  %v1360 = vpop.f32.mrf.mxu0
  %1361 = vmatprep.mubr.f32.mxu0 0.0
  %1362 = vmatmul.mubr.f32.gmra.mxu0 %v1216
  %v1363 = vpop.f32.mrf.mxu0
  %v1364 = vadd.f32 0.0, %v1363
  %v1365 = vpop.f32.mrf.mxu0
  %1366 = vmatprep.mubr.f32.mxu0 0.0
  %1367 = vmatmul.mubr.f32.gmra.mxu0 %v1219
  %v1368 = vpop.f32.mrf.mxu0
  %v1369 = vadd.f32 0.0, %v1368
  %v1370 = vpop.f32.mrf.mxu0
  %1371 = vmatprep.mubr.f32.mxu0 0.0
  %1372 = vmatmul.mubr.f32.gmra.mxu0 %v1222
  %v1373 = vpop.f32.mrf.mxu0
  %v1374 = vadd.f32 0.0, %v1373
  %v1375 = vpop.f32.mrf.mxu0
  %1376 = vmatprep.mubr.f32.mxu0 0.0
  %1377 = vmatmul.mubr.f32.gmra.mxu0 %v1225
  %v1378 = vpop.f32.mrf.mxu0
  %v1379 = vadd.f32 0.0, %v1378
  %v1380 = vpop.f32.mrf.mxu0
  %1381 = vmatprep.mubr.f32.mxu0 0.0
  %1382 = vmatmul.mubr.f32.gmra.mxu0 %v1228
  %v1383 = vpop.f32.mrf.mxu0
  %v1384 = vadd.f32 0.0, %v1383
  %v1385 = vpop.f32.mrf.mxu0
  %1386 = vmatprep.mubr.f32.mxu0 0.0
  %1387 = vmatmul.mubr.f32.gmra.mxu0 %v1231
  %v1388 = vpop.f32.mrf.mxu0
  %v1389 = vadd.f32 0.0, %v1388
  %v1390 = vpop.f32.mrf.mxu0
  %1391 = vmatprep.mubr.f32.mxu0 0.0
  %1392 = vmatmul.mubr.f32.gmra.mxu0 %v1234
  %v1393 = vpop.f32.mrf.mxu0
  %v1394 = vadd.f32 0.0, %v1393
  %v1395 = vpop.f32.mrf.mxu0
  %1396 = vmatprep.mubr.f32.mxu0 0.0
  %1397 = vmatmul.mubr.f32.gmra.mxu0 %v1237
  %v1398 = vpop.f32.mrf.mxu0
  %v1399 = vadd.f32 0.0, %v1398
  %v1400 = vpop.f32.mrf.mxu0
  %1401 = vmatprep.mubr.f32.mxu0 0.0
  %1402 = vmatmul.mubr.f32.gmra.mxu0 %v1240
  %v1403 = vpop.f32.mrf.mxu0
  %v1404 = vadd.f32 0.0, %v1403
  %v1405 = vpop.f32.mrf.mxu0
  %1406 = vmatprep.mubr.f32.mxu0 0.0
  %1407 = vmatmul.mubr.f32.gmra.mxu0 %v1243
  %v1408 = vpop.f32.mrf.mxu0
  %v1409 = vadd.f32 0.0, %v1408
  %v1410 = vpop.f32.mrf.mxu0
  %1411 = vmatprep.mubr.f32.mxu0 0.0
  %1412 = vmatmul.mubr.f32.gmra.mxu0 %v1246
  %v1413 = vpop.f32.mrf.mxu0
  %v1414 = vadd.f32 0.0, %v1413
  %v1415 = vpop.f32.mrf.mxu0
  %1416 = vmatprep.mubr.f32.mxu0 0.0
  %1417 = vmatmul.mubr.f32.gmra.mxu0 %v1249
  %v1418 = vpop.f32.mrf.mxu0
  %v1419 = vadd.f32 0.0, %v1418
  %v1420 = vpop.f32.mrf.mxu0
  %1421 = vmatprep.mubr.f32.mxu0 0.0
  %1422 = vmatmul.mubr.f32.gmra.mxu0 %v1252
  %v1423 = vpop.f32.mrf.mxu0
  %v1424 = vadd.f32 0.0, %v1423
  %v1425 = vpop.f32.mrf.mxu0
  %1426 = vmatprep.mubr.f32.mxu0 0.0
  %1427 = vmatmul.mubr.f32.gmra.mxu0 %v1255
  %v1428 = vpop.f32.mrf.mxu0
  %v1429 = vadd.f32 0.0, %v1428
  %v1430 = vpop.f32.mrf.mxu0
  %1431 = vmatprep.mubr.f32.mxu0 0.0
  %1432 = vmatmul.mubr.f32.gmra.mxu0 %v1258
  %v1433 = vpop.f32.mrf.mxu0
  %v1434 = vadd.f32 0.0, %v1433
  %v1435 = vpop.f32.mrf.mxu0
  %1436 = vdwg.mxu0
  %v1437 = vadd.f32 %v1100, %v1359
  %v1438 = vadd.f32 %v1105, %v1364
  %v1439 = vadd.f32 %v1110, %v1369
  %v1440 = vadd.f32 %v1115, %v1374
  %v1441 = vadd.f32 %v1120, %v1379
  %v1442 = vadd.f32 %v1125, %v1384
  %v1443 = vadd.f32 %v1130, %v1389
  %v1444 = vadd.f32 %v1135, %v1394
  %v1445 = vadd.f32 %v1140, %v1399
  %v1446 = vadd.f32 %v1145, %v1404
  %v1447 = vadd.f32 %v1150, %v1409
  %v1448 = vadd.f32 %v1155, %v1414
  %v1449 = vadd.f32 %v1160, %v1419
  %v1450 = vadd.f32 %v1165, %v1424
  %v1451 = vadd.f32 %v1170, %v1429
  %v1452 = vadd.f32 %v1175, %v1434
  %s1453 = scalar_lea.vmem %s4, 384
  %v1454 = vld [vmem:[%s1453] sm:$0xff]
  %v1455 = vld [vmem:[%s1453 + $0x8] sm:$0xff]
  %v1456 = vld [vmem:[%s1453 + $0x10] sm:$0xff]
  %v1457 = vld [vmem:[%s1453 + $0x18] sm:$0xff]
  %v1458 = vld [vmem:[%s1453 + $0x20] sm:$0xff]
  %v1459 = vld [vmem:[%s1453 + $0x28] sm:$0xff]
  %v1460 = vld [vmem:[%s1453 + $0x30] sm:$0xff]
  %v1461 = vld [vmem:[%s1453 + $0x38] sm:$0xff]
  %v1462 = vld [vmem:[%s1453 + $0x40] sm:$0xff]
  %v1463 = vld [vmem:[%s1453 + $0x48] sm:$0xff]
  %v1464 = vld [vmem:[%s1453 + $0x50] sm:$0xff]
  %v1465 = vld [vmem:[%s1453 + $0x58] sm:$0xff]
  %v1466 = vld [vmem:[%s1453 + $0x60] sm:$0xff]
  %v1467 = vld [vmem:[%s1453 + $0x68] sm:$0xff]
  %v1468 = vld [vmem:[%s1453 + $0x70] sm:$0xff]
  %v1469 = vld [vmem:[%s1453 + $0x78] sm:$0xff]
  %1470 = vmatprep.subr.mxu0 0.0
  %1471 = vmatpush1.msra.mxu0 %v1469
  %1472 = vmatprep.subr.mxu0 0.0
  %1473 = vmatpush1.msra.mxu0 %v1468
  %1474 = vmatprep.subr.mxu0 0.0
  %1475 = vmatpush1.msra.mxu0 %v1467
  %1476 = vmatprep.subr.mxu0 0.0
  %1477 = vmatpush1.msra.mxu0 %v1466
  %1478 = vmatprep.subr.mxu0 0.0
  %1479 = vmatpush1.msra.mxu0 %v1465
  %1480 = vmatprep.subr.mxu0 0.0
  %1481 = vmatpush1.msra.mxu0 %v1464
  %1482 = vmatprep.subr.mxu0 0.0
  %1483 = vmatpush1.msra.mxu0 %v1463
  %1484 = vmatprep.subr.mxu0 0.0
  %1485 = vmatpush1.msra.mxu0 %v1462
  %1486 = vmatprep.subr.mxu0 0.0
  %1487 = vmatpush1.msra.mxu0 %v1461
  %1488 = vmatprep.subr.mxu0 0.0
  %1489 = vmatpush1.msra.mxu0 %v1460
  %1490 = vmatprep.subr.mxu0 0.0
  %1491 = vmatpush1.msra.mxu0 %v1459
  %1492 = vmatprep.subr.mxu0 0.0
  %1493 = vmatpush1.msra.mxu0 %v1458
  %1494 = vmatprep.subr.mxu0 0.0
  %1495 = vmatpush1.msra.mxu0 %v1457
  %1496 = vmatprep.subr.mxu0 0.0
  %1497 = vmatpush1.msra.mxu0 %v1456
  %1498 = vmatprep.subr.mxu0 0.0
  %1499 = vmatpush1.msra.mxu0 %v1455
  %1500 = vmatprep.subr.mxu0 0.0
  %1501 = vmatpush1.msra.mxu0 %v1454
  %1502 = vmatprep.subr.mxu0 0.0
  %1503 = vmatpush2.msra.mxu0 0.0
  %1504 = vmatprep.subr.mxu0 0.0
  %1505 = vmatpush2.msra.mxu0 0.0
  %1506 = vmatprep.subr.mxu0 0.0
  %1507 = vmatpush2.msra.mxu0 0.0
  %1508 = vmatprep.subr.mxu0 0.0
  %1509 = vmatpush2.msra.mxu0 0.0
  %1510 = vmatprep.subr.mxu0 0.0
  %1511 = vmatpush2.msra.mxu0 0.0
  %1512 = vmatprep.subr.mxu0 0.0
  %1513 = vmatpush2.msra.mxu0 0.0
  %1514 = vmatprep.subr.mxu0 0.0
  %1515 = vmatpush2.msra.mxu0 0.0
  %1516 = vmatprep.subr.mxu0 0.0
  %1517 = vmatpush2.msra.mxu0 0.0
  %1518 = vmatprep.subr.mxu0 0.0
  %1519 = vmatpush2.msra.mxu0 0.0
  %1520 = vmatprep.subr.mxu0 0.0
  %1521 = vmatpush2.msra.mxu0 0.0
  %1522 = vmatprep.subr.mxu0 0.0
  %1523 = vmatpush2.msra.mxu0 0.0
  %1524 = vmatprep.subr.mxu0 0.0
  %1525 = vmatpush2.msra.mxu0 0.0
  %1526 = vmatprep.subr.mxu0 0.0
  %1527 = vmatpush2.msra.mxu0 0.0
  %1528 = vmatprep.subr.mxu0 0.0
  %1529 = vmatpush2.msra.mxu0 0.0
  %1530 = vmatprep.subr.mxu0 0.0
  %1531 = vmatpush2.msra.mxu0 0.0
  %1532 = vmatprep.subr.mxu0 0.0
  %1533 = vmatpush2.msra.mxu0 0.0
  %1534 = vmatprep.mubr.f32.mxu0 0.0
  %1535 = vmatmul.mubr.f32.gmra.mxu0 %v780
  %v1536 = vpop.f32.mrf.mxu0
  %v1537 = vadd.f32 0.0, %v1536
  %v1538 = vpop.f32.mrf.mxu0
  %1539 = vmatprep.mubr.f32.mxu0 0.0
  %1540 = vmatmul.mubr.f32.gmra.mxu0 %v782
  %v1541 = vpop.f32.mrf.mxu0
  %v1542 = vadd.f32 0.0, %v1541
  %v1543 = vpop.f32.mrf.mxu0
  %1544 = vmatprep.mubr.f32.mxu0 0.0
  %1545 = vmatmul.mubr.f32.gmra.mxu0 %v784
  %v1546 = vpop.f32.mrf.mxu0
  %v1547 = vadd.f32 0.0, %v1546
  %v1548 = vpop.f32.mrf.mxu0
  %1549 = vmatprep.mubr.f32.mxu0 0.0
  %1550 = vmatmul.mubr.f32.gmra.mxu0 %v786
  %v1551 = vpop.f32.mrf.mxu0
  %v1552 = vadd.f32 0.0, %v1551
  %v1553 = vpop.f32.mrf.mxu0
  %1554 = vmatprep.mubr.f32.mxu0 0.0
  %1555 = vmatmul.mubr.f32.gmra.mxu0 %v788
  %v1556 = vpop.f32.mrf.mxu0
  %v1557 = vadd.f32 0.0, %v1556
  %v1558 = vpop.f32.mrf.mxu0
  %1559 = vmatprep.mubr.f32.mxu0 0.0
  %1560 = vmatmul.mubr.f32.gmra.mxu0 %v790
  %v1561 = vpop.f32.mrf.mxu0
  %v1562 = vadd.f32 0.0, %v1561
  %v1563 = vpop.f32.mrf.mxu0
  %1564 = vmatprep.mubr.f32.mxu0 0.0
  %1565 = vmatmul.mubr.f32.gmra.mxu0 %v792
  %v1566 = vpop.f32.mrf.mxu0
  %v1567 = vadd.f32 0.0, %v1566
  %v1568 = vpop.f32.mrf.mxu0
  %1569 = vmatprep.mubr.f32.mxu0 0.0
  %1570 = vmatmul.mubr.f32.gmra.mxu0 %v794
  %v1571 = vpop.f32.mrf.mxu0
  %v1572 = vadd.f32 0.0, %v1571
  %v1573 = vpop.f32.mrf.mxu0
  %1574 = vmatprep.mubr.f32.mxu0 0.0
  %1575 = vmatmul.mubr.f32.gmra.mxu0 %v831
  %v1576 = vpop.f32.mrf.mxu0
  %v1577 = vadd.f32 0.0, %v1576
  %v1578 = vpop.f32.mrf.mxu0
  %1579 = vmatprep.mubr.f32.mxu0 0.0
  %1580 = vmatmul.mubr.f32.gmra.mxu0 %v833
  %v1581 = vpop.f32.mrf.mxu0
  %v1582 = vadd.f32 0.0, %v1581
  %v1583 = vpop.f32.mrf.mxu0
  %1584 = vmatprep.mubr.f32.mxu0 0.0
  %1585 = vmatmul.mubr.f32.gmra.mxu0 %v835
  %v1586 = vpop.f32.mrf.mxu0
  %v1587 = vadd.f32 0.0, %v1586
  %v1588 = vpop.f32.mrf.mxu0
  %1589 = vmatprep.mubr.f32.mxu0 0.0
  %1590 = vmatmul.mubr.f32.gmra.mxu0 %v837
  %v1591 = vpop.f32.mrf.mxu0
  %v1592 = vadd.f32 0.0, %v1591
  %v1593 = vpop.f32.mrf.mxu0
  %1594 = vmatprep.mubr.f32.mxu0 0.0
  %1595 = vmatmul.mubr.f32.gmra.mxu0 %v839
  %v1596 = vpop.f32.mrf.mxu0
  %v1597 = vadd.f32 0.0, %v1596
  %v1598 = vpop.f32.mrf.mxu0
  %1599 = vmatprep.mubr.f32.mxu0 0.0
  %1600 = vmatmul.mubr.f32.gmra.mxu0 %v841
  %v1601 = vpop.f32.mrf.mxu0
  %v1602 = vadd.f32 0.0, %v1601
  %v1603 = vpop.f32.mrf.mxu0
  %1604 = vmatprep.mubr.f32.mxu0 0.0
  %1605 = vmatmul.mubr.f32.gmra.mxu0 %v843
  %v1606 = vpop.f32.mrf.mxu0
  %v1607 = vadd.f32 0.0, %v1606
  %v1608 = vpop.f32.mrf.mxu0
  %1609 = vmatprep.mubr.f32.mxu0 0.0
  %1610 = vmatmul.mubr.f32.gmra.mxu0 %v845
  %v1611 = vpop.f32.mrf.mxu0
  %v1612 = vadd.f32 0.0, %v1611
  %v1613 = vpop.f32.mrf.mxu0
  %1614 = vdwg.mxu0
  %v1615 = vadd.f32 %v1437, %v1537
  %v1616 = vadd.f32 %v1438, %v1542
  %v1617 = vadd.f32 %v1439, %v1547
  %v1618 = vadd.f32 %v1440, %v1552
  %v1619 = vadd.f32 %v1441, %v1557
  %v1620 = vadd.f32 %v1442, %v1562
  %v1621 = vadd.f32 %v1443, %v1567
  %v1622 = vadd.f32 %v1444, %v1572
  %v1623 = vadd.f32 %v1445, %v1577
  %v1624 = vadd.f32 %v1446, %v1582
  %v1625 = vadd.f32 %v1447, %v1587
  %v1626 = vadd.f32 %v1448, %v1592
  %v1627 = vadd.f32 %v1449, %v1597
  %v1628 = vadd.f32 %v1450, %v1602
  %v1629 = vadd.f32 %v1451, %v1607
  %v1630 = vadd.f32 %v1452, %v1612
  %s1631 = scalar_lea.vmem %s4, 512
  %v1632 = vld [vmem:[%s1631] sm:$0xff]
  %v1633 = vld [vmem:[%s1631 + $0x8] sm:$0xff]
  %v1634 = vld [vmem:[%s1631 + $0x10] sm:$0xff]
  %v1635 = vld [vmem:[%s1631 + $0x18] sm:$0xff]
  %v1636 = vld [vmem:[%s1631 + $0x20] sm:$0xff]
  %v1637 = vld [vmem:[%s1631 + $0x28] sm:$0xff]
  %v1638 = vld [vmem:[%s1631 + $0x30] sm:$0xff]
  %v1639 = vld [vmem:[%s1631 + $0x38] sm:$0xff]
  %v1640 = vld [vmem:[%s1631 + $0x40] sm:$0xff]
  %v1641 = vld [vmem:[%s1631 + $0x48] sm:$0xff]
  %v1642 = vld [vmem:[%s1631 + $0x50] sm:$0xff]
  %v1643 = vld [vmem:[%s1631 + $0x58] sm:$0xff]
  %v1644 = vld [vmem:[%s1631 + $0x60] sm:$0xff]
  %v1645 = vld [vmem:[%s1631 + $0x68] sm:$0xff]
  %v1646 = vld [vmem:[%s1631 + $0x70] sm:$0xff]
  %v1647 = vld [vmem:[%s1631 + $0x78] sm:$0xff]
  %1648 = vmatprep.subr.mxu0 0.0
  %1649 = vmatpush1.msra.mxu0 %v1647
  %1650 = vmatprep.subr.mxu0 0.0
  %1651 = vmatpush1.msra.mxu0 %v1646
  %1652 = vmatprep.subr.mxu0 0.0
  %1653 = vmatpush1.msra.mxu0 %v1645
  %1654 = vmatprep.subr.mxu0 0.0
  %1655 = vmatpush1.msra.mxu0 %v1644
  %1656 = vmatprep.subr.mxu0 0.0
  %1657 = vmatpush1.msra.mxu0 %v1643
  %1658 = vmatprep.subr.mxu0 0.0
  %1659 = vmatpush1.msra.mxu0 %v1642
  %1660 = vmatprep.subr.mxu0 0.0
  %1661 = vmatpush1.msra.mxu0 %v1641
  %1662 = vmatprep.subr.mxu0 0.0
  %1663 = vmatpush1.msra.mxu0 %v1640
  %1664 = vmatprep.subr.mxu0 0.0
  %1665 = vmatpush1.msra.mxu0 %v1639
  %1666 = vmatprep.subr.mxu0 0.0
  %1667 = vmatpush1.msra.mxu0 %v1638
  %1668 = vmatprep.subr.mxu0 0.0
  %1669 = vmatpush1.msra.mxu0 %v1637
  %1670 = vmatprep.subr.mxu0 0.0
  %1671 = vmatpush1.msra.mxu0 %v1636
  %1672 = vmatprep.subr.mxu0 0.0
  %1673 = vmatpush1.msra.mxu0 %v1635
  %1674 = vmatprep.subr.mxu0 0.0
  %1675 = vmatpush1.msra.mxu0 %v1634
  %1676 = vmatprep.subr.mxu0 0.0
  %1677 = vmatpush1.msra.mxu0 %v1633
  %1678 = vmatprep.subr.mxu0 0.0
  %1679 = vmatpush1.msra.mxu0 %v1632
  %1680 = vmatprep.subr.mxu0 0.0
  %1681 = vmatpush2.msra.mxu0 0.0
  %1682 = vmatprep.subr.mxu0 0.0
  %1683 = vmatpush2.msra.mxu0 0.0
  %1684 = vmatprep.subr.mxu0 0.0
  %1685 = vmatpush2.msra.mxu0 0.0
  %1686 = vmatprep.subr.mxu0 0.0
  %1687 = vmatpush2.msra.mxu0 0.0
  %1688 = vmatprep.subr.mxu0 0.0
  %1689 = vmatpush2.msra.mxu0 0.0
  %1690 = vmatprep.subr.mxu0 0.0
  %1691 = vmatpush2.msra.mxu0 0.0
  %1692 = vmatprep.subr.mxu0 0.0
  %1693 = vmatpush2.msra.mxu0 0.0
  %1694 = vmatprep.subr.mxu0 0.0
  %1695 = vmatpush2.msra.mxu0 0.0
  %1696 = vmatprep.subr.mxu0 0.0
  %1697 = vmatpush2.msra.mxu0 0.0
  %1698 = vmatprep.subr.mxu0 0.0
  %1699 = vmatpush2.msra.mxu0 0.0
  %1700 = vmatprep.subr.mxu0 0.0
  %1701 = vmatpush2.msra.mxu0 0.0
  %1702 = vmatprep.subr.mxu0 0.0
  %1703 = vmatpush2.msra.mxu0 0.0
  %1704 = vmatprep.subr.mxu0 0.0
  %1705 = vmatpush2.msra.mxu0 0.0
  %1706 = vmatprep.subr.mxu0 0.0
  %1707 = vmatpush2.msra.mxu0 0.0
  %1708 = vmatprep.subr.mxu0 0.0
  %1709 = vmatpush2.msra.mxu0 0.0
  %1710 = vmatprep.subr.mxu0 0.0
  %1711 = vmatpush2.msra.mxu0 0.0
  %1712 = vmatprep.mubr.f32.mxu0 0.0
  %1713 = vmatmul.mubr.f32.gmra.mxu0 %v796
  %v1714 = vpop.f32.mrf.mxu0
  %v1715 = vadd.f32 0.0, %v1714
  %v1716 = vpop.f32.mrf.mxu0
  %1717 = vmatprep.mubr.f32.mxu0 0.0
  %1718 = vmatmul.mubr.f32.gmra.mxu0 %v797
  %v1719 = vpop.f32.mrf.mxu0
  %v1720 = vadd.f32 0.0, %v1719
  %v1721 = vpop.f32.mrf.mxu0
  %1722 = vmatprep.mubr.f32.mxu0 0.0
  %1723 = vmatmul.mubr.f32.gmra.mxu0 %v798
  %v1724 = vpop.f32.mrf.mxu0
  %v1725 = vadd.f32 0.0, %v1724
  %v1726 = vpop.f32.mrf.mxu0
  %1727 = vmatprep.mubr.f32.mxu0 0.0
  %1728 = vmatmul.mubr.f32.gmra.mxu0 %v799
  %v1729 = vpop.f32.mrf.mxu0
  %v1730 = vadd.f32 0.0, %v1729
  %v1731 = vpop.f32.mrf.mxu0
  %1732 = vmatprep.mubr.f32.mxu0 0.0
  %1733 = vmatmul.mubr.f32.gmra.mxu0 %v800
  %v1734 = vpop.f32.mrf.mxu0
  %v1735 = vadd.f32 0.0, %v1734
  %v1736 = vpop.f32.mrf.mxu0
  %1737 = vmatprep.mubr.f32.mxu0 0.0
  %1738 = vmatmul.mubr.f32.gmra.mxu0 %v801
  %v1739 = vpop.f32.mrf.mxu0
  %v1740 = vadd.f32 0.0, %v1739
  %v1741 = vpop.f32.mrf.mxu0
  %1742 = vmatprep.mubr.f32.mxu0 0.0
  %1743 = vmatmul.mubr.f32.gmra.mxu0 %v802
  %v1744 = vpop.f32.mrf.mxu0
  %v1745 = vadd.f32 0.0, %v1744
  %v1746 = vpop.f32.mrf.mxu0
  %1747 = vmatprep.mubr.f32.mxu0 0.0
  %1748 = vmatmul.mubr.f32.gmra.mxu0 %v803
  %v1749 = vpop.f32.mrf.mxu0
  %v1750 = vadd.f32 0.0, %v1749
  %v1751 = vpop.f32.mrf.mxu0
  %1752 = vmatprep.mubr.f32.mxu0 0.0
  %1753 = vmatmul.mubr.f32.gmra.mxu0 %v847
  %v1754 = vpop.f32.mrf.mxu0
  %v1755 = vadd.f32 0.0, %v1754
  %v1756 = vpop.f32.mrf.mxu0
  %1757 = vmatprep.mubr.f32.mxu0 0.0
  %1758 = vmatmul.mubr.f32.gmra.mxu0 %v848
  %v1759 = vpop.f32.mrf.mxu0
  %v1760 = vadd.f32 0.0, %v1759
  %v1761 = vpop.f32.mrf.mxu0
  %1762 = vmatprep.mubr.f32.mxu0 0.0
  %1763 = vmatmul.mubr.f32.gmra.mxu0 %v849
  %v1764 = vpop.f32.mrf.mxu0
  %v1765 = vadd.f32 0.0, %v1764
  %v1766 = vpop.f32.mrf.mxu0
  %1767 = vmatprep.mubr.f32.mxu0 0.0
  %1768 = vmatmul.mubr.f32.gmra.mxu0 %v850
  %v1769 = vpop.f32.mrf.mxu0
  %v1770 = vadd.f32 0.0, %v1769
  %v1771 = vpop.f32.mrf.mxu0
  %1772 = vmatprep.mubr.f32.mxu0 0.0
  %1773 = vmatmul.mubr.f32.gmra.mxu0 %v851
  %v1774 = vpop.f32.mrf.mxu0
  %v1775 = vadd.f32 0.0, %v1774
  %v1776 = vpop.f32.mrf.mxu0
  %1777 = vmatprep.mubr.f32.mxu0 0.0
  %1778 = vmatmul.mubr.f32.gmra.mxu0 %v852
  %v1779 = vpop.f32.mrf.mxu0
  %v1780 = vadd.f32 0.0, %v1779
  %v1781 = vpop.f32.mrf.mxu0
  %1782 = vmatprep.mubr.f32.mxu0 0.0
  %1783 = vmatmul.mubr.f32.gmra.mxu0 %v853
  %v1784 = vpop.f32.mrf.mxu0
  %v1785 = vadd.f32 0.0, %v1784
  %v1786 = vpop.f32.mrf.mxu0
  %1787 = vmatprep.mubr.f32.mxu0 0.0
  %1788 = vmatmul.mubr.f32.gmra.mxu0 %v854
  %v1789 = vpop.f32.mrf.mxu0
  %v1790 = vadd.f32 0.0, %v1789
  %v1791 = vpop.f32.mrf.mxu0
  %1792 = vdwg.mxu0
  %v1793 = vadd.f32 %v1615, %v1715
  %v1794 = vadd.f32 %v1616, %v1720
  %v1795 = vadd.f32 %v1617, %v1725
  %v1796 = vadd.f32 %v1618, %v1730
  %v1797 = vadd.f32 %v1619, %v1735
  %v1798 = vadd.f32 %v1620, %v1740
  %v1799 = vadd.f32 %v1621, %v1745
  %v1800 = vadd.f32 %v1622, %v1750
  %v1801 = vadd.f32 %v1623, %v1755
  %v1802 = vadd.f32 %v1624, %v1760
  %v1803 = vadd.f32 %v1625, %v1765
  %v1804 = vadd.f32 %v1626, %v1770
  %v1805 = vadd.f32 %v1627, %v1775
  %v1806 = vadd.f32 %v1628, %v1780
  %v1807 = vadd.f32 %v1629, %v1785
  %v1808 = vadd.f32 %v1630, %v1790
  %v1809 = vld [vmem:[%s5] sm:$0xff]
  %v1810 = vld [vmem:[%s5 + $0x8] sm:$0xff]
  %v1811 = vld [vmem:[%s5 + $0x10] sm:$0xff]
  %v1812 = vld [vmem:[%s5 + $0x18] sm:$0xff]
  %v1813 = vld [vmem:[%s5 + $0x20] sm:$0xff]
  %v1814 = vld [vmem:[%s5 + $0x28] sm:$0xff]
  %v1815 = vld [vmem:[%s5 + $0x30] sm:$0xff]
  %v1816 = vld [vmem:[%s5 + $0x38] sm:$0xff]
  %v1817 = vld [vmem:[%s5 + $0x40] sm:$0xff]
  %v1818 = vld [vmem:[%s5 + $0x48] sm:$0xff]
  %v1819 = vld [vmem:[%s5 + $0x50] sm:$0xff]
  %v1820 = vld [vmem:[%s5 + $0x58] sm:$0xff]
  %v1821 = vld [vmem:[%s5 + $0x60] sm:$0xff]
  %v1822 = vld [vmem:[%s5 + $0x68] sm:$0xff]
  %v1823 = vld [vmem:[%s5 + $0x70] sm:$0xff]
  %v1824 = vld [vmem:[%s5 + $0x78] sm:$0xff]
  %1825 = vmatprep.subr.mxu0 0.0
  %1826 = vmatpush1.msra.mxu0 %v1824
  %1827 = vmatprep.subr.mxu0 0.0
  %1828 = vmatpush1.msra.mxu0 %v1823
  %1829 = vmatprep.subr.mxu0 0.0
  %1830 = vmatpush1.msra.mxu0 %v1822
  %1831 = vmatprep.subr.mxu0 0.0
  %1832 = vmatpush1.msra.mxu0 %v1821
  %1833 = vmatprep.subr.mxu0 0.0
  %1834 = vmatpush1.msra.mxu0 %v1820
  %1835 = vmatprep.subr.mxu0 0.0
  %1836 = vmatpush1.msra.mxu0 %v1819
  %1837 = vmatprep.subr.mxu0 0.0
  %1838 = vmatpush1.msra.mxu0 %v1818
  %1839 = vmatprep.subr.mxu0 0.0
  %1840 = vmatpush1.msra.mxu0 %v1817
  %1841 = vmatprep.subr.mxu0 0.0
  %1842 = vmatpush1.msra.mxu0 %v1816
  %1843 = vmatprep.subr.mxu0 0.0
  %1844 = vmatpush1.msra.mxu0 %v1815
  %1845 = vmatprep.subr.mxu0 0.0
  %1846 = vmatpush1.msra.mxu0 %v1814
  %1847 = vmatprep.subr.mxu0 0.0
  %1848 = vmatpush1.msra.mxu0 %v1813
  %1849 = vmatprep.subr.mxu0 0.0
  %1850 = vmatpush1.msra.mxu0 %v1812
  %1851 = vmatprep.subr.mxu0 0.0
  %1852 = vmatpush1.msra.mxu0 %v1811
  %1853 = vmatprep.subr.mxu0 0.0
  %1854 = vmatpush1.msra.mxu0 %v1810
  %1855 = vmatprep.subr.mxu0 0.0
  %1856 = vmatpush1.msra.mxu0 %v1809
  %1857 = vmatprep.subr.mxu0 0.0
  %1858 = vmatpush2.msra.mxu0 0.0
  %1859 = vmatprep.subr.mxu0 0.0
  %1860 = vmatpush2.msra.mxu0 0.0
  %1861 = vmatprep.subr.mxu0 0.0
  %1862 = vmatpush2.msra.mxu0 0.0
  %1863 = vmatprep.subr.mxu0 0.0
  %1864 = vmatpush2.msra.mxu0 0.0
  %1865 = vmatprep.subr.mxu0 0.0
  %1866 = vmatpush2.msra.mxu0 0.0
  %1867 = vmatprep.subr.mxu0 0.0
  %1868 = vmatpush2.msra.mxu0 0.0
  %1869 = vmatprep.subr.mxu0 0.0
  %1870 = vmatpush2.msra.mxu0 0.0
  %1871 = vmatprep.subr.mxu0 0.0
  %1872 = vmatpush2.msra.mxu0 0.0
  %1873 = vmatprep.subr.mxu0 0.0
  %1874 = vmatpush2.msra.mxu0 0.0
  %1875 = vmatprep.subr.mxu0 0.0
  %1876 = vmatpush2.msra.mxu0 0.0
  %1877 = vmatprep.subr.mxu0 0.0
  %1878 = vmatpush2.msra.mxu0 0.0
  %1879 = vmatprep.subr.mxu0 0.0
  %1880 = vmatpush2.msra.mxu0 0.0
  %1881 = vmatprep.subr.mxu0 0.0
  %1882 = vmatpush2.msra.mxu0 0.0
  %1883 = vmatprep.subr.mxu0 0.0
  %1884 = vmatpush2.msra.mxu0 0.0
  %1885 = vmatprep.subr.mxu0 0.0
  %1886 = vmatpush2.msra.mxu0 0.0
  %1887 = vmatprep.subr.mxu0 0.0
  %1888 = vmatpush2.msra.mxu0 0.0
  %1889 = vmatprep.mubr.f32.mxu0 0.0
  %1890 = vmatmul.mubr.f32.gmra.mxu0 %v796
  %v1891 = vpop.f32.mrf.mxu0
  %v1892 = vadd.f32 0.0, %v1891
  %v1893 = vpop.f32.mrf.mxu0
  %1894 = vmatprep.mubr.f32.mxu0 0.0
  %1895 = vmatmul.mubr.f32.gmra.mxu0 %v797
  %v1896 = vpop.f32.mrf.mxu0
  %v1897 = vadd.f32 0.0, %v1896
  %v1898 = vpop.f32.mrf.mxu0
  %1899 = vmatprep.mubr.f32.mxu0 0.0
  %1900 = vmatmul.mubr.f32.gmra.mxu0 %v798
  %v1901 = vpop.f32.mrf.mxu0
  %v1902 = vadd.f32 0.0, %v1901
  %v1903 = vpop.f32.mrf.mxu0
  %1904 = vmatprep.mubr.f32.mxu0 0.0
  %1905 = vmatmul.mubr.f32.gmra.mxu0 %v799
  %v1906 = vpop.f32.mrf.mxu0
  %v1907 = vadd.f32 0.0, %v1906
  %v1908 = vpop.f32.mrf.mxu0
  %1909 = vmatprep.mubr.f32.mxu0 0.0
  %1910 = vmatmul.mubr.f32.gmra.mxu0 %v800
  %v1911 = vpop.f32.mrf.mxu0
  %v1912 = vadd.f32 0.0, %v1911
  %v1913 = vpop.f32.mrf.mxu0
  %1914 = vmatprep.mubr.f32.mxu0 0.0
  %1915 = vmatmul.mubr.f32.gmra.mxu0 %v801
  %v1916 = vpop.f32.mrf.mxu0
  %v1917 = vadd.f32 0.0, %v1916
  %v1918 = vpop.f32.mrf.mxu0
  %1919 = vmatprep.mubr.f32.mxu0 0.0
  %1920 = vmatmul.mubr.f32.gmra.mxu0 %v802
  %v1921 = vpop.f32.mrf.mxu0
  %v1922 = vadd.f32 0.0, %v1921
  %v1923 = vpop.f32.mrf.mxu0
  %1924 = vmatprep.mubr.f32.mxu0 0.0
  %1925 = vmatmul.mubr.f32.gmra.mxu0 %v803
  %v1926 = vpop.f32.mrf.mxu0
  %v1927 = vadd.f32 0.0, %v1926
  %v1928 = vpop.f32.mrf.mxu0
  %1929 = vmatprep.mubr.f32.mxu0 0.0
  %1930 = vmatmul.mubr.f32.gmra.mxu0 %v847
  %v1931 = vpop.f32.mrf.mxu0
  %v1932 = vadd.f32 0.0, %v1931
  %v1933 = vpop.f32.mrf.mxu0
  %1934 = vmatprep.mubr.f32.mxu0 0.0
  %1935 = vmatmul.mubr.f32.gmra.mxu0 %v848
  %v1936 = vpop.f32.mrf.mxu0
  %v1937 = vadd.f32 0.0, %v1936
  %v1938 = vpop.f32.mrf.mxu0
  %1939 = vmatprep.mubr.f32.mxu0 0.0
  %1940 = vmatmul.mubr.f32.gmra.mxu0 %v849
  %v1941 = vpop.f32.mrf.mxu0
  %v1942 = vadd.f32 0.0, %v1941
  %v1943 = vpop.f32.mrf.mxu0
  %1944 = vmatprep.mubr.f32.mxu0 0.0
  %1945 = vmatmul.mubr.f32.gmra.mxu0 %v850
  %v1946 = vpop.f32.mrf.mxu0
  %v1947 = vadd.f32 0.0, %v1946
  %v1948 = vpop.f32.mrf.mxu0
  %1949 = vmatprep.mubr.f32.mxu0 0.0
  %1950 = vmatmul.mubr.f32.gmra.mxu0 %v851
  %v1951 = vpop.f32.mrf.mxu0
  %v1952 = vadd.f32 0.0, %v1951
  %v1953 = vpop.f32.mrf.mxu0
  %1954 = vmatprep.mubr.f32.mxu0 0.0
  %1955 = vmatmul.mubr.f32.gmra.mxu0 %v852
  %v1956 = vpop.f32.mrf.mxu0
  %v1957 = vadd.f32 0.0, %v1956
  %v1958 = vpop.f32.mrf.mxu0
  %1959 = vmatprep.mubr.f32.mxu0 0.0
  %1960 = vmatmul.mubr.f32.gmra.mxu0 %v853
  %v1961 = vpop.f32.mrf.mxu0
  %v1962 = vadd.f32 0.0, %v1961
  %v1963 = vpop.f32.mrf.mxu0
  %1964 = vmatprep.mubr.f32.mxu0 0.0
  %1965 = vmatmul.mubr.f32.gmra.mxu0 %v854
  %v1966 = vpop.f32.mrf.mxu0
  %v1967 = vadd.f32 0.0, %v1966
  %v1968 = vpop.f32.mrf.mxu0
  %1969 = vdwg.mxu0
  %v2002 = vrot.slane %v780, 1
  %v2003 = vrot.slane %v781, 1
  %v2004 = vsel %vm1210, %v2002, %v2003
  %v2005 = vrot.slane %v782, 1
  %v2006 = vrot.slane %v783, 1
  %v2007 = vsel %vm1210, %v2005, %v2006
  %v2008 = vrot.slane %v784, 1
  %v2009 = vrot.slane %v785, 1
  %v2010 = vsel %vm1210, %v2008, %v2009
  %v2011 = vrot.slane %v786, 1
  %v2012 = vrot.slane %v787, 1
  %v2013 = vsel %vm1210, %v2011, %v2012
  %v2014 = vrot.slane %v788, 1
  %v2015 = vrot.slane %v789, 1
  %v2016 = vsel %vm1210, %v2014, %v2015
  %v2017 = vrot.slane %v790, 1
  %v2018 = vrot.slane %v791, 1
  %v2019 = vsel %vm1210, %v2017, %v2018
  %v2020 = vrot.slane %v792, 1
  %v2021 = vrot.slane %v793, 1
  %v2022 = vsel %vm1210, %v2020, %v2021
  %v2023 = vrot.slane %v794, 1
  %v2024 = vrot.slane %v795, 1
  %v2025 = vsel %vm1210, %v2023, %v2024
  %v2026 = vrot.slane %v831, 1
  %v2027 = vrot.slane %v832, 1
  %v2028 = vsel %vm1210, %v2026, %v2027
  %v2029 = vrot.slane %v833, 1
  %v2030 = vrot.slane %v834, 1
  %v2031 = vsel %vm1210, %v2029, %v2030
  %v2032 = vrot.slane %v835, 1
  %v2033 = vrot.slane %v836, 1
  %v2034 = vsel %vm1210, %v2032, %v2033
  %v2035 = vrot.slane %v837, 1
  %v2036 = vrot.slane %v838, 1
  %v2037 = vsel %vm1210, %v2035, %v2036
  %v2038 = vrot.slane %v839, 1
  %v2039 = vrot.slane %v840, 1
  %v2040 = vsel %vm1210, %v2038, %v2039
  %v2041 = vrot.slane %v841, 1
  %v2042 = vrot.slane %v842, 1
  %v2043 = vsel %vm1210, %v2041, %v2042
  %v2044 = vrot.slane %v843, 1
  %v2045 = vrot.slane %v844, 1
  %v2046 = vsel %vm1210, %v2044, %v2045
  %v2047 = vrot.slane %v845, 1
  %v2048 = vrot.slane %v846, 1
  %v2049 = vsel %vm1210, %v2047, %v2048
  %s2066 = scalar_lea.vmem %s4, 640
  %v2067 = vld [vmem:[%s2066] sm:$0xff]
  %v2068 = vld [vmem:[%s2066 + $0x8] sm:$0xff]
  %v2069 = vld [vmem:[%s2066 + $0x10] sm:$0xff]
  %v2070 = vld [vmem:[%s2066 + $0x18] sm:$0xff]
  %v2071 = vld [vmem:[%s2066 + $0x20] sm:$0xff]
  %v2072 = vld [vmem:[%s2066 + $0x28] sm:$0xff]
  %v2073 = vld [vmem:[%s2066 + $0x30] sm:$0xff]
  %v2074 = vld [vmem:[%s2066 + $0x38] sm:$0xff]
  %v2075 = vld [vmem:[%s2066 + $0x40] sm:$0xff]
  %v2076 = vld [vmem:[%s2066 + $0x48] sm:$0xff]
  %v2077 = vld [vmem:[%s2066 + $0x50] sm:$0xff]
  %v2078 = vld [vmem:[%s2066 + $0x58] sm:$0xff]
  %v2079 = vld [vmem:[%s2066 + $0x60] sm:$0xff]
  %v2080 = vld [vmem:[%s2066 + $0x68] sm:$0xff]
  %v2081 = vld [vmem:[%s2066 + $0x70] sm:$0xff]
  %v2082 = vld [vmem:[%s2066 + $0x78] sm:$0xff]
  %2083 = vmatprep.subr.mxu0 0.0
  %2084 = vmatpush1.msra.mxu0 %v2082
  %2085 = vmatprep.subr.mxu0 0.0
  %2086 = vmatpush1.msra.mxu0 %v2081
  %2087 = vmatprep.subr.mxu0 0.0
  %2088 = vmatpush1.msra.mxu0 %v2080
  %2089 = vmatprep.subr.mxu0 0.0
  %2090 = vmatpush1.msra.mxu0 %v2079
  %2091 = vmatprep.subr.mxu0 0.0
  %2092 = vmatpush1.msra.mxu0 %v2078
  %2093 = vmatprep.subr.mxu0 0.0
  %2094 = vmatpush1.msra.mxu0 %v2077
  %2095 = vmatprep.subr.mxu0 0.0
  %2096 = vmatpush1.msra.mxu0 %v2076
  %2097 = vmatprep.subr.mxu0 0.0
  %2098 = vmatpush1.msra.mxu0 %v2075
  %2099 = vmatprep.subr.mxu0 0.0
  %2100 = vmatpush1.msra.mxu0 %v2074
  %2101 = vmatprep.subr.mxu0 0.0
  %2102 = vmatpush1.msra.mxu0 %v2073
  %2103 = vmatprep.subr.mxu0 0.0
  %2104 = vmatpush1.msra.mxu0 %v2072
  %2105 = vmatprep.subr.mxu0 0.0
  %2106 = vmatpush1.msra.mxu0 %v2071
  %2107 = vmatprep.subr.mxu0 0.0
  %2108 = vmatpush1.msra.mxu0 %v2070
  %2109 = vmatprep.subr.mxu0 0.0
  %2110 = vmatpush1.msra.mxu0 %v2069
  %2111 = vmatprep.subr.mxu0 0.0
  %2112 = vmatpush1.msra.mxu0 %v2068
  %2113 = vmatprep.subr.mxu0 0.0
  %2114 = vmatpush1.msra.mxu0 %v2067
  %2115 = vmatprep.subr.mxu0 0.0
  %2116 = vmatpush2.msra.mxu0 0.0
  %2117 = vmatprep.subr.mxu0 0.0
  %2118 = vmatpush2.msra.mxu0 0.0
  %2119 = vmatprep.subr.mxu0 0.0
  %2120 = vmatpush2.msra.mxu0 0.0
  %2121 = vmatprep.subr.mxu0 0.0
  %2122 = vmatpush2.msra.mxu0 0.0
  %2123 = vmatprep.subr.mxu0 0.0
  %2124 = vmatpush2.msra.mxu0 0.0
  %2125 = vmatprep.subr.mxu0 0.0
  %2126 = vmatpush2.msra.mxu0 0.0
  %2127 = vmatprep.subr.mxu0 0.0
  %2128 = vmatpush2.msra.mxu0 0.0
  %2129 = vmatprep.subr.mxu0 0.0
  %2130 = vmatpush2.msra.mxu0 0.0
  %2131 = vmatprep.subr.mxu0 0.0
  %2132 = vmatpush2.msra.mxu0 0.0
  %2133 = vmatprep.subr.mxu0 0.0
  %2134 = vmatpush2.msra.mxu0 0.0
  %2135 = vmatprep.subr.mxu0 0.0
  %2136 = vmatpush2.msra.mxu0 0.0
  %2137 = vmatprep.subr.mxu0 0.0
  %2138 = vmatpush2.msra.mxu0 0.0
  %2139 = vmatprep.subr.mxu0 0.0
  %2140 = vmatpush2.msra.mxu0 0.0
  %2141 = vmatprep.subr.mxu0 0.0
  %2142 = vmatpush2.msra.mxu0 0.0
  %2143 = vmatprep.subr.mxu0 0.0
  %2144 = vmatpush2.msra.mxu0 0.0
  %2145 = vmatprep.subr.mxu0 0.0
  %2146 = vmatpush2.msra.mxu0 0.0
  %2147 = vmatprep.mubr.f32.mxu0 0.0
  %2148 = vmatmul.mubr.f32.gmra.mxu0 %v2004
  %v2149 = vpop.f32.mrf.mxu0
  %v2150 = vadd.f32 0.0, %v2149
  %v2151 = vpop.f32.mrf.mxu0
  %2152 = vmatprep.mubr.f32.mxu0 0.0
  %2153 = vmatmul.mubr.f32.gmra.mxu0 %v2007
  %v2154 = vpop.f32.mrf.mxu0
  %v2155 = vadd.f32 0.0, %v2154
  %v2156 = vpop.f32.mrf.mxu0
  %2157 = vmatprep.mubr.f32.mxu0 0.0
  %2158 = vmatmul.mubr.f32.gmra.mxu0 %v2010
  %v2159 = vpop.f32.mrf.mxu0
  %v2160 = vadd.f32 0.0, %v2159
  %v2161 = vpop.f32.mrf.mxu0
  %2162 = vmatprep.mubr.f32.mxu0 0.0
  %2163 = vmatmul.mubr.f32.gmra.mxu0 %v2013
  %v2164 = vpop.f32.mrf.mxu0
  %v2165 = vadd.f32 0.0, %v2164
  %v2166 = vpop.f32.mrf.mxu0
  %2167 = vmatprep.mubr.f32.mxu0 0.0
  %2168 = vmatmul.mubr.f32.gmra.mxu0 %v2016
  %v2169 = vpop.f32.mrf.mxu0
  %v2170 = vadd.f32 0.0, %v2169
  %v2171 = vpop.f32.mrf.mxu0
  %2172 = vmatprep.mubr.f32.mxu0 0.0
  %2173 = vmatmul.mubr.f32.gmra.mxu0 %v2019
  %v2174 = vpop.f32.mrf.mxu0
  %v2175 = vadd.f32 0.0, %v2174
  %v2176 = vpop.f32.mrf.mxu0
  %2177 = vmatprep.mubr.f32.mxu0 0.0
  %2178 = vmatmul.mubr.f32.gmra.mxu0 %v2022
  %v2179 = vpop.f32.mrf.mxu0
  %v2180 = vadd.f32 0.0, %v2179
  %v2181 = vpop.f32.mrf.mxu0
  %2182 = vmatprep.mubr.f32.mxu0 0.0
  %2183 = vmatmul.mubr.f32.gmra.mxu0 %v2025
  %v2184 = vpop.f32.mrf.mxu0
  %v2185 = vadd.f32 0.0, %v2184
  %v2186 = vpop.f32.mrf.mxu0
  %2187 = vmatprep.mubr.f32.mxu0 0.0
  %2188 = vmatmul.mubr.f32.gmra.mxu0 %v2028
  %v2189 = vpop.f32.mrf.mxu0
  %v2190 = vadd.f32 0.0, %v2189
  %v2191 = vpop.f32.mrf.mxu0
  %2192 = vmatprep.mubr.f32.mxu0 0.0
  %2193 = vmatmul.mubr.f32.gmra.mxu0 %v2031
  %v2194 = vpop.f32.mrf.mxu0
  %v2195 = vadd.f32 0.0, %v2194
  %v2196 = vpop.f32.mrf.mxu0
  %2197 = vmatprep.mubr.f32.mxu0 0.0
  %2198 = vmatmul.mubr.f32.gmra.mxu0 %v2034
  %v2199 = vpop.f32.mrf.mxu0
  %v2200 = vadd.f32 0.0, %v2199
  %v2201 = vpop.f32.mrf.mxu0
  %2202 = vmatprep.mubr.f32.mxu0 0.0
  %2203 = vmatmul.mubr.f32.gmra.mxu0 %v2037
  %v2204 = vpop.f32.mrf.mxu0
  %v2205 = vadd.f32 0.0, %v2204
  %v2206 = vpop.f32.mrf.mxu0
  %2207 = vmatprep.mubr.f32.mxu0 0.0
  %2208 = vmatmul.mubr.f32.gmra.mxu0 %v2040
  %v2209 = vpop.f32.mrf.mxu0
  %v2210 = vadd.f32 0.0, %v2209
  %v2211 = vpop.f32.mrf.mxu0
  %2212 = vmatprep.mubr.f32.mxu0 0.0
  %2213 = vmatmul.mubr.f32.gmra.mxu0 %v2043
  %v2214 = vpop.f32.mrf.mxu0
  %v2215 = vadd.f32 0.0, %v2214
  %v2216 = vpop.f32.mrf.mxu0
  %2217 = vmatprep.mubr.f32.mxu0 0.0
  %2218 = vmatmul.mubr.f32.gmra.mxu0 %v2046
  %v2219 = vpop.f32.mrf.mxu0
  %v2220 = vadd.f32 0.0, %v2219
  %v2221 = vpop.f32.mrf.mxu0
  %2222 = vmatprep.mubr.f32.mxu0 0.0
  %2223 = vmatmul.mubr.f32.gmra.mxu0 %v2049
  %v2224 = vpop.f32.mrf.mxu0
  %v2225 = vadd.f32 0.0, %v2224
  %v2226 = vpop.f32.mrf.mxu0
  %2227 = vdwg.mxu0
  %v2228 = vadd.f32 %v1793, %v2150
  %v2229 = vadd.f32 %v1794, %v2155
  %v2230 = vadd.f32 %v1795, %v2160
  %v2231 = vadd.f32 %v1796, %v2165
  %v2232 = vadd.f32 %v1797, %v2170
  %v2233 = vadd.f32 %v1798, %v2175
  %v2234 = vadd.f32 %v1799, %v2180
  %v2235 = vadd.f32 %v1800, %v2185
  %v2236 = vadd.f32 %v1801, %v2190
  %v2237 = vadd.f32 %v1802, %v2195
  %v2238 = vadd.f32 %v1803, %v2200
  %v2239 = vadd.f32 %v1804, %v2205
  %v2240 = vadd.f32 %v1805, %v2210
  %v2241 = vadd.f32 %v1806, %v2215
  %v2242 = vadd.f32 %v1807, %v2220
  %v2243 = vadd.f32 %v1808, %v2225
  %s2244 = scalar_lea.vmem %s4, 768
  %v2245 = vld [vmem:[%s2244] sm:$0xff]
  %v2246 = vld [vmem:[%s2244 + $0x8] sm:$0xff]
  %v2247 = vld [vmem:[%s2244 + $0x10] sm:$0xff]
  %v2248 = vld [vmem:[%s2244 + $0x18] sm:$0xff]
  %v2249 = vld [vmem:[%s2244 + $0x20] sm:$0xff]
  %v2250 = vld [vmem:[%s2244 + $0x28] sm:$0xff]
  %v2251 = vld [vmem:[%s2244 + $0x30] sm:$0xff]
  %v2252 = vld [vmem:[%s2244 + $0x38] sm:$0xff]
  %v2253 = vld [vmem:[%s2244 + $0x40] sm:$0xff]
  %v2254 = vld [vmem:[%s2244 + $0x48] sm:$0xff]
  %v2255 = vld [vmem:[%s2244 + $0x50] sm:$0xff]
  %v2256 = vld [vmem:[%s2244 + $0x58] sm:$0xff]
  %v2257 = vld [vmem:[%s2244 + $0x60] sm:$0xff]
  %v2258 = vld [vmem:[%s2244 + $0x68] sm:$0xff]
  %v2259 = vld [vmem:[%s2244 + $0x70] sm:$0xff]
  %v2260 = vld [vmem:[%s2244 + $0x78] sm:$0xff]
  %2261 = vmatprep.subr.mxu0 0.0
  %2262 = vmatpush1.msra.mxu0 %v2260
  %2263 = vmatprep.subr.mxu0 0.0
  %2264 = vmatpush1.msra.mxu0 %v2259
  %2265 = vmatprep.subr.mxu0 0.0
  %2266 = vmatpush1.msra.mxu0 %v2258
  %2267 = vmatprep.subr.mxu0 0.0
  %2268 = vmatpush1.msra.mxu0 %v2257
  %2269 = vmatprep.subr.mxu0 0.0
  %2270 = vmatpush1.msra.mxu0 %v2256
  %2271 = vmatprep.subr.mxu0 0.0
  %2272 = vmatpush1.msra.mxu0 %v2255
  %2273 = vmatprep.subr.mxu0 0.0
  %2274 = vmatpush1.msra.mxu0 %v2254
  %2275 = vmatprep.subr.mxu0 0.0
  %2276 = vmatpush1.msra.mxu0 %v2253
  %2277 = vmatprep.subr.mxu0 0.0
  %2278 = vmatpush1.msra.mxu0 %v2252
  %2279 = vmatprep.subr.mxu0 0.0
  %2280 = vmatpush1.msra.mxu0 %v2251
  %2281 = vmatprep.subr.mxu0 0.0
  %2282 = vmatpush1.msra.mxu0 %v2250
  %2283 = vmatprep.subr.mxu0 0.0
  %2284 = vmatpush1.msra.mxu0 %v2249
  %2285 = vmatprep.subr.mxu0 0.0
  %2286 = vmatpush1.msra.mxu0 %v2248
  %2287 = vmatprep.subr.mxu0 0.0
  %2288 = vmatpush1.msra.mxu0 %v2247
  %2289 = vmatprep.subr.mxu0 0.0
  %2290 = vmatpush1.msra.mxu0 %v2246
  %2291 = vmatprep.subr.mxu0 0.0
  %2292 = vmatpush1.msra.mxu0 %v2245
  %2293 = vmatprep.subr.mxu0 0.0
  %2294 = vmatpush2.msra.mxu0 0.0
  %2295 = vmatprep.subr.mxu0 0.0
  %2296 = vmatpush2.msra.mxu0 0.0
  %2297 = vmatprep.subr.mxu0 0.0
  %2298 = vmatpush2.msra.mxu0 0.0
  %2299 = vmatprep.subr.mxu0 0.0
  %2300 = vmatpush2.msra.mxu0 0.0
  %2301 = vmatprep.subr.mxu0 0.0
  %2302 = vmatpush2.msra.mxu0 0.0
  %2303 = vmatprep.subr.mxu0 0.0
  %2304 = vmatpush2.msra.mxu0 0.0
  %2305 = vmatprep.subr.mxu0 0.0
  %2306 = vmatpush2.msra.mxu0 0.0
  %2307 = vmatprep.subr.mxu0 0.0
  %2308 = vmatpush2.msra.mxu0 0.0
  %2309 = vmatprep.subr.mxu0 0.0
  %2310 = vmatpush2.msra.mxu0 0.0
  %2311 = vmatprep.subr.mxu0 0.0
  %2312 = vmatpush2.msra.mxu0 0.0
  %2313 = vmatprep.subr.mxu0 0.0
  %2314 = vmatpush2.msra.mxu0 0.0
  %2315 = vmatprep.subr.mxu0 0.0
  %2316 = vmatpush2.msra.mxu0 0.0
  %2317 = vmatprep.subr.mxu0 0.0
  %2318 = vmatpush2.msra.mxu0 0.0
  %2319 = vmatprep.subr.mxu0 0.0
  %2320 = vmatpush2.msra.mxu0 0.0
  %2321 = vmatprep.subr.mxu0 0.0
  %2322 = vmatpush2.msra.mxu0 0.0
  %2323 = vmatprep.subr.mxu0 0.0
  %2324 = vmatpush2.msra.mxu0 0.0
  %2325 = vmatprep.mubr.f32.mxu0 0.0
  %2326 = vmatmul.mubr.f32.gmra.mxu0 %v755
  %v2327 = vpop.f32.mrf.mxu0
  %v2328 = vadd.f32 0.0, %v2327
  %v2329 = vpop.f32.mrf.mxu0
  %2330 = vmatprep.mubr.f32.mxu0 0.0
  %2331 = vmatmul.mubr.f32.gmra.mxu0 %v757
  %v2332 = vpop.f32.mrf.mxu0
  %v2333 = vadd.f32 0.0, %v2332
  %v2334 = vpop.f32.mrf.mxu0
  %2335 = vmatprep.mubr.f32.mxu0 0.0
  %2336 = vmatmul.mubr.f32.gmra.mxu0 %v759
  %v2337 = vpop.f32.mrf.mxu0
  %v2338 = vadd.f32 0.0, %v2337
  %v2339 = vpop.f32.mrf.mxu0
  %2340 = vmatprep.mubr.f32.mxu0 0.0
  %2341 = vmatmul.mubr.f32.gmra.mxu0 %v761
  %v2342 = vpop.f32.mrf.mxu0
  %v2343 = vadd.f32 0.0, %v2342
  %v2344 = vpop.f32.mrf.mxu0
  %2345 = vmatprep.mubr.f32.mxu0 0.0
  %2346 = vmatmul.mubr.f32.gmra.mxu0 %v763
  %v2347 = vpop.f32.mrf.mxu0
  %v2348 = vadd.f32 0.0, %v2347
  %v2349 = vpop.f32.mrf.mxu0
  %2350 = vmatprep.mubr.f32.mxu0 0.0
  %2351 = vmatmul.mubr.f32.gmra.mxu0 %v765
  %v2352 = vpop.f32.mrf.mxu0
  %v2353 = vadd.f32 0.0, %v2352
  %v2354 = vpop.f32.mrf.mxu0
  %2355 = vmatprep.mubr.f32.mxu0 0.0
  %2356 = vmatmul.mubr.f32.gmra.mxu0 %v767
  %v2357 = vpop.f32.mrf.mxu0
  %v2358 = vadd.f32 0.0, %v2357
  %v2359 = vpop.f32.mrf.mxu0
  %2360 = vmatprep.mubr.f32.mxu0 0.0
  %2361 = vmatmul.mubr.f32.gmra.mxu0 %v769
  %v2362 = vpop.f32.mrf.mxu0
  %v2363 = vadd.f32 0.0, %v2362
  %v2364 = vpop.f32.mrf.mxu0
  %2365 = vmatprep.mubr.f32.mxu0 0.0
  %2366 = vmatmul.mubr.f32.gmra.mxu0 %v806
  %v2367 = vpop.f32.mrf.mxu0
  %v2368 = vadd.f32 0.0, %v2367
  %v2369 = vpop.f32.mrf.mxu0
  %2370 = vmatprep.mubr.f32.mxu0 0.0
  %2371 = vmatmul.mubr.f32.gmra.mxu0 %v808
  %v2372 = vpop.f32.mrf.mxu0
  %v2373 = vadd.f32 0.0, %v2372
  %v2374 = vpop.f32.mrf.mxu0
  %2375 = vmatprep.mubr.f32.mxu0 0.0
  %2376 = vmatmul.mubr.f32.gmra.mxu0 %v810
  %v2377 = vpop.f32.mrf.mxu0
  %v2378 = vadd.f32 0.0, %v2377
  %v2379 = vpop.f32.mrf.mxu0
  %2380 = vmatprep.mubr.f32.mxu0 0.0
  %2381 = vmatmul.mubr.f32.gmra.mxu0 %v812
  %v2382 = vpop.f32.mrf.mxu0
  %v2383 = vadd.f32 0.0, %v2382
  %v2384 = vpop.f32.mrf.mxu0
  %2385 = vmatprep.mubr.f32.mxu0 0.0
  %2386 = vmatmul.mubr.f32.gmra.mxu0 %v814
  %v2387 = vpop.f32.mrf.mxu0
  %v2388 = vadd.f32 0.0, %v2387
  %v2389 = vpop.f32.mrf.mxu0
  %2390 = vmatprep.mubr.f32.mxu0 0.0
  %2391 = vmatmul.mubr.f32.gmra.mxu0 %v816
  %v2392 = vpop.f32.mrf.mxu0
  %v2393 = vadd.f32 0.0, %v2392
  %v2394 = vpop.f32.mrf.mxu0
  %2395 = vmatprep.mubr.f32.mxu0 0.0
  %2396 = vmatmul.mubr.f32.gmra.mxu0 %v818
  %v2397 = vpop.f32.mrf.mxu0
  %v2398 = vadd.f32 0.0, %v2397
  %v2399 = vpop.f32.mrf.mxu0
  %2400 = vmatprep.mubr.f32.mxu0 0.0
  %2401 = vmatmul.mubr.f32.gmra.mxu0 %v820
  %v2402 = vpop.f32.mrf.mxu0
  %v2403 = vadd.f32 0.0, %v2402
  %v2404 = vpop.f32.mrf.mxu0
  %2405 = vdwg.mxu0
  %v2406 = vadd.f32 %v2228, %v2328
  %v2407 = vadd.f32 %v2229, %v2333
  %v2408 = vadd.f32 %v2230, %v2338
  %v2409 = vadd.f32 %v2231, %v2343
  %v2410 = vadd.f32 %v2232, %v2348
  %v2411 = vadd.f32 %v2233, %v2353
  %v2412 = vadd.f32 %v2234, %v2358
  %v2413 = vadd.f32 %v2235, %v2363
  %v2414 = vadd.f32 %v2236, %v2368
  %v2415 = vadd.f32 %v2237, %v2373
  %v2416 = vadd.f32 %v2238, %v2378
  %v2417 = vadd.f32 %v2239, %v2383
  %v2418 = vadd.f32 %v2240, %v2388
  %v2419 = vadd.f32 %v2241, %v2393
  %v2420 = vadd.f32 %v2242, %v2398
  %v2421 = vadd.f32 %v2243, %v2403
  %s2422 = scalar_lea.vmem %s4, 896
  %v2423 = vld [vmem:[%s2422] sm:$0xff]
  %v2424 = vld [vmem:[%s2422 + $0x8] sm:$0xff]
  %v2425 = vld [vmem:[%s2422 + $0x10] sm:$0xff]
  %v2426 = vld [vmem:[%s2422 + $0x18] sm:$0xff]
  %v2427 = vld [vmem:[%s2422 + $0x20] sm:$0xff]
  %v2428 = vld [vmem:[%s2422 + $0x28] sm:$0xff]
  %v2429 = vld [vmem:[%s2422 + $0x30] sm:$0xff]
  %v2430 = vld [vmem:[%s2422 + $0x38] sm:$0xff]
  %v2431 = vld [vmem:[%s2422 + $0x40] sm:$0xff]
  %v2432 = vld [vmem:[%s2422 + $0x48] sm:$0xff]
  %v2433 = vld [vmem:[%s2422 + $0x50] sm:$0xff]
  %v2434 = vld [vmem:[%s2422 + $0x58] sm:$0xff]
  %v2435 = vld [vmem:[%s2422 + $0x60] sm:$0xff]
  %v2436 = vld [vmem:[%s2422 + $0x68] sm:$0xff]
  %v2437 = vld [vmem:[%s2422 + $0x70] sm:$0xff]
  %v2438 = vld [vmem:[%s2422 + $0x78] sm:$0xff]
  %2439 = vmatprep.subr.mxu0 0.0
  %2440 = vmatpush1.msra.mxu0 %v2438
  %2441 = vmatprep.subr.mxu0 0.0
  %2442 = vmatpush1.msra.mxu0 %v2437
  %2443 = vmatprep.subr.mxu0 0.0
  %2444 = vmatpush1.msra.mxu0 %v2436
  %2445 = vmatprep.subr.mxu0 0.0
  %2446 = vmatpush1.msra.mxu0 %v2435
  %2447 = vmatprep.subr.mxu0 0.0
  %2448 = vmatpush1.msra.mxu0 %v2434
  %2449 = vmatprep.subr.mxu0 0.0
  %2450 = vmatpush1.msra.mxu0 %v2433
  %2451 = vmatprep.subr.mxu0 0.0
  %2452 = vmatpush1.msra.mxu0 %v2432
  %2453 = vmatprep.subr.mxu0 0.0
  %2454 = vmatpush1.msra.mxu0 %v2431
  %2455 = vmatprep.subr.mxu0 0.0
  %2456 = vmatpush1.msra.mxu0 %v2430
  %2457 = vmatprep.subr.mxu0 0.0
  %2458 = vmatpush1.msra.mxu0 %v2429
  %2459 = vmatprep.subr.mxu0 0.0
  %2460 = vmatpush1.msra.mxu0 %v2428
  %2461 = vmatprep.subr.mxu0 0.0
  %2462 = vmatpush1.msra.mxu0 %v2427
  %2463 = vmatprep.subr.mxu0 0.0
  %2464 = vmatpush1.msra.mxu0 %v2426
  %2465 = vmatprep.subr.mxu0 0.0
  %2466 = vmatpush1.msra.mxu0 %v2425
  %2467 = vmatprep.subr.mxu0 0.0
  %2468 = vmatpush1.msra.mxu0 %v2424
  %2469 = vmatprep.subr.mxu0 0.0
  %2470 = vmatpush1.msra.mxu0 %v2423
  %2471 = vmatprep.subr.mxu0 0.0
  %2472 = vmatpush2.msra.mxu0 0.0
  %2473 = vmatprep.subr.mxu0 0.0
  %2474 = vmatpush2.msra.mxu0 0.0
  %2475 = vmatprep.subr.mxu0 0.0
  %2476 = vmatpush2.msra.mxu0 0.0
  %2477 = vmatprep.subr.mxu0 0.0
  %2478 = vmatpush2.msra.mxu0 0.0
  %2479 = vmatprep.subr.mxu0 0.0
  %2480 = vmatpush2.msra.mxu0 0.0
  %2481 = vmatprep.subr.mxu0 0.0
  %2482 = vmatpush2.msra.mxu0 0.0
  %2483 = vmatprep.subr.mxu0 0.0
  %2484 = vmatpush2.msra.mxu0 0.0
  %2485 = vmatprep.subr.mxu0 0.0
  %2486 = vmatpush2.msra.mxu0 0.0
  %2487 = vmatprep.subr.mxu0 0.0
  %2488 = vmatpush2.msra.mxu0 0.0
  %2489 = vmatprep.subr.mxu0 0.0
  %2490 = vmatpush2.msra.mxu0 0.0
  %2491 = vmatprep.subr.mxu0 0.0
  %2492 = vmatpush2.msra.mxu0 0.0
  %2493 = vmatprep.subr.mxu0 0.0
  %2494 = vmatpush2.msra.mxu0 0.0
  %2495 = vmatprep.subr.mxu0 0.0
  %2496 = vmatpush2.msra.mxu0 0.0
  %2497 = vmatprep.subr.mxu0 0.0
  %2498 = vmatpush2.msra.mxu0 0.0
  %2499 = vmatprep.subr.mxu0 0.0
  %2500 = vmatpush2.msra.mxu0 0.0
  %2501 = vmatprep.subr.mxu0 0.0
  %2502 = vmatpush2.msra.mxu0 0.0
  %2503 = vmatprep.mubr.f32.mxu0 0.0
  %2504 = vmatmul.mubr.f32.gmra.mxu0 %v772
  %v2505 = vpop.f32.mrf.mxu0
  %v2506 = vadd.f32 0.0, %v2505
  %v2507 = vpop.f32.mrf.mxu0
  %2508 = vmatprep.mubr.f32.mxu0 0.0
  %2509 = vmatmul.mubr.f32.gmra.mxu0 %v773
  %v2510 = vpop.f32.mrf.mxu0
  %v2511 = vadd.f32 0.0, %v2510
  %v2512 = vpop.f32.mrf.mxu0
  %2513 = vmatprep.mubr.f32.mxu0 0.0
  %2514 = vmatmul.mubr.f32.gmra.mxu0 %v774
  %v2515 = vpop.f32.mrf.mxu0
  %v2516 = vadd.f32 0.0, %v2515
  %v2517 = vpop.f32.mrf.mxu0
  %2518 = vmatprep.mubr.f32.mxu0 0.0
  %2519 = vmatmul.mubr.f32.gmra.mxu0 %v775
  %v2520 = vpop.f32.mrf.mxu0
  %v2521 = vadd.f32 0.0, %v2520
  %v2522 = vpop.f32.mrf.mxu0
  %2523 = vmatprep.mubr.f32.mxu0 0.0
  %2524 = vmatmul.mubr.f32.gmra.mxu0 %v776
  %v2525 = vpop.f32.mrf.mxu0
  %v2526 = vadd.f32 0.0, %v2525
  %v2527 = vpop.f32.mrf.mxu0
  %2528 = vmatprep.mubr.f32.mxu0 0.0
  %2529 = vmatmul.mubr.f32.gmra.mxu0 %v777
  %v2530 = vpop.f32.mrf.mxu0
  %v2531 = vadd.f32 0.0, %v2530
  %v2532 = vpop.f32.mrf.mxu0
  %2533 = vmatprep.mubr.f32.mxu0 0.0
  %2534 = vmatmul.mubr.f32.gmra.mxu0 %v778
  %v2535 = vpop.f32.mrf.mxu0
  %v2536 = vadd.f32 0.0, %v2535
  %v2537 = vpop.f32.mrf.mxu0
  %2538 = vmatprep.mubr.f32.mxu0 0.0
  %2539 = vmatmul.mubr.f32.gmra.mxu0 %v779
  %v2540 = vpop.f32.mrf.mxu0
  %v2541 = vadd.f32 0.0, %v2540
  %v2542 = vpop.f32.mrf.mxu0
  %2543 = vmatprep.mubr.f32.mxu0 0.0
  %2544 = vmatmul.mubr.f32.gmra.mxu0 %v823
  %v2545 = vpop.f32.mrf.mxu0
  %v2546 = vadd.f32 0.0, %v2545
  %v2547 = vpop.f32.mrf.mxu0
  %2548 = vmatprep.mubr.f32.mxu0 0.0
  %2549 = vmatmul.mubr.f32.gmra.mxu0 %v824
  %v2550 = vpop.f32.mrf.mxu0
  %v2551 = vadd.f32 0.0, %v2550
  %v2552 = vpop.f32.mrf.mxu0
  %2553 = vmatprep.mubr.f32.mxu0 0.0
  %2554 = vmatmul.mubr.f32.gmra.mxu0 %v825
  %v2555 = vpop.f32.mrf.mxu0
  %v2556 = vadd.f32 0.0, %v2555
  %v2557 = vpop.f32.mrf.mxu0
  %2558 = vmatprep.mubr.f32.mxu0 0.0
  %2559 = vmatmul.mubr.f32.gmra.mxu0 %v826
  %v2560 = vpop.f32.mrf.mxu0
  %v2561 = vadd.f32 0.0, %v2560
  %v2562 = vpop.f32.mrf.mxu0
  %2563 = vmatprep.mubr.f32.mxu0 0.0
  %2564 = vmatmul.mubr.f32.gmra.mxu0 %v827
  %v2565 = vpop.f32.mrf.mxu0
  %v2566 = vadd.f32 0.0, %v2565
  %v2567 = vpop.f32.mrf.mxu0
  %2568 = vmatprep.mubr.f32.mxu0 0.0
  %2569 = vmatmul.mubr.f32.gmra.mxu0 %v828
  %v2570 = vpop.f32.mrf.mxu0
  %v2571 = vadd.f32 0.0, %v2570
  %v2572 = vpop.f32.mrf.mxu0
  %2573 = vmatprep.mubr.f32.mxu0 0.0
  %2574 = vmatmul.mubr.f32.gmra.mxu0 %v829
  %v2575 = vpop.f32.mrf.mxu0
  %v2576 = vadd.f32 0.0, %v2575
  %v2577 = vpop.f32.mrf.mxu0
  %2578 = vmatprep.mubr.f32.mxu0 0.0
  %2579 = vmatmul.mubr.f32.gmra.mxu0 %v830
  %v2580 = vpop.f32.mrf.mxu0
  %v2581 = vadd.f32 0.0, %v2580
  %v2582 = vpop.f32.mrf.mxu0
  %2583 = vdwg.mxu0
  %v2584 = vadd.f32 %v2406, %v2506
  %v2585 = vadd.f32 %v2407, %v2511
  %v2586 = vadd.f32 %v2408, %v2516
  %v2587 = vadd.f32 %v2409, %v2521
  %v2588 = vadd.f32 %v2410, %v2526
  %v2589 = vadd.f32 %v2411, %v2531
  %v2590 = vadd.f32 %v2412, %v2536
  %v2591 = vadd.f32 %v2413, %v2541
  %v2592 = vadd.f32 %v2414, %v2546
  %v2593 = vadd.f32 %v2415, %v2551
  %v2594 = vadd.f32 %v2416, %v2556
  %v2595 = vadd.f32 %v2417, %v2561
  %v2596 = vadd.f32 %v2418, %v2566
  %v2597 = vadd.f32 %v2419, %v2571
  %v2598 = vadd.f32 %v2420, %v2576
  %v2599 = vadd.f32 %v2421, %v2581
  %v2604 = vrot.slane %v769, 1
  %v2605 = vrot.slane %v770, 1
  %v2606 = vsel %vm1210, %v2604, %v2605
  %v2607 = vrot.slane %v820, 1
  %v2608 = vrot.slane %v821, 1
  %v2609 = vsel %vm1210, %v2607, %v2608
  %s2612 = scalar_lea.vmem %s4, 1024
  %v2613 = vld [vmem:[%s2612] sm:$0xff]
  %v2614 = vld [vmem:[%s2612 + $0x8] sm:$0xff]
  %v2615 = vld [vmem:[%s2612 + $0x10] sm:$0xff]
  %v2616 = vld [vmem:[%s2612 + $0x18] sm:$0xff]
  %v2617 = vld [vmem:[%s2612 + $0x20] sm:$0xff]
  %v2618 = vld [vmem:[%s2612 + $0x28] sm:$0xff]
  %v2619 = vld [vmem:[%s2612 + $0x30] sm:$0xff]
  %v2620 = vld [vmem:[%s2612 + $0x38] sm:$0xff]
  %v2621 = vld [vmem:[%s2612 + $0x40] sm:$0xff]
  %v2622 = vld [vmem:[%s2612 + $0x48] sm:$0xff]
  %v2623 = vld [vmem:[%s2612 + $0x50] sm:$0xff]
  %v2624 = vld [vmem:[%s2612 + $0x58] sm:$0xff]
  %v2625 = vld [vmem:[%s2612 + $0x60] sm:$0xff]
  %v2626 = vld [vmem:[%s2612 + $0x68] sm:$0xff]
  %v2627 = vld [vmem:[%s2612 + $0x70] sm:$0xff]
  %v2628 = vld [vmem:[%s2612 + $0x78] sm:$0xff]
  %2629 = vmatprep.subr.mxu0 0.0
  %2630 = vmatpush1.msra.mxu0 %v2628
  %2631 = vmatprep.subr.mxu0 0.0
  %2632 = vmatpush1.msra.mxu0 %v2627
  %2633 = vmatprep.subr.mxu0 0.0
  %2634 = vmatpush1.msra.mxu0 %v2626
  %2635 = vmatprep.subr.mxu0 0.0
  %2636 = vmatpush1.msra.mxu0 %v2625
  %2637 = vmatprep.subr.mxu0 0.0
  %2638 = vmatpush1.msra.mxu0 %v2624
  %2639 = vmatprep.subr.mxu0 0.0
  %2640 = vmatpush1.msra.mxu0 %v2623
  %2641 = vmatprep.subr.mxu0 0.0
  %2642 = vmatpush1.msra.mxu0 %v2622
  %2643 = vmatprep.subr.mxu0 0.0
  %2644 = vmatpush1.msra.mxu0 %v2621
  %2645 = vmatprep.subr.mxu0 0.0
  %2646 = vmatpush1.msra.mxu0 %v2620
  %2647 = vmatprep.subr.mxu0 0.0
  %2648 = vmatpush1.msra.mxu0 %v2619
  %2649 = vmatprep.subr.mxu0 0.0
  %2650 = vmatpush1.msra.mxu0 %v2618
  %2651 = vmatprep.subr.mxu0 0.0
  %2652 = vmatpush1.msra.mxu0 %v2617
  %2653 = vmatprep.subr.mxu0 0.0
  %2654 = vmatpush1.msra.mxu0 %v2616
  %2655 = vmatprep.subr.mxu0 0.0
  %2656 = vmatpush1.msra.mxu0 %v2615
  %2657 = vmatprep.subr.mxu0 0.0
  %2658 = vmatpush1.msra.mxu0 %v2614
  %2659 = vmatprep.subr.mxu0 0.0
  %2660 = vmatpush1.msra.mxu0 %v2613
  %2661 = vmatprep.subr.mxu0 0.0
  %2662 = vmatpush2.msra.mxu0 0.0
  %2663 = vmatprep.subr.mxu0 0.0
  %2664 = vmatpush2.msra.mxu0 0.0
  %2665 = vmatprep.subr.mxu0 0.0
  %2666 = vmatpush2.msra.mxu0 0.0
  %2667 = vmatprep.subr.mxu0 0.0
  %2668 = vmatpush2.msra.mxu0 0.0
  %2669 = vmatprep.subr.mxu0 0.0
  %2670 = vmatpush2.msra.mxu0 0.0
  %2671 = vmatprep.subr.mxu0 0.0
  %2672 = vmatpush2.msra.mxu0 0.0
  %2673 = vmatprep.subr.mxu0 0.0
  %2674 = vmatpush2.msra.mxu0 0.0
  %2675 = vmatprep.subr.mxu0 0.0
  %2676 = vmatpush2.msra.mxu0 0.0
  %2677 = vmatprep.subr.mxu0 0.0
  %2678 = vmatpush2.msra.mxu0 0.0
  %2679 = vmatprep.subr.mxu0 0.0
  %2680 = vmatpush2.msra.mxu0 0.0
  %2681 = vmatprep.subr.mxu0 0.0
  %2682 = vmatpush2.msra.mxu0 0.0
  %2683 = vmatprep.subr.mxu0 0.0
  %2684 = vmatpush2.msra.mxu0 0.0
  %2685 = vmatprep.subr.mxu0 0.0
  %2686 = vmatpush2.msra.mxu0 0.0
  %2687 = vmatprep.subr.mxu0 0.0
  %2688 = vmatpush2.msra.mxu0 0.0
  %2689 = vmatprep.subr.mxu0 0.0
  %2690 = vmatpush2.msra.mxu0 0.0
  %2691 = vmatprep.subr.mxu0 0.0
  %2692 = vmatpush2.msra.mxu0 0.0
  %2693 = vmatprep.mubr.f32.mxu0 0.0
  %2694 = vmatmul.mubr.f32.gmra.mxu0 %v1216
  %v2695 = vpop.f32.mrf.mxu0
  %v2696 = vadd.f32 0.0, %v2695
  %v2697 = vpop.f32.mrf.mxu0
  %2698 = vmatprep.mubr.f32.mxu0 0.0
  %2699 = vmatmul.mubr.f32.gmra.mxu0 %v1219
  %v2700 = vpop.f32.mrf.mxu0
  %v2701 = vadd.f32 0.0, %v2700
  %v2702 = vpop.f32.mrf.mxu0
  %2703 = vmatprep.mubr.f32.mxu0 0.0
  %2704 = vmatmul.mubr.f32.gmra.mxu0 %v1222
  %v2705 = vpop.f32.mrf.mxu0
  %v2706 = vadd.f32 0.0, %v2705
  %v2707 = vpop.f32.mrf.mxu0
  %2708 = vmatprep.mubr.f32.mxu0 0.0
  %2709 = vmatmul.mubr.f32.gmra.mxu0 %v1225
  %v2710 = vpop.f32.mrf.mxu0
  %v2711 = vadd.f32 0.0, %v2710
  %v2712 = vpop.f32.mrf.mxu0
  %2713 = vmatprep.mubr.f32.mxu0 0.0
  %2714 = vmatmul.mubr.f32.gmra.mxu0 %v1228
  %v2715 = vpop.f32.mrf.mxu0
  %v2716 = vadd.f32 0.0, %v2715
  %v2717 = vpop.f32.mrf.mxu0
  %2718 = vmatprep.mubr.f32.mxu0 0.0
  %2719 = vmatmul.mubr.f32.gmra.mxu0 %v1231
  %v2720 = vpop.f32.mrf.mxu0
  %v2721 = vadd.f32 0.0, %v2720
  %v2722 = vpop.f32.mrf.mxu0
  %2723 = vmatprep.mubr.f32.mxu0 0.0
  %2724 = vmatmul.mubr.f32.gmra.mxu0 %v1234
  %v2725 = vpop.f32.mrf.mxu0
  %v2726 = vadd.f32 0.0, %v2725
  %v2727 = vpop.f32.mrf.mxu0
  %2728 = vmatprep.mubr.f32.mxu0 0.0
  %2729 = vmatmul.mubr.f32.gmra.mxu0 %v2606
  %v2730 = vpop.f32.mrf.mxu0
  %v2731 = vadd.f32 0.0, %v2730
  %v2732 = vpop.f32.mrf.mxu0
  %2733 = vmatprep.mubr.f32.mxu0 0.0
  %2734 = vmatmul.mubr.f32.gmra.mxu0 %v1240
  %v2735 = vpop.f32.mrf.mxu0
  %v2736 = vadd.f32 0.0, %v2735
  %v2737 = vpop.f32.mrf.mxu0
  %2738 = vmatprep.mubr.f32.mxu0 0.0
  %2739 = vmatmul.mubr.f32.gmra.mxu0 %v1243
  %v2740 = vpop.f32.mrf.mxu0
  %v2741 = vadd.f32 0.0, %v2740
  %v2742 = vpop.f32.mrf.mxu0
  %2743 = vmatprep.mubr.f32.mxu0 0.0
  %2744 = vmatmul.mubr.f32.gmra.mxu0 %v1246
  %v2745 = vpop.f32.mrf.mxu0
  %v2746 = vadd.f32 0.0, %v2745
  %v2747 = vpop.f32.mrf.mxu0
  %2748 = vmatprep.mubr.f32.mxu0 0.0
  %2749 = vmatmul.mubr.f32.gmra.mxu0 %v1249
  %v2750 = vpop.f32.mrf.mxu0
  %v2751 = vadd.f32 0.0, %v2750
  %v2752 = vpop.f32.mrf.mxu0
  %2753 = vmatprep.mubr.f32.mxu0 0.0
  %2754 = vmatmul.mubr.f32.gmra.mxu0 %v1252
  %v2755 = vpop.f32.mrf.mxu0
  %v2756 = vadd.f32 0.0, %v2755
  %v2757 = vpop.f32.mrf.mxu0
  %2758 = vmatprep.mubr.f32.mxu0 0.0
  %2759 = vmatmul.mubr.f32.gmra.mxu0 %v1255
  %v2760 = vpop.f32.mrf.mxu0
  %v2761 = vadd.f32 0.0, %v2760
  %v2762 = vpop.f32.mrf.mxu0
  %2763 = vmatprep.mubr.f32.mxu0 0.0
  %2764 = vmatmul.mubr.f32.gmra.mxu0 %v1258
  %v2765 = vpop.f32.mrf.mxu0
  %v2766 = vadd.f32 0.0, %v2765
  %v2767 = vpop.f32.mrf.mxu0
  %2768 = vmatprep.mubr.f32.mxu0 0.0
  %2769 = vmatmul.mubr.f32.gmra.mxu0 %v2609
  %v2770 = vpop.f32.mrf.mxu0
  %v2771 = vadd.f32 0.0, %v2770
  %v2772 = vpop.f32.mrf.mxu0
  %2773 = vdwg.mxu0
  %v2774 = vadd.f32 %v2584, %v2696
  %v2775 = vadd.f32 %v2585, %v2701
  %v2776 = vadd.f32 %v2586, %v2706
  %v2777 = vadd.f32 %v2587, %v2711
  %v2778 = vadd.f32 %v2588, %v2716
  %v2779 = vadd.f32 %v2589, %v2721
  %v2780 = vadd.f32 %v2590, %v2726
  %v2781 = vadd.f32 %v2591, %v2731
  %v2782 = vadd.f32 %v2592, %v2736
  %v2783 = vadd.f32 %v2593, %v2741
  %v2784 = vadd.f32 %v2594, %v2746
  %v2785 = vadd.f32 %v2595, %v2751
  %v2786 = vadd.f32 %v2596, %v2756
  %v2787 = vadd.f32 %v2597, %v2761
  %v2788 = vadd.f32 %v2598, %v2766
  %v2789 = vadd.f32 %v2599, %v2771
  %2790 = vst [vmem:[%s6] sm:$0xff] %v2774
  %2791 = vst [vmem:[%s6 + $0x8] sm:$0xff] %v2775
  %2792 = vst [vmem:[%s6 + $0x10] sm:$0xff] %v2776
  %2793 = vst [vmem:[%s6 + $0x18] sm:$0xff] %v2777
  %2794 = vst [vmem:[%s6 + $0x20] sm:$0xff] %v2778
  %2795 = vst [vmem:[%s6 + $0x28] sm:$0xff] %v2779
  %2796 = vst [vmem:[%s6 + $0x30] sm:$0xff] %v2780
  %2797 = vst [vmem:[%s6 + $0x38] sm:$0xff] %v2781
  %2798 = vst [vmem:[%s6 + $0x40] sm:$0xff] %v2782
  %2799 = vst [vmem:[%s6 + $0x48] sm:$0xff] %v2783
  %2800 = vst [vmem:[%s6 + $0x50] sm:$0xff] %v2784
  %2801 = vst [vmem:[%s6 + $0x58] sm:$0xff] %v2785
  %2802 = vst [vmem:[%s6 + $0x60] sm:$0xff] %v2786
  %2803 = vst [vmem:[%s6 + $0x68] sm:$0xff] %v2787
  %2804 = vst [vmem:[%s6 + $0x70] sm:$0xff] %v2788
  %2805 = vst [vmem:[%s6 + $0x78] sm:$0xff] %v2789
  %2806 = vst [vmem:[%s7] sm:$0xff] %v1892
  %2807 = vst [vmem:[%s7 + $0x8] sm:$0xff] %v1897
  %2808 = vst [vmem:[%s7 + $0x10] sm:$0xff] %v1902
  %2809 = vst [vmem:[%s7 + $0x18] sm:$0xff] %v1907
  %2810 = vst [vmem:[%s7 + $0x20] sm:$0xff] %v1912
  %2811 = vst [vmem:[%s7 + $0x28] sm:$0xff] %v1917
  %2812 = vst [vmem:[%s7 + $0x30] sm:$0xff] %v1922
  %2813 = vst [vmem:[%s7 + $0x38] sm:$0xff] %v1927
  %2814 = vst [vmem:[%s7 + $0x40] sm:$0xff] %v1932
  %2815 = vst [vmem:[%s7 + $0x48] sm:$0xff] %v1937
  %2816 = vst [vmem:[%s7 + $0x50] sm:$0xff] %v1942
  %2817 = vst [vmem:[%s7 + $0x58] sm:$0xff] %v1947
  %2818 = vst [vmem:[%s7 + $0x60] sm:$0xff] %v1952
  %2819 = vst [vmem:[%s7 + $0x68] sm:$0xff] %v1957
  %2820 = vst [vmem:[%s7 + $0x70] sm:$0xff] %v1962
  %2821 = vst [vmem:[%s7 + $0x78] sm:$0xff] %v1967
  // Predicated region
  $region26: #{preact_block_forward.2} parent=0 // pred_check
    _
  $region27: #{preact_block_forward.2} parent=0 // pred_check_branch
    %2823 = sbr.rel (0) target = $region29
  $region28: #{preact_block_forward.2} parent=0 // pred_region
    _
  $region29: #{preact_block_forward.2} parent=0 // pred_fallthru
    _
  // Predicated region
  $region30: #{preact_block_forward.2} parent=0 // pred_check
    _
  $region31: #{preact_block_forward.2} parent=0 // pred_check_branch
    %2825 = sbr.rel (0) target = $region33
  $region32: #{preact_block_forward.2} parent=0 // pred_region
    _
  $region33: #{preact_block_forward.2} parent=0 // pred_fallthru
    _
  // Predicated region
  $region34: #{preact_block_forward.2} parent=0 // pred_check
    _
  $region35: #{preact_block_forward.2} parent=0 // pred_check_branch
    %2827 = sbr.rel (0) target = $region37
  $region36: #{preact_block_forward.2} parent=0 // pred_region
    _
  $region37: #{preact_block_forward.2} parent=0 // pred_fallthru
    _
  // Predicated region
  $region38: #{preact_block_forward.2} parent=0 // pred_check
    _
  $region39: #{preact_block_forward.2} parent=0 // pred_check_branch
    %2829 = sbr.rel (0) target = $region41
  $region40: #{preact_block_forward.2} parent=0 // pred_region
    _
  $region41: #{preact_block_forward.2} parent=0 // pred_fallthru
    _

</llo_original>
